<compile_context>
chip_gen: v5e
topology: v5e:2x2
jax: 0.10.0
libtpu: 0.0.40
codegen_flags: <defaults>
</compile_context>

<pallas_src>
import math
from functools import partial

import numpy as np
import jax
import jax.numpy as jnp
from jax.experimental import pallas as pl
from jax.experimental.pallas import tpu as pltpu


_LANE = 128
_PAD = 512   # node axis padded to a multiple of this; all tiles are multiples of it


# ---------------------------------------------------------------------------
# small helpers
# ---------------------------------------------------------------------------
def _round_up(v, m):
    return ((v + m - 1) // m) * m


def _pick_tile(n, target, multiple):
    """Largest divisor of n that is a multiple of `multiple` and <= target.

    `n` must itself be a multiple of `multiple` (worst case returns `multiple`)."""
    t = min(target, n)
    t -= t % multiple
    while n % t:
        t -= multiple
    return t


def _vmem_limit_bytes():
    """Scoped-VMEM budget: <=48 MiB on 64 MiB/TC parts (v7x), <=96 MiB otherwise."""
    cap = 64 * 1024 * 1024
    try:
        cap = int(pltpu.get_tpu_info().vmem_capacity_bytes)
    except Exception:
        pass
    return (96 if cap >= 128 * 1024 * 1024 else 48) * 1024 * 1024


def _block_schedule(batch, n, n_pad, tm, tk):
    """Per-row-tile contiguous column-tile range of A_hat's block-diagonal support.

    Batched graphs never connect across graphs and nodes are grouped per graph,
    so row tile i only needs the A_hat columns spanning the graphs present in
    its rows.  Returns (kcol_flat[(nr*nk_max,)], kcnt[(nr,)], nk_max)."""
    batch = np.asarray(batch).astype(np.int64)
    nb = int(batch.max()) + 1 if n > 0 else 1
    batch_pad = np.concatenate([batch, np.full(n_pad - n, nb, dtype=np.int64)])
    first = np.zeros(nb + 1, np.int64)
    last = np.zeros(nb + 1, np.int64)
    for g in range(nb + 1):
        idx = np.nonzero(batch_pad == g)[0]
        if idx.size:
            first[g], last[g] = idx[0], idx[-1]
    nr = n_pad // tm
    kstart = np.zeros(nr, np.int32)
    kstop = np.zeros(nr, np.int32)
    for i in range(nr):
        g0 = int(batch_pad[i * tm])
        g1 = int(batch_pad[(i + 1) * tm - 1])
        kstart[i] = first[g0] // tk
        kstop[i] = last[g1] // tk
    kcnt = (kstop - kstart + 1).astype(np.int32)
    nk_max = int(kcnt.max())
    kcol = np.zeros((nr, nk_max), np.int32)
    steps = np.arange(nk_max, dtype=np.int32)
    for i in range(nr):
        kcol[i] = kstart[i] + np.minimum(steps, kcnt[i] - 1)   # clamp pads to last tile
    return kcol.reshape(-1), kcnt, nk_max


# ---------------------------------------------------------------------------
# Kernel 1: xw = relu(drop(x)) @ W_gcn   (bf16 MXU inputs, f32 accumulate)
# ---------------------------------------------------------------------------
def _xw_kernel(x_ref, wg_ref, xw_ref):
    xr = jnp.maximum(x_ref[...], 0.0)          # drop = identity (eval), ReLU in f32
    xw = jnp.dot(xr.astype(jnp.bfloat16), wg_ref[...],
                 preferred_element_type=jnp.float32)
    xw_ref[...] = xw.astype(jnp.bfloat16)


# ---------------------------------------------------------------------------
# Kernel 2: h = A_hat @ xw + b_gcn (block-diagonal sweep), pooled / root partials
# ---------------------------------------------------------------------------
def _make_gcn_agg_kernel(tk, nk_max, xw_resident):
    def kernel(kcol_ref, kcnt_ref, a_ref, xw_ref, pool_ref, rsel_ref, bg_ref,
               ppart_ref, rpart_ref, acc_ref):
        i = pl.program_id(0)
        k = pl.program_id(1)

        @pl.when(k == 0)
        def _():
            acc_ref[...] = jnp.zeros_like(acc_ref)

        # Padded schedule steps (k >= kcnt[i]) repeat the last valid column tile
        # (so no new DMA is issued) and are skipped here.
        @pl.when(k < kcnt_ref[i])
        def _():
            if xw_resident:
                off = pl.multiple_of(kcol_ref[i * nk_max + k] * tk, 512)
                xw_tile = xw_ref[pl.ds(off, tk), :]
            else:
                xw_tile = xw_ref[...]
            acc_ref[...] += jnp.dot(a_ref[...], xw_tile,
                                    preferred_element_type=jnp.float32)

        @pl.when(k == nk_max - 1)
        def _():
            h = acc_ref[...] + bg_ref[...]          # pre-ReLU GCN output (x2)
            ha = jnp.maximum(h, 0.0)                # post-ReLU features (x)
            ppart_ref[0] = jnp.dot(pool_ref[...].astype(jnp.bfloat16),
                                   ha.astype(jnp.bfloat16),
                                   preferred_element_type=jnp.float32)
            rpart_ref[0] = jnp.dot(rsel_ref[...].astype(jnp.bfloat16),
                                   h.astype(jnp.bfloat16),
                                   preferred_element_type=jnp.float32)

    return kernel


# ---------------------------------------------------------------------------
# jitted implementation (static tiling metadata as keyword-only static args)
# ---------------------------------------------------------------------------
@partial(jax.jit, static_argnames=("h", "n_pad", "h_pad", "tm", "tk", "trk",
                                   "nk_max", "xw_resident", "vmem_limit"))
def _fe_clipgcn_impl(x, a_hat, pool, rsel, kcol, kcnt, params, *,
                     h, n_pad, h_pad, tm, tk, trk, nk_max, xw_resident, vmem_limit):
    f32, bf16 = jnp.float32, jnp.bfloat16
    n, in_feats = x.shape
    b = pool.shape[0]
    nr = n_pad // tm
    pad_n = n_pad - n

    # --- parameter prep (tiny, fused by XLA) --------------------------------
    wg = jnp.pad(params["w_gcn"].astype(f32), ((0, 0), (0, h_pad - h))).astype(bf16)
    bg = jnp.pad(params["b_gcn"].astype(f32), ((0, 0), (0, h_pad - h)))
    # fold the seq-len-1 attention value+output linear pairs (exact algebra)
    w1f = params["wv1"] @ params["wo1"]
    w2f = params["wv2"] @ params["wo2"]
    c1 = params["bv1"] @ params["wo1"] + params["bo1"]
    c2 = params["bv2"] @ params["wo2"] + params["bo2"]

    # --- zero-pad the node axis so the tiled path works for any N -----------
    xp = jnp.pad(x.astype(f32), ((0, pad_n), (0, 0)))
    ap = jnp.pad(a_hat.astype(bf16), ((0, pad_n), (0, pad_n)))
    poolp = jnp.pad(pool.astype(f32), ((0, 0), (0, pad_n)))
    rselp = jnp.pad(rsel.astype(f32), ((0, 0), (0, pad_n)))

    # --- K1: xw = relu(x) @ W_gcn  (large row tile; skinny K) ----------------
    xw = pl.pallas_call(
        _xw_kernel,
        out_shape=jax.ShapeDtypeStruct((n_pad, h_pad), bf16),
        grid_spec=pltpu.PrefetchScalarGridSpec(
            num_scalar_prefetch=0,
            grid=(n_pad // trk,),
            in_specs=[pl.BlockSpec((trk, in_feats), lambda i: (i, 0)),
                      pl.BlockSpec((in_feats, h_pad), lambda i: (0, 0))],
            out_specs=pl.BlockSpec((trk, h_pad), lambda i: (i, 0)),
        ),
        compiler_params=pltpu.CompilerParams(dimension_semantics=("parallel",)),
    )(xp, wg)

    # --- K2: block-diagonal A_hat stream + per-row-tile pooled/root partials --
    if xw_resident:
        # xw stays resident in VMEM across the whole grid (constant block index).
        xw_spec = pl.BlockSpec((n_pad, h_pad), lambda i, k, kc, kn: (0, 0))
    else:
        xw_spec = pl.BlockSpec((tk, h_pad),
                               lambda i, k, kc, kn: (kc[i * nk_max + k], 0))

    ppart, rpart = pl.pallas_call(
        _make_gcn_agg_kernel(tk, nk_max, xw_resident),
        out_shape=(jax.ShapeDtypeStruct((nr, b, h_pad), f32),
                   jax.ShapeDtypeStruct((nr, b, h_pad), f32)),
        grid_spec=pltpu.PrefetchScalarGridSpec(
            num_scalar_prefetch=2,                       # kcol, kcnt -> SMEM
            grid=(nr, nk_max),
            in_specs=[
                # A_hat: only tiles on the block-diagonal support are visited.
                pl.BlockSpec((tm, tk), lambda i, k, kc, kn: (i, kc[i * nk_max + k])),
                xw_spec,
                pl.BlockSpec((b, tm), lambda i, k, kc, kn: (0, i)),    # mean-pool rows
                pl.BlockSpec((b, tm), lambda i, k, kc, kn: (0, i)),    # root selector
                pl.BlockSpec((1, h_pad), lambda i, k, kc, kn: (0, 0)), # b_gcn
            ],
            out_specs=[
                pl.BlockSpec((1, b, h_pad), lambda i, k, kc, kn: (i, 0, 0)),
                pl.BlockSpec((1, b, h_pad), lambda i, k, kc, kn: (i, 0, 0)),
            ],
            scratch_shapes=[pltpu.VMEM((tm, h_pad), f32)],
        ),
        compiler_params=pltpu.CompilerParams(
            dimension_semantics=("parallel", "arbitrary"),
            vmem_limit_bytes=vmem_limit,
        ),
    )(kcol, kcnt, ap, xw, poolp, rselp, bg)

    # --- finalize in plain JAX (tiny (B, 2H) work; XLA fuses it) -------------
    pooled = jnp.sum(ppart, axis=0)[:, :h]      # (B, H)  pool @ relu(h)
    root = jnp.sum(rpart, axis=0)[:, :h]        # (B, H)  h[rootindex]
    o1 = pooled @ w1f + c1
    o2 = root @ w2f + c2
    return jnp.concatenate([o1, o2], axis=1)


# ---------------------------------------------------------------------------
# public wrapper: derives static tiling metadata from the concrete batch vector
# ---------------------------------------------------------------------------
def fe_clipgcn(x, a_hat, pool, rsel, batch, params):
    """batch must be a host-readable per-node graph-id vector (sorted per graph)."""
    n = int(x.shape[0])
    h = int(params["w_gcn"].shape[1])

    n_pad = _round_up(max(n, _PAD), _PAD)
    h_pad = _round_up(max(h, _LANE), _LANE)
    tm = _pick_tile(n_pad, 1024, _PAD)     # K2 row tile
    tk = _pick_tile(n_pad, 4096, _PAD)     # K2 adjacency-column (reduction) tile
    trk = _pick_tile(n_pad, 4096, _PAD)    # K1 row tile

    kcol, kcnt, nk_max = _block_schedule(np.asarray(batch), n, n_pad, tm, tk)

    # xw is kept fully VMEM-resident in K2 when its (double-buffered) footprint
    # is comfortably small; otherwise it is streamed one column tile at a time.
    xw_resident = 2 * n_pad * h_pad * 2 <= 12 * 1024 * 1024

    return _fe_clipgcn_impl(
        x, a_hat, pool, rsel, jnp.asarray(kcol), jnp.asarray(kcnt), params,
        h=h, n_pad=n_pad, h_pad=h_pad, tm=tm, tk=tk, trk=trk,
        nk_max=nk_max, xw_resident=xw_resident, vmem_limit=_vmem_limit_bytes())


# ---------------------------------------------------------------------------
# graph glue
# ---------------------------------------------------------------------------
def gcn_norm_dense(edge_index, n):
    """Dense PyG gcn_norm: A_hat[i, j] = d_i^-1/2 * (A + I)[i, j] * d_j^-1/2."""
    src, dst = edge_index
    a = jnp.zeros((n, n), jnp.float32).at[dst, src].add(1.0)   # row = target node
    a = a + jnp.eye(n, dtype=jnp.float32)                      # self loops
    deg = a.sum(axis=1)
    dinv = jnp.where(deg > 0, 1.0 / jnp.sqrt(deg), 0.0)
    return dinv[:, None] * a * dinv[None, :]


def _linear_params(key, fan_in, fan_out):
    kw, kb = jax.random.split(key)
    lim = 1.0 / math.sqrt(fan_in)
    w = jax.random.uniform(kw, (fan_in, fan_out), jnp.float32, -lim, lim)
    b = jax.random.uniform(kb, (1, fan_out), jnp.float32, -lim, lim)
    return w, b


if __name__ == "__main__":
    # Small, deterministic problem: 2 graphs of 8 nodes each.
    N = 16          # total nodes (len(data.batch))
    B = 2           # batch_size = max(data.batch) + 1
    IN_FEATS = 8    # clip_x feature dim
    H = 32          # hid_feats == out_feats (required for the module to typecheck)

    key = jax.random.PRNGKey(0)
    keys = jax.random.split(key, 8)

    # Graph structure: undirected chains within each graph.
    edges = []
    for g0 in (0, 8):
        for i in range(7):
            edges.append((g0 + i, g0 + i + 1))
            edges.append((g0 + i + 1, g0 + i))
    edge_index = jnp.asarray(edges, dtype=jnp.int32).T          # (2, 28)

    batch_np = np.asarray([0] * 8 + [1] * 8, dtype=np.int32)    # (16,)
    batch = jnp.asarray(batch_np)
    rootindex = jnp.asarray([0, 8], dtype=jnp.int32)            # (2,)
    clip_x = jax.random.normal(keys[0], (N, IN_FEATS), jnp.float32)

    # Glue: dense normalized adjacency, mean-pool and root-row-selection matrices.
    a_hat = gcn_norm_dense(edge_index, N)                               # (N, N)
    onehot_b = jax.nn.one_hot(batch, B, dtype=jnp.float32)              # (N, B)
    counts = onehot_b.sum(axis=0)                                       # (B,)
    pool = (onehot_b / counts).T                                        # (B, N) row-stochastic
    rsel = jax.nn.one_hot(rootindex, N, dtype=jnp.float32)              # (B, N) one-hot roots

    # Deterministic parameter init (shapes from the module's __init__).
    lim_g = 1.0 / math.sqrt(IN_FEATS)
    params = {
        "w_gcn": jax.random.uniform(keys[1], (IN_FEATS, H), jnp.float32, -lim_g, lim_g),
        "b_gcn": jnp.zeros((1, H), jnp.float32),
    }
    params["wv1"], params["bv1"] = _linear_params(keys[2], H, H)   # value1
    params["wo1"], params["bo1"] = _linear_params(keys[3], H, H)   # liner_o1
    params["wv2"], params["bv2"] = _linear_params(keys[4], H, H)   # value2
    params["wo2"], params["bo2"] = _linear_params(keys[5], H, H)   # liner_o2
    # query/key projections exist in the module but cannot change the output for
    # sequence length 1 (softmax over one key == 1), so they are omitted.

    out = fe_clipgcn(clip_x, a_hat, pool, rsel, batch_np, params)
    out = jax.block_until_ready(out)
    assert out.shape == (B, 2 * H) and out.dtype == jnp.float32
    assert bool(jnp.all(jnp.isfinite(out)))

    # Pure-JAX reference following the *original* per-node structure (per-node
    # attention linears then scatter_mean) — validates pool-hoist + folding algebra.
    def reference_forward(x, a, pool_mat, batch_vec, root_idx, p):
        bf16, f32 = jnp.bfloat16, jnp.float32
        xr = jnp.maximum(x, 0.0)
        xw = jnp.dot(xr.astype(bf16), p["w_gcn"].astype(bf16),
                     preferred_element_type=f32).astype(bf16)
        h = jnp.dot(a.astype(bf16), xw, preferred_element_type=f32) + p["b_gcn"]
        ha = jnp.maximum(h, 0.0)
        root_extend = h[root_idx[batch_vec]]
        o1 = (ha @ p["wv1"] + p["bv1"]) @ p["wo1"] + p["bo1"]
        o2 = (root_extend @ p["wv2"] + p["bv2"]) @ p["wo2"] + p["bo2"]
        return pool_mat @ jnp.concatenate([o1, o2], axis=1)

    ref = reference_forward(clip_x, a_hat, pool, batch, rootindex, params)
    assert bool(jnp.allclose(out, ref, atol=2e-2, rtol=2e-2)), "kernel/reference mismatch"

    print("KERNEL_OK")
</pallas_src>

<mosaic_0001>
module attributes {stable_mosaic.version = 11 : i64} {
  func.func @_xw_kernel(%arg0: i32, %arg1: memref<512x8xf32, #tpu.memory_space<vmem>>, %arg2: memref<8x128xbf16, #tpu.memory_space<vmem>>, %arg3: memref<512x128xbf16, #tpu.memory_space<vmem>>) attributes {dimension_semantics = [#tpu.dimension_semantics<parallel>], iteration_bounds = array<i64: 1>, scalar_prefetch = 0 : i64, scratch_operands = 0 : i64, tpu.core_type = #tpu.core_type<tc>, window_params = [{transform_indices = @transform_0, window_bounds = array<i64: 512, 8>}, {pipeline_mode = #tpu.pipeline_mode<synchronous>, transform_indices = @transform_1, window_bounds = array<i64: 8, 128>}, {transform_indices = @transform_2, window_bounds = array<i64: 512, 128>}]} {
    %c0 = arith.constant 0 : index
    %c0_0 = arith.constant 0 : index
    %0 = vector.load %arg1[%c0, %c0_0] : memref<512x8xf32, #tpu.memory_space<vmem>>, vector<512x8xf32>
    %cst = arith.constant 0.000000e+00 : f32
    %1 = vector.broadcast %cst : f32 to vector<512x8xf32>
    %2 = arith.maximumf %0, %1 : vector<512x8xf32>
    %3 = arith.truncf %2 : vector<512x8xf32> to vector<512x8xbf16>
    %c0_1 = arith.constant 0 : index
    %c0_2 = arith.constant 0 : index
    %4 = vector.load %arg2[%c0_1, %c0_2] : memref<8x128xbf16, #tpu.memory_space<vmem>>, vector<8x128xbf16>
    %cst_3 = arith.constant dense<0.000000e+00> : vector<512x128xf32>
    %5 = tpu.matmul %3, %4, %cst_3 {dimension_numbers = #tpu.dot_dimension_numbers<[1], [0], [0], [1], [0, 0, 1, 1], [], []>} : vector<512x8xbf16>, vector<8x128xbf16>, vector<512x128xf32> -> vector<512x128xf32>
    %6 = arith.truncf %5 : vector<512x128xf32> to vector<512x128xbf16>
    %c0_4 = arith.constant 0 : index
    %c0_5 = arith.constant 0 : index
    %7 = vector.load %arg3[%c0_4, %c0_5] : memref<512x128xbf16, #tpu.memory_space<vmem>>, vector<512x128xbf16>
    tpu.vector_store %arg3[%c0_4, %c0_5], %6 {strides = array<i32>} : memref<512x128xbf16, #tpu.memory_space<vmem>>, vector<512x128xbf16>,
    return
  }
  func.func @transform_0(%arg0: i32) -> (i32, i32) {
    %c0_i32 = arith.constant 0 : i32
    %c0_i32_0 = arith.constant 0 : i32
    return %arg0, %c0_i32 : i32, i32
  }
  func.func @transform_1(%arg0: i32) -> (i32, i32) {
    %c0_i32 = arith.constant 0 : i32
    %c0_i32_0 = arith.constant 0 : i32
    %c0_i32_1 = arith.constant 0 : i32
    return %c0_i32, %c0_i32_0 : i32, i32
  }
  func.func @transform_2(%arg0: i32) -> (i32, i32) {
    %c0_i32 = arith.constant 0 : i32
    %c0_i32_0 = arith.constant 0 : i32
    return %arg0, %c0_i32 : i32, i32
  }
}

module attributes {stable_mosaic.version = 11 : i64} {
  func.func @kernel(%arg0: i32, %arg1: i32, %arg2: memref<1xi32, #tpu.memory_space<smem>>, %arg3: memref<1xi32, #tpu.memory_space<smem>>, %arg4: memref<512x512xbf16, #tpu.memory_space<vmem>>, %arg5: memref<512x128xbf16, #tpu.memory_space<vmem>>, %arg6: memref<2x512xf32, #tpu.memory_space<vmem>>, %arg7: memref<2x512xf32, #tpu.memory_space<vmem>>, %arg8: memref<1x128xf32, #tpu.memory_space<vmem>>, %arg9: memref<1x2x128xf32, #tpu.memory_space<vmem>>, %arg10: memref<1x2x128xf32, #tpu.memory_space<vmem>>, %arg11: memref<512x128xf32, #tpu.memory_space<vmem>>) attributes {dimension_semantics = [#tpu.dimension_semantics<parallel>, #tpu.dimension_semantics<arbitrary>], iteration_bounds = array<i64: 1, 1>, scalar_prefetch = 2 : i64, scratch_operands = 1 : i64, tpu.core_type = #tpu.core_type<tc>, window_params = [{transform_indices = @transform_0, window_bounds = array<i64: 512, 512>}, {pipeline_mode = #tpu.pipeline_mode<synchronous>, transform_indices = @transform_1, window_bounds = array<i64: 512, 128>}, {transform_indices = @transform_2, window_bounds = array<i64: 2, 512>}, {transform_indices = @transform_3, window_bounds = array<i64: 2, 512>}, {pipeline_mode = #tpu.pipeline_mode<synchronous>, transform_indices = @transform_4, window_bounds = array<i64: 1, 128>}, {transform_indices = @transform_5, window_bounds = array<i64: 1, 2, 128>}, {transform_indices = @transform_6, window_bounds = array<i64: 1, 2, 128>}]} {
    %c0_i32 = arith.constant 0 : i32
    %0 = arith.cmpi eq, %arg1, %c0_i32 : i32
    %1 = arith.extui %0 : i1 to i32
    %c0_i32_0 = arith.constant 0 : i32
    %2 = arith.cmpi ne, %1, %c0_i32_0 : i32
    scf.if %2 {
      %cst = arith.constant 0.000000e+00 : f32
      %11 = vector.broadcast %cst : f32 to vector<512x128xf32>
      %c0 = arith.constant 0 : index
      %c0_4 = arith.constant 0 : index
      %12 = vector.load %arg11[%c0, %c0_4] : memref<512x128xf32, #tpu.memory_space<vmem>>, vector<512x128xf32>
      tpu.vector_store %arg11[%c0, %c0_4], %11 {strides = array<i32>} : memref<512x128xf32, #tpu.memory_space<vmem>>, vector<512x128xf32>,
    } else {
    }
    %3 = arith.index_cast %arg0 : i32 to index
    %4 = memref.load %arg3[%3] : memref<1xi32, #tpu.memory_space<smem>>
    %5 = arith.cmpi slt, %arg1, %4 : i32
    %6 = arith.extui %5 : i1 to i32
    %c0_i32_1 = arith.constant 0 : i32
    %7 = arith.cmpi ne, %6, %c0_i32_1 : i32
    scf.if %7 {
      %c1_i32 = arith.constant 1 : i32
      %11 = arith.muli %arg0, %c1_i32 : i32
      %12 = arith.addi %11, %arg1 : i32
      %13 = arith.index_cast %12 : i32 to index
      %14 = memref.load %arg2[%13] : memref<1xi32, #tpu.memory_space<smem>>
      %c512_i32 = arith.constant 512 : i32
      %15 = arith.muli %14, %c512_i32 : i32
      %16 = tpu.assume_multiple %15, 512 : i32
      %17 = arith.index_cast %16 : i32 to index
      %c0 = arith.constant 0 : index
      %18 = vector.load %arg5[%17, %c0] : memref<512x128xbf16, #tpu.memory_space<vmem>>, vector<512x128xbf16>
      %c0_4 = arith.constant 0 : index
      %c0_5 = arith.constant 0 : index
      %19 = vector.load %arg11[%c0_4, %c0_5] : memref<512x128xf32, #tpu.memory_space<vmem>>, vector<512x128xf32>
      %c0_6 = arith.constant 0 : index
      %c0_7 = arith.constant 0 : index
      %20 = vector.load %arg4[%c0_6, %c0_7] : memref<512x512xbf16, #tpu.memory_space<vmem>>, vector<512x512xbf16>
      %cst = arith.constant dense<0.000000e+00> : vector<512x128xf32>
      %21 = tpu.matmul %20, %18, %cst {dimension_numbers = #tpu.dot_dimension_numbers<[1], [0], [0], [1], [0, 0, 1, 1], [], []>} : vector<512x512xbf16>, vector<512x128xbf16>, vector<512x128xf32> -> vector<512x128xf32>
      %22 = arith.addf %19, %21 : vector<512x128xf32>
      %c0_8 = arith.constant 0 : index
      %c0_9 = arith.constant 0 : index
      %23 = vector.load %arg11[%c0_8, %c0_9] : memref<512x128xf32, #tpu.memory_space<vmem>>, vector<512x128xf32>
      tpu.vector_store %arg11[%c0_8, %c0_9], %22 {strides = array<i32>} : memref<512x128xf32, #tpu.memory_space<vmem>>, vector<512x128xf32>,
    } else {
    }
    %c0_i32_2 = arith.constant 0 : i32
    %8 = arith.cmpi eq, %arg1, %c0_i32_2 : i32
    %9 = arith.extui %8 : i1 to i32
    %c0_i32_3 = arith.constant 0 : i32
    %10 = arith.cmpi ne, %9, %c0_i32_3 : i32
    scf.if %10 {
      %c0 = arith.constant 0 : index
      %c0_4 = arith.constant 0 : index
      %11 = vector.load %arg11[%c0, %c0_4] : memref<512x128xf32, #tpu.memory_space<vmem>>, vector<512x128xf32>
      %c0_5 = arith.constant 0 : index
      %c0_6 = arith.constant 0 : index
      %12 = vector.load %arg8[%c0_5, %c0_6] : memref<1x128xf32, #tpu.memory_space<vmem>>, vector<1x128xf32>
      %13 = vector.broadcast %12 : vector<1x128xf32> to vector<512x128xf32>
      %14 = arith.addf %11, %13 : vector<512x128xf32>
      %cst = arith.constant 0.000000e+00 : f32
      %15 = vector.broadcast %cst : f32 to vector<512x128xf32>
      %16 = arith.maximumf %14, %15 : vector<512x128xf32>
      %c0_7 = arith.constant 0 : index
      %c0_8 = arith.constant 0 : index
      %17 = vector.load %arg6[%c0_7, %c0_8] : memref<2x512xf32, #tpu.memory_space<vmem>>, vector<2x512xf32>
      %18 = arith.truncf %17 : vector<2x512xf32> to vector<2x512xbf16>
      %19 = arith.truncf %16 : vector<512x128xf32> to vector<512x128xbf16>
      %cst_9 = arith.constant dense<0.000000e+00> : vector<2x128xf32>
      %20 = tpu.matmul %18, %19, %cst_9 {dimension_numbers = #tpu.dot_dimension_numbers<[1], [0], [0], [1], [0, 0, 1, 1], [], []>} : vector<2x512xbf16>, vector<512x128xbf16>, vector<2x128xf32> -> vector<2x128xf32>
      %c0_10 = arith.constant 0 : index
      %c0_11 = arith.constant 0 : index
      %c0_12 = arith.constant 0 : index
      %21 = vector.load %arg9[%c0_10, %c0_11, %c0_12] : memref<1x2x128xf32, #tpu.memory_space<vmem>>, vector<1x2x128xf32>
      %22 = vector.shape_cast %21 : vector<1x2x128xf32> to vector<2x128xf32>
      %23 = vector.shape_cast %20 : vector<2x128xf32> to vector<1x2x128xf32>
      tpu.vector_store %arg9[%c0_10, %c0_11, %c0_12], %23 {strides = array<i32>} : memref<1x2x128xf32, #tpu.memory_space<vmem>>, vector<1x2x128xf32>,
      %c0_13 = arith.constant 0 : index
      %c0_14 = arith.constant 0 : index
      %24 = vector.load %arg7[%c0_13, %c0_14] : memref<2x512xf32, #tpu.memory_space<vmem>>, vector<2x512xf32>
      %25 = arith.truncf %24 : vector<2x512xf32> to vector<2x512xbf16>
      %26 = arith.truncf %14 : vector<512x128xf32> to vector<512x128xbf16>
      %cst_15 = arith.constant dense<0.000000e+00> : vector<2x128xf32>
      %27 = tpu.matmul %25, %26, %cst_15 {dimension_numbers = #tpu.dot_dimension_numbers<[1], [0], [0], [1], [0, 0, 1, 1], [], []>} : vector<2x512xbf16>, vector<512x128xbf16>, vector<2x128xf32> -> vector<2x128xf32>
      %c0_16 = arith.constant 0 : index
      %c0_17 = arith.constant 0 : index
      %c0_18 = arith.constant 0 : index
      %28 = vector.load %arg10[%c0_16, %c0_17, %c0_18] : memref<1x2x128xf32, #tpu.memory_space<vmem>>, vector<1x2x128xf32>
      %29 = vector.shape_cast %28 : vector<1x2x128xf32> to vector<2x128xf32>
      %30 = vector.shape_cast %27 : vector<2x128xf32> to vector<1x2x128xf32>
      tpu.vector_store %arg10[%c0_16, %c0_17, %c0_18], %30 {strides = array<i32>} : memref<1x2x128xf32, #tpu.memory_space<vmem>>, vector<1x2x128xf32>,
    } else {
    }
    return
  }
  func.func @transform_0(%arg0: i32, %arg1: i32, %arg2: memref<1xi32, #tpu.memory_space<smem>>, %arg3: memref<1xi32, #tpu.memory_space<smem>>) -> (i32, i32) {
    %c1_i32 = arith.constant 1 : i32
    %0 = arith.muli %arg0, %c1_i32 : i32
    %1 = arith.addi %0, %arg1 : i32
    %2 = arith.index_cast %1 : i32 to index
    %3 = memref.load %arg2[%2] : memref<1xi32, #tpu.memory_space<smem>>
    %c0_i32 = arith.constant 0 : i32
    return %arg0, %3 : i32, i32
  }
  func.func @transform_1(%arg0: i32, %arg1: i32, %arg2: memref<1xi32, #tpu.memory_space<smem>>, %arg3: memref<1xi32, #tpu.memory_space<smem>>) -> (i32, i32) {
    %c0_i32 = arith.constant 0 : i32
    %c0_i32_0 = arith.constant 0 : i32
    %c0_i32_1 = arith.constant 0 : i32
    return %c0_i32, %c0_i32_0 : i32, i32
  }
  func.func @transform_2(%arg0: i32, %arg1: i32, %arg2: memref<1xi32, #tpu.memory_space<smem>>, %arg3: memref<1xi32, #tpu.memory_space<smem>>) -> (i32, i32) {
    %c0_i32 = arith.constant 0 : i32
    %c0_i32_0 = arith.constant 0 : i32
    return %c0_i32, %arg0 : i32, i32
  }
  func.func @transform_3(%arg0: i32, %arg1: i32, %arg2: memref<1xi32, #tpu.memory_space<smem>>, %arg3: memref<1xi32, #tpu.memory_space<smem>>) -> (i32, i32) {
    %c0_i32 = arith.constant 0 : i32
    %c0_i32_0 = arith.constant 0 : i32
    return %c0_i32, %arg0 : i32, i32
  }
  func.func @transform_4(%arg0: i32, %arg1: i32, %arg2: memref<1xi32, #tpu.memory_space<smem>>, %arg3: memref<1xi32, #tpu.memory_space<smem>>) -> (i32, i32) {
    %c0_i32 = arith.constant 0 : i32
    %c0_i32_0 = arith.constant 0 : i32
    %c0_i32_1 = arith.constant 0 : i32
    return %c0_i32, %c0_i32_0 : i32, i32
  }
  func.func @transform_5(%arg0: i32, %arg1: i32, %arg2: memref<1xi32, #tpu.memory_space<smem>>, %arg3: memref<1xi32, #tpu.memory_space<smem>>) -> (i32, i32, i32) {
    %c0_i32 = arith.constant 0 : i32
    %c0_i32_0 = arith.constant 0 : i32
    %c0_i32_1 = arith.constant 0 : i32
    return %arg0, %c0_i32, %c0_i32_0 : i32, i32, i32
  }
  func.func @transform_6(%arg0: i32, %arg1: i32, %arg2: memref<1xi32, #tpu.memory_space<smem>>, %arg3: memref<1xi32, #tpu.memory_space<smem>>) -> (i32, i32, i32) {
    %c0_i32 = arith.constant 0 : i32
    %c0_i32_0 = arith.constant 0 : i32
    %c0_i32_1 = arith.constant 0 : i32
    return %arg0, %c0_i32, %c0_i32_0 : i32, i32, i32
  }
}

</mosaic_0001>

<llo_original>
// kernel: _fe_clipgcn_impl.2
$region0: #{_fe_clipgcn_impl.2}
  #allocation0 [shape = 'u32[]', space=smem, size = 0x4, offset = 0x4, fixed_abs, tag = 'smem constant byte address 0x4 - core index']
  #allocation1 [shape = 'u32[72,128]{1,0:T(1,128)}', space=vmem, size = 0x9000, scoped, tag = 'internal scratch']
  %s0 = inlined_call_operand.vmem [shape: f32[512,8], index: 0, kind: input, shape index: {}]
  %s1 = inlined_call_operand.vmem [shape: bf16[8,128], index: 1, kind: input, shape index: {}]
  %s2 = inlined_call_operand.vmem [shape: bf16[512,128], index: 2, kind: output, shape index: {}]
  %s3 = sld [smem:[#allocation0]]
  $region18: #{_fe_clipgcn_impl.2} parent=0
    _
  %s5 = ssub.s32 1, %s3
  %s6 = scalar_select 0, %s5, %s3
  // Predicated region
  $region2: #{_fe_clipgcn_impl.2} parent=0 // pred_check
    _
  $region3: #{_fe_clipgcn_impl.2} parent=0 // pred_check_branch
    %8 = sbr.rel (0) target = $region5
  $region4: #{_fe_clipgcn_impl.2} parent=0 // pred_region
    _
  $region5: #{_fe_clipgcn_impl.2} parent=0 // pred_fallthru
    _
  // Predicated region
  $region6: #{_fe_clipgcn_impl.2} parent=0 // pred_check
    _
  $region7: #{_fe_clipgcn_impl.2} parent=0 // pred_check_branch
    %10 = sbr.rel (0) target = $region9
  $region8: #{_fe_clipgcn_impl.2} parent=0 // pred_region
    _
  $region9: #{_fe_clipgcn_impl.2} parent=0 // pred_fallthru
    _
  %v12 = vld [vmem:[%s0] sm:$0xff]
  %v13 = vld [vmem:[%s0 + $0x8] sm:$0xff]
  %v14 = vld [vmem:[%s0 + $0x10] sm:$0xff]
  %v15 = vld [vmem:[%s0 + $0x18] sm:$0xff]
  %v16 = vld [vmem:[%s0 + $0x20] sm:$0xff]
  %v17 = vld [vmem:[%s0 + $0x28] sm:$0xff]
  %v18 = vld [vmem:[%s0 + $0x30] sm:$0xff]
  %v19 = vld [vmem:[%s0 + $0x38] sm:$0xff]
  %v20 = vld [vmem:[%s0 + $0x40] sm:$0xff]
  %v21 = vld [vmem:[%s0 + $0x48] sm:$0xff]
  %v22 = vld [vmem:[%s0 + $0x50] sm:$0xff]
  %v23 = vld [vmem:[%s0 + $0x58] sm:$0xff]
  %v24 = vld [vmem:[%s0 + $0x60] sm:$0xff]
  %v25 = vld [vmem:[%s0 + $0x68] sm:$0xff]
  %v26 = vld [vmem:[%s0 + $0x70] sm:$0xff]
  %v27 = vld [vmem:[%s0 + $0x78] sm:$0xff]
  %v28 = vld [vmem:[%s0 + $0x80] sm:$0xff]
  %v29 = vld [vmem:[%s0 + $0x88] sm:$0xff]
  %v30 = vld [vmem:[%s0 + $0x90] sm:$0xff]
  %v31 = vld [vmem:[%s0 + $0x98] sm:$0xff]
  %v32 = vld [vmem:[%s0 + $0xa0] sm:$0xff]
  %v33 = vld [vmem:[%s0 + $0xa8] sm:$0xff]
  %v34 = vld [vmem:[%s0 + $0xb0] sm:$0xff]
  %v35 = vld [vmem:[%s0 + $0xb8] sm:$0xff]
  %v36 = vld [vmem:[%s0 + $0xc0] sm:$0xff]
  %v37 = vld [vmem:[%s0 + $0xc8] sm:$0xff]
  %v38 = vld [vmem:[%s0 + $0xd0] sm:$0xff]
  %v39 = vld [vmem:[%s0 + $0xd8] sm:$0xff]
  %v40 = vld [vmem:[%s0 + $0xe0] sm:$0xff]
  %v41 = vld [vmem:[%s0 + $0xe8] sm:$0xff]
  %v42 = vld [vmem:[%s0 + $0xf0] sm:$0xff]
  %v43 = vld [vmem:[%s0 + $0xf8] sm:$0xff]
  %v44 = vld [vmem:[%s0 + $0x100] sm:$0xff]
  %v45 = vld [vmem:[%s0 + $0x108] sm:$0xff]
  %v46 = vld [vmem:[%s0 + $0x110] sm:$0xff]
  %v47 = vld [vmem:[%s0 + $0x118] sm:$0xff]
  %v48 = vld [vmem:[%s0 + $0x120] sm:$0xff]
  %v49 = vld [vmem:[%s0 + $0x128] sm:$0xff]
  %v50 = vld [vmem:[%s0 + $0x130] sm:$0xff]
  %v51 = vld [vmem:[%s0 + $0x138] sm:$0xff]
  %v52 = vld [vmem:[%s0 + $0x140] sm:$0xff]
  %v53 = vld [vmem:[%s0 + $0x148] sm:$0xff]
  %v54 = vld [vmem:[%s0 + $0x150] sm:$0xff]
  %v55 = vld [vmem:[%s0 + $0x158] sm:$0xff]
  %v56 = vld [vmem:[%s0 + $0x160] sm:$0xff]
  %v57 = vld [vmem:[%s0 + $0x168] sm:$0xff]
  %v58 = vld [vmem:[%s0 + $0x170] sm:$0xff]
  %v59 = vld [vmem:[%s0 + $0x178] sm:$0xff]
  %v60 = vld [vmem:[%s0 + $0x180] sm:$0xff]
  %v61 = vld [vmem:[%s0 + $0x188] sm:$0xff]
  %v62 = vld [vmem:[%s0 + $0x190] sm:$0xff]
  %v63 = vld [vmem:[%s0 + $0x198] sm:$0xff]
  %v64 = vld [vmem:[%s0 + $0x1a0] sm:$0xff]
  %v65 = vld [vmem:[%s0 + $0x1a8] sm:$0xff]
  %v66 = vld [vmem:[%s0 + $0x1b0] sm:$0xff]
  %v67 = vld [vmem:[%s0 + $0x1b8] sm:$0xff]
  %v68 = vld [vmem:[%s0 + $0x1c0] sm:$0xff]
  %v69 = vld [vmem:[%s0 + $0x1c8] sm:$0xff]
  %v70 = vld [vmem:[%s0 + $0x1d0] sm:$0xff]
  %v71 = vld [vmem:[%s0 + $0x1d8] sm:$0xff]
  %v72 = vld [vmem:[%s0 + $0x1e0] sm:$0xff]
  %v73 = vld [vmem:[%s0 + $0x1e8] sm:$0xff]
  %v74 = vld [vmem:[%s0 + $0x1f0] sm:$0xff]
  %v75 = vld [vmem:[%s0 + $0x1f8] sm:$0xff]
  %v76 = vmax.f32 %v12, 0.0
  %v77 = vmax.f32 %v13, 0.0
  %v78 = vmax.f32 %v14, 0.0
  %v79 = vmax.f32 %v15, 0.0
  %v80 = vmax.f32 %v16, 0.0
  %v81 = vmax.f32 %v17, 0.0
  %v82 = vmax.f32 %v18, 0.0
  %v83 = vmax.f32 %v19, 0.0
  %v84 = vmax.f32 %v20, 0.0
  %v85 = vmax.f32 %v21, 0.0
  %v86 = vmax.f32 %v22, 0.0
  %v87 = vmax.f32 %v23, 0.0
  %v88 = vmax.f32 %v24, 0.0
  %v89 = vmax.f32 %v25, 0.0
  %v90 = vmax.f32 %v26, 0.0
  %v91 = vmax.f32 %v27, 0.0
  %v92 = vmax.f32 %v28, 0.0
  %v93 = vmax.f32 %v29, 0.0
  %v94 = vmax.f32 %v30, 0.0
  %v95 = vmax.f32 %v31, 0.0
  %v96 = vmax.f32 %v32, 0.0
  %v97 = vmax.f32 %v33, 0.0
  %v98 = vmax.f32 %v34, 0.0
  %v99 = vmax.f32 %v35, 0.0
  %v100 = vmax.f32 %v36, 0.0
  %v101 = vmax.f32 %v37, 0.0
  %v102 = vmax.f32 %v38, 0.0
  %v103 = vmax.f32 %v39, 0.0
  %v104 = vmax.f32 %v40, 0.0
  %v105 = vmax.f32 %v41, 0.0
  %v106 = vmax.f32 %v42, 0.0
  %v107 = vmax.f32 %v43, 0.0
  %v108 = vmax.f32 %v44, 0.0
  %v109 = vmax.f32 %v45, 0.0
  %v110 = vmax.f32 %v46, 0.0
  %v111 = vmax.f32 %v47, 0.0
  %v112 = vmax.f32 %v48, 0.0
  %v113 = vmax.f32 %v49, 0.0
  %v114 = vmax.f32 %v50, 0.0
  %v115 = vmax.f32 %v51, 0.0
  %v116 = vmax.f32 %v52, 0.0
  %v117 = vmax.f32 %v53, 0.0
  %v118 = vmax.f32 %v54, 0.0
  %v119 = vmax.f32 %v55, 0.0
  %v120 = vmax.f32 %v56, 0.0
  %v121 = vmax.f32 %v57, 0.0
  %v122 = vmax.f32 %v58, 0.0
  %v123 = vmax.f32 %v59, 0.0
  %v124 = vmax.f32 %v60, 0.0
  %v125 = vmax.f32 %v61, 0.0
  %v126 = vmax.f32 %v62, 0.0
  %v127 = vmax.f32 %v63, 0.0
  %v128 = vmax.f32 %v64, 0.0
  %v129 = vmax.f32 %v65, 0.0
  %v130 = vmax.f32 %v66, 0.0
  %v131 = vmax.f32 %v67, 0.0
  %v132 = vmax.f32 %v68, 0.0
  %v133 = vmax.f32 %v69, 0.0
  %v134 = vmax.f32 %v70, 0.0
  %v135 = vmax.f32 %v71, 0.0
  %v136 = vmax.f32 %v72, 0.0
  %v137 = vmax.f32 %v73, 0.0
  %v138 = vmax.f32 %v74, 0.0
  %v139 = vmax.f32 %v75, 0.0
  %v140 = vpack.c.bf16 %v77, %v76
  %v141 = vpack.c.bf16 %v79, %v78
  %v142 = vpack.c.bf16 %v81, %v80
  %v143 = vpack.c.bf16 %v83, %v82
  %v144 = vpack.c.bf16 %v85, %v84
  %v145 = vpack.c.bf16 %v87, %v86
  %v146 = vpack.c.bf16 %v89, %v88
  %v147 = vpack.c.bf16 %v91, %v90
  %v148 = vpack.c.bf16 %v93, %v92
  %v149 = vpack.c.bf16 %v95, %v94
  %v150 = vpack.c.bf16 %v97, %v96
  %v151 = vpack.c.bf16 %v99, %v98
  %v152 = vpack.c.bf16 %v101, %v100
  %v153 = vpack.c.bf16 %v103, %v102
  %v154 = vpack.c.bf16 %v105, %v104
  %v155 = vpack.c.bf16 %v107, %v106
  %v156 = vpack.c.bf16 %v109, %v108
  %v157 = vpack.c.bf16 %v111, %v110
  %v158 = vpack.c.bf16 %v113, %v112
  %v159 = vpack.c.bf16 %v115, %v114
  %v160 = vpack.c.bf16 %v117, %v116
  %v161 = vpack.c.bf16 %v119, %v118
  %v162 = vpack.c.bf16 %v121, %v120
  %v163 = vpack.c.bf16 %v123, %v122
  %v164 = vpack.c.bf16 %v125, %v124
  %v165 = vpack.c.bf16 %v127, %v126
  %v166 = vpack.c.bf16 %v129, %v128
  %v167 = vpack.c.bf16 %v131, %v130
  %v168 = vpack.c.bf16 %v133, %v132
  %v169 = vpack.c.bf16 %v135, %v134
  %v170 = vpack.c.bf16 %v137, %v136
  %v171 = vpack.c.bf16 %v139, %v138
  %v172 = vld [vmem:[%s1] sm:$0xf]
  %vm173 = vcmask 64512
  %v175 = vsel %vm173, %v140, 0
  %v178 = vsel %vm173, %v141, 0
  %v181 = vsel %vm173, %v142, 0
  %v184 = vsel %vm173, %v143, 0
  %v187 = vsel %vm173, %v144, 0
  %v190 = vsel %vm173, %v145, 0
  %v193 = vsel %vm173, %v146, 0
  %v196 = vsel %vm173, %v147, 0
  %v199 = vsel %vm173, %v148, 0
  %v202 = vsel %vm173, %v149, 0
  %v205 = vsel %vm173, %v150, 0
  %v208 = vsel %vm173, %v151, 0
  %v211 = vsel %vm173, %v152, 0
  %v214 = vsel %vm173, %v153, 0
  %v217 = vsel %vm173, %v154, 0
  %v220 = vsel %vm173, %v155, 0
  %v223 = vsel %vm173, %v156, 0
  %v226 = vsel %vm173, %v157, 0
  %v229 = vsel %vm173, %v158, 0
  %v232 = vsel %vm173, %v159, 0
  %v235 = vsel %vm173, %v160, 0
  %v238 = vsel %vm173, %v161, 0
  %v241 = vsel %vm173, %v162, 0
  %v244 = vsel %vm173, %v163, 0
  %v247 = vsel %vm173, %v164, 0
  %v250 = vsel %vm173, %v165, 0
  %v253 = vsel %vm173, %v166, 0
  %v256 = vsel %vm173, %v167, 0
  %v259 = vsel %vm173, %v168, 0
  %v262 = vsel %vm173, %v169, 0
  %v265 = vsel %vm173, %v170, 0
  %v268 = vsel %vm173, %v171, 0
  %vm270 = vcmask 1043456
  %v272 = vsel %vm270, %v172, 0
  %274 = vmatpush.bf16.msra.mxu0 0
  %275 = vmatpush.bf16.msra.mxu0 0
  %276 = vmatpush.bf16.msra.mxu0 0
  %277 = vmatpush.bf16.msra.mxu0 0
  %278 = vmatpush.bf16.msra.mxu0 0
  %279 = vmatpush.bf16.msra.mxu0 0
  %280 = vmatpush.bf16.msra.mxu0 0
  %281 = vmatpush.bf16.msra.mxu0 %v272
  %282 = vmatmul.bf16.gmra.mxu0 %v175
  %v283 = vpop.f32.mrf.mxu0
  %v284 = vadd.f32 0.0, %v283
  %v285 = vpop.f32.mrf.mxu0
  %v286 = vadd.f32 0.0, %v285
  %287 = vmatmul.bf16.gmra.mxu0 %v178
  %v288 = vpop.f32.mrf.mxu0
  %v289 = vadd.f32 0.0, %v288
  %v290 = vpop.f32.mrf.mxu0
  %v291 = vadd.f32 0.0, %v290
  %292 = vmatmul.bf16.gmra.mxu0 %v181
  %v293 = vpop.f32.mrf.mxu0
  %v294 = vadd.f32 0.0, %v293
  %v295 = vpop.f32.mrf.mxu0
  %v296 = vadd.f32 0.0, %v295
  %297 = vmatmul.bf16.gmra.mxu0 %v184
  %v298 = vpop.f32.mrf.mxu0
  %v299 = vadd.f32 0.0, %v298
  %v300 = vpop.f32.mrf.mxu0
  %v301 = vadd.f32 0.0, %v300
  %302 = vmatmul.bf16.gmra.mxu0 %v187
  %v303 = vpop.f32.mrf.mxu0
  %v304 = vadd.f32 0.0, %v303
  %v305 = vpop.f32.mrf.mxu0
  %v306 = vadd.f32 0.0, %v305
  %307 = vmatmul.bf16.gmra.mxu0 %v190
  %v308 = vpop.f32.mrf.mxu0
  %v309 = vadd.f32 0.0, %v308
  %v310 = vpop.f32.mrf.mxu0
  %v311 = vadd.f32 0.0, %v310
  %312 = vmatmul.bf16.gmra.mxu0 %v193
  %v313 = vpop.f32.mrf.mxu0
  %v314 = vadd.f32 0.0, %v313
  %v315 = vpop.f32.mrf.mxu0
  %v316 = vadd.f32 0.0, %v315
  %317 = vmatmul.bf16.gmra.mxu0 %v196
  %v318 = vpop.f32.mrf.mxu0
  %v319 = vadd.f32 0.0, %v318
  %v320 = vpop.f32.mrf.mxu0
  %v321 = vadd.f32 0.0, %v320
  %322 = vmatmul.bf16.gmra.mxu0 %v199
  %v323 = vpop.f32.mrf.mxu0
  %v324 = vadd.f32 0.0, %v323
  %v325 = vpop.f32.mrf.mxu0
  %v326 = vadd.f32 0.0, %v325
  %327 = vmatmul.bf16.gmra.mxu0 %v202
  %v328 = vpop.f32.mrf.mxu0
  %v329 = vadd.f32 0.0, %v328
  %v330 = vpop.f32.mrf.mxu0
  %v331 = vadd.f32 0.0, %v330
  %332 = vmatmul.bf16.gmra.mxu0 %v205
  %v333 = vpop.f32.mrf.mxu0
  %v334 = vadd.f32 0.0, %v333
  %v335 = vpop.f32.mrf.mxu0
  %v336 = vadd.f32 0.0, %v335
  %337 = vmatmul.bf16.gmra.mxu0 %v208
  %v338 = vpop.f32.mrf.mxu0
  %v339 = vadd.f32 0.0, %v338
  %v340 = vpop.f32.mrf.mxu0
  %v341 = vadd.f32 0.0, %v340
  %342 = vmatmul.bf16.gmra.mxu0 %v211
  %v343 = vpop.f32.mrf.mxu0
  %v344 = vadd.f32 0.0, %v343
  %v345 = vpop.f32.mrf.mxu0
  %v346 = vadd.f32 0.0, %v345
  %347 = vmatmul.bf16.gmra.mxu0 %v214
  %v348 = vpop.f32.mrf.mxu0
  %v349 = vadd.f32 0.0, %v348
  %v350 = vpop.f32.mrf.mxu0
  %v351 = vadd.f32 0.0, %v350
  %352 = vmatmul.bf16.gmra.mxu0 %v217
  %v353 = vpop.f32.mrf.mxu0
  %v354 = vadd.f32 0.0, %v353
  %v355 = vpop.f32.mrf.mxu0
  %v356 = vadd.f32 0.0, %v355
  %357 = vmatmul.bf16.gmra.mxu0 %v220
  %v358 = vpop.f32.mrf.mxu0
  %v359 = vadd.f32 0.0, %v358
  %v360 = vpop.f32.mrf.mxu0
  %v361 = vadd.f32 0.0, %v360
  %362 = vmatmul.bf16.gmra.mxu0 %v223
  %v363 = vpop.f32.mrf.mxu0
  %v364 = vadd.f32 0.0, %v363
  %v365 = vpop.f32.mrf.mxu0
  %v366 = vadd.f32 0.0, %v365
  %367 = vmatmul.bf16.gmra.mxu0 %v226
  %v368 = vpop.f32.mrf.mxu0
  %v369 = vadd.f32 0.0, %v368
  %v370 = vpop.f32.mrf.mxu0
  %v371 = vadd.f32 0.0, %v370
  %372 = vmatmul.bf16.gmra.mxu0 %v229
  %v373 = vpop.f32.mrf.mxu0
  %v374 = vadd.f32 0.0, %v373
  %v375 = vpop.f32.mrf.mxu0
  %v376 = vadd.f32 0.0, %v375
  %377 = vmatmul.bf16.gmra.mxu0 %v232
  %v378 = vpop.f32.mrf.mxu0
  %v379 = vadd.f32 0.0, %v378
  %v380 = vpop.f32.mrf.mxu0
  %v381 = vadd.f32 0.0, %v380
  %382 = vmatmul.bf16.gmra.mxu0 %v235
  %v383 = vpop.f32.mrf.mxu0
  %v384 = vadd.f32 0.0, %v383
  %v385 = vpop.f32.mrf.mxu0
  %v386 = vadd.f32 0.0, %v385
  %387 = vmatmul.bf16.gmra.mxu0 %v238
  %v388 = vpop.f32.mrf.mxu0
  %v389 = vadd.f32 0.0, %v388
  %v390 = vpop.f32.mrf.mxu0
  %v391 = vadd.f32 0.0, %v390
  %392 = vmatmul.bf16.gmra.mxu0 %v241
  %v393 = vpop.f32.mrf.mxu0
  %v394 = vadd.f32 0.0, %v393
  %v395 = vpop.f32.mrf.mxu0
  %v396 = vadd.f32 0.0, %v395
  %397 = vmatmul.bf16.gmra.mxu0 %v244
  %v398 = vpop.f32.mrf.mxu0
  %v399 = vadd.f32 0.0, %v398
  %v400 = vpop.f32.mrf.mxu0
  %v401 = vadd.f32 0.0, %v400
  %402 = vmatmul.bf16.gmra.mxu0 %v247
  %v403 = vpop.f32.mrf.mxu0
  %v404 = vadd.f32 0.0, %v403
  %v405 = vpop.f32.mrf.mxu0
  %v406 = vadd.f32 0.0, %v405
  %407 = vmatmul.bf16.gmra.mxu0 %v250
  %v408 = vpop.f32.mrf.mxu0
  %v409 = vadd.f32 0.0, %v408
  %v410 = vpop.f32.mrf.mxu0
  %v411 = vadd.f32 0.0, %v410
  %412 = vmatmul.bf16.gmra.mxu0 %v253
  %v413 = vpop.f32.mrf.mxu0
  %v414 = vadd.f32 0.0, %v413
  %v415 = vpop.f32.mrf.mxu0
  %v416 = vadd.f32 0.0, %v415
  %417 = vmatmul.bf16.gmra.mxu0 %v256
  %v418 = vpop.f32.mrf.mxu0
  %v419 = vadd.f32 0.0, %v418
  %v420 = vpop.f32.mrf.mxu0
  %v421 = vadd.f32 0.0, %v420
  %422 = vmatmul.bf16.gmra.mxu0 %v259
  %v423 = vpop.f32.mrf.mxu0
  %v424 = vadd.f32 0.0, %v423
  %v425 = vpop.f32.mrf.mxu0
  %v426 = vadd.f32 0.0, %v425
  %427 = vmatmul.bf16.gmra.mxu0 %v262
  %v428 = vpop.f32.mrf.mxu0
  %v429 = vadd.f32 0.0, %v428
  %v430 = vpop.f32.mrf.mxu0
  %v431 = vadd.f32 0.0, %v430
  %432 = vmatmul.bf16.gmra.mxu0 %v265
  %v433 = vpop.f32.mrf.mxu0
  %v434 = vadd.f32 0.0, %v433
  %v435 = vpop.f32.mrf.mxu0
  %v436 = vadd.f32 0.0, %v435
  %437 = vmatmul.bf16.gmra.mxu0 %v268
  %v438 = vpop.f32.mrf.mxu0
  %v439 = vadd.f32 0.0, %v438
  %v440 = vpop.f32.mrf.mxu0
  %v441 = vadd.f32 0.0, %v440
  %442 = vdwg.mxu0
  %v443 = vpack.c.bf16 %v284, %v284
  %v444 = vpack.c.bf16 %v286, %v286
  %v445 = vpack.c.bf16 %v289, %v289
  %v446 = vpack.c.bf16 %v291, %v291
  %v447 = vpack.c.bf16 %v294, %v294
  %v448 = vpack.c.bf16 %v296, %v296
  %v449 = vpack.c.bf16 %v299, %v299
  %v450 = vpack.c.bf16 %v301, %v301
  %v451 = vpack.c.bf16 %v304, %v304
  %v452 = vpack.c.bf16 %v306, %v306
  %v453 = vpack.c.bf16 %v309, %v309
  %v454 = vpack.c.bf16 %v311, %v311
  %v455 = vpack.c.bf16 %v314, %v314
  %v456 = vpack.c.bf16 %v316, %v316
  %v457 = vpack.c.bf16 %v319, %v319
  %v458 = vpack.c.bf16 %v321, %v321
  %v459 = vpack.c.bf16 %v324, %v324
  %v460 = vpack.c.bf16 %v326, %v326
  %v461 = vpack.c.bf16 %v329, %v329
  %v462 = vpack.c.bf16 %v331, %v331
  %v463 = vpack.c.bf16 %v334, %v334
  %v464 = vpack.c.bf16 %v336, %v336
  %v465 = vpack.c.bf16 %v339, %v339
  %v466 = vpack.c.bf16 %v341, %v341
  %v467 = vpack.c.bf16 %v344, %v344
  %v468 = vpack.c.bf16 %v346, %v346
  %v469 = vpack.c.bf16 %v349, %v349
  %v470 = vpack.c.bf16 %v351, %v351
  %v471 = vpack.c.bf16 %v354, %v354
  %v472 = vpack.c.bf16 %v356, %v356
  %v473 = vpack.c.bf16 %v359, %v359
  %v474 = vpack.c.bf16 %v361, %v361
  %v475 = vpack.c.bf16 %v364, %v364
  %v476 = vpack.c.bf16 %v366, %v366
  %v477 = vpack.c.bf16 %v369, %v369
  %v478 = vpack.c.bf16 %v371, %v371
  %v479 = vpack.c.bf16 %v374, %v374
  %v480 = vpack.c.bf16 %v376, %v376
  %v481 = vpack.c.bf16 %v379, %v379
  %v482 = vpack.c.bf16 %v381, %v381
  %v483 = vpack.c.bf16 %v384, %v384
  %v484 = vpack.c.bf16 %v386, %v386
  %v485 = vpack.c.bf16 %v389, %v389
  %v486 = vpack.c.bf16 %v391, %v391
  %v487 = vpack.c.bf16 %v394, %v394
  %v488 = vpack.c.bf16 %v396, %v396
  %v489 = vpack.c.bf16 %v399, %v399
  %v490 = vpack.c.bf16 %v401, %v401
  %v491 = vpack.c.bf16 %v404, %v404
  %v492 = vpack.c.bf16 %v406, %v406
  %v493 = vpack.c.bf16 %v409, %v409
  %v494 = vpack.c.bf16 %v411, %v411
  %v495 = vpack.c.bf16 %v414, %v414
  %v496 = vpack.c.bf16 %v416, %v416
  %v497 = vpack.c.bf16 %v419, %v419
  %v498 = vpack.c.bf16 %v421, %v421
  %v499 = vpack.c.bf16 %v424, %v424
  %v500 = vpack.c.bf16 %v426, %v426
  %v501 = vpack.c.bf16 %v429, %v429
  %v502 = vpack.c.bf16 %v431, %v431
  %v503 = vpack.c.bf16 %v434, %v434
  %v504 = vpack.c.bf16 %v436, %v436
  %v505 = vpack.c.bf16 %v439, %v439
  %v506 = vpack.c.bf16 %v441, %v441
  %507 = vst [vmem:[%s2] sm:$0xf] %v443
  %508 = vst [vmem:[%s2 + $0x4] sm:$0xf] %v444
  %509 = vst [vmem:[%s2 + $0x8] sm:$0xf] %v445
  %510 = vst [vmem:[%s2 + $0xc] sm:$0xf] %v446
  %511 = vst [vmem:[%s2 + $0x10] sm:$0xf] %v447
  %512 = vst [vmem:[%s2 + $0x14] sm:$0xf] %v448
  %513 = vst [vmem:[%s2 + $0x18] sm:$0xf] %v449
  %514 = vst [vmem:[%s2 + $0x1c] sm:$0xf] %v450
  %515 = vst [vmem:[%s2 + $0x20] sm:$0xf] %v451
  %516 = vst [vmem:[%s2 + $0x24] sm:$0xf] %v452
  %517 = vst [vmem:[%s2 + $0x28] sm:$0xf] %v453
  %518 = vst [vmem:[%s2 + $0x2c] sm:$0xf] %v454
  %519 = vst [vmem:[%s2 + $0x30] sm:$0xf] %v455
  %520 = vst [vmem:[%s2 + $0x34] sm:$0xf] %v456
  %521 = vst [vmem:[%s2 + $0x38] sm:$0xf] %v457
  %522 = vst [vmem:[%s2 + $0x3c] sm:$0xf] %v458
  %523 = vst [vmem:[%s2 + $0x40] sm:$0xf] %v459
  %524 = vst [vmem:[%s2 + $0x44] sm:$0xf] %v460
  %525 = vst [vmem:[%s2 + $0x48] sm:$0xf] %v461
  %526 = vst [vmem:[%s2 + $0x4c] sm:$0xf] %v462
  %527 = vst [vmem:[%s2 + $0x50] sm:$0xf] %v463
  %528 = vst [vmem:[%s2 + $0x54] sm:$0xf] %v464
  %529 = vst [vmem:[%s2 + $0x58] sm:$0xf] %v465
  %530 = vst [vmem:[%s2 + $0x5c] sm:$0xf] %v466
  %531 = vst [vmem:[%s2 + $0x60] sm:$0xf] %v467
  %532 = vst [vmem:[%s2 + $0x64] sm:$0xf] %v468
  %533 = vst [vmem:[%s2 + $0x68] sm:$0xf] %v469
  %534 = vst [vmem:[%s2 + $0x6c] sm:$0xf] %v470
  %535 = vst [vmem:[%s2 + $0x70] sm:$0xf] %v471
  %536 = vst [vmem:[%s2 + $0x74] sm:$0xf] %v472
  %537 = vst [vmem:[%s2 + $0x78] sm:$0xf] %v473
  %538 = vst [vmem:[%s2 + $0x7c] sm:$0xf] %v474
  %539 = vst [vmem:[%s2 + $0x80] sm:$0xf] %v475
  %540 = vst [vmem:[%s2 + $0x84] sm:$0xf] %v476
  %541 = vst [vmem:[%s2 + $0x88] sm:$0xf] %v477
  %542 = vst [vmem:[%s2 + $0x8c] sm:$0xf] %v478
  %543 = vst [vmem:[%s2 + $0x90] sm:$0xf] %v479
  %544 = vst [vmem:[%s2 + $0x94] sm:$0xf] %v480
  %545 = vst [vmem:[%s2 + $0x98] sm:$0xf] %v481
  %546 = vst [vmem:[%s2 + $0x9c] sm:$0xf] %v482
  %547 = vst [vmem:[%s2 + $0xa0] sm:$0xf] %v483
  %548 = vst [vmem:[%s2 + $0xa4] sm:$0xf] %v484
  %549 = vst [vmem:[%s2 + $0xa8] sm:$0xf] %v485
  %550 = vst [vmem:[%s2 + $0xac] sm:$0xf] %v486
  %551 = vst [vmem:[%s2 + $0xb0] sm:$0xf] %v487
  %552 = vst [vmem:[%s2 + $0xb4] sm:$0xf] %v488
  %553 = vst [vmem:[%s2 + $0xb8] sm:$0xf] %v489
  %554 = vst [vmem:[%s2 + $0xbc] sm:$0xf] %v490
  %555 = vst [vmem:[%s2 + $0xc0] sm:$0xf] %v491
  %556 = vst [vmem:[%s2 + $0xc4] sm:$0xf] %v492
  %557 = vst [vmem:[%s2 + $0xc8] sm:$0xf] %v493
  %558 = vst [vmem:[%s2 + $0xcc] sm:$0xf] %v494
  %559 = vst [vmem:[%s2 + $0xd0] sm:$0xf] %v495
  %560 = vst [vmem:[%s2 + $0xd4] sm:$0xf] %v496
  %561 = vst [vmem:[%s2 + $0xd8] sm:$0xf] %v497
  %562 = vst [vmem:[%s2 + $0xdc] sm:$0xf] %v498
  %563 = vst [vmem:[%s2 + $0xe0] sm:$0xf] %v499
  %564 = vst [vmem:[%s2 + $0xe4] sm:$0xf] %v500
  %565 = vst [vmem:[%s2 + $0xe8] sm:$0xf] %v501
  %566 = vst [vmem:[%s2 + $0xec] sm:$0xf] %v502
  %567 = vst [vmem:[%s2 + $0xf0] sm:$0xf] %v503
  %568 = vst [vmem:[%s2 + $0xf4] sm:$0xf] %v504
  %569 = vst [vmem:[%s2 + $0xf8] sm:$0xf] %v505
  %570 = vst [vmem:[%s2 + $0xfc] sm:$0xf] %v506
  // Predicated region
  $region10: #{_fe_clipgcn_impl.2} parent=0 // pred_check
    _
  $region11: #{_fe_clipgcn_impl.2} parent=0 // pred_check_branch
    %572 = sbr.rel (0) target = $region13
  $region12: #{_fe_clipgcn_impl.2} parent=0 // pred_region
    _
  $region13: #{_fe_clipgcn_impl.2} parent=0 // pred_fallthru
    _
  // Predicated region
  $region14: #{_fe_clipgcn_impl.2} parent=0 // pred_check
    _
  $region15: #{_fe_clipgcn_impl.2} parent=0 // pred_check_branch
    %574 = sbr.rel (0) target = $region17
  $region16: #{_fe_clipgcn_impl.2} parent=0 // pred_region
    _
  $region17: #{_fe_clipgcn_impl.2} parent=0 // pred_fallthru
    _

// kernel: _fe_clipgcn_impl.3
$region0: #{_fe_clipgcn_impl.3}
  #allocation0 [shape = 'u32[]', space=smem, size = 0x4, offset = 0x4, fixed_abs, tag = 'smem constant byte address 0x4 - core index']
  #allocation1 [shape = 'u32[72,128]{1,0:T(1,128)}', space=vmem, size = 0x9000, scoped, tag = 'internal scratch']
  #allocation2 [shape = 'f32[512,128]{1,0:T(8,128)}', space=vmem, size = 0x40000, scoped, tag = 'scratch operand']
  #allocation3 [shape = 's32[1]{0}', space=sflag, size = 0x4, scoped, tag = 'scoped memory for _fe_clipgcn_impl.3']
  #allocation4 [shape = 's32[1]{0:T(128)S(6)}', space=smem, size = 0x200, scoped, tag = 'prefetched SMEM operand 0']
  #allocation5 [shape = 's32[1]{0:T(128)S(6)}', space=smem, size = 0x200, scoped, tag = 'prefetched SMEM operand 1']
  %s0 = inlined_call_operand.<no memory space> [shape: s32[1], index: 0, kind: input, shape index: {}]
  %s1 = inlined_call_operand.<no memory space> [shape: s32[1], index: 1, kind: input, shape index: {}]
  %s2 = inlined_call_operand.vmem [shape: bf16[512,512], index: 2, kind: input, shape index: {}]
  %s3 = inlined_call_operand.vmem [shape: bf16[512,128], index: 3, kind: input, shape index: {}]
  %s4 = inlined_call_operand.vmem [shape: f32[2,512], index: 4, kind: input, shape index: {}]
  %s5 = inlined_call_operand.vmem [shape: f32[2,512], index: 5, kind: input, shape index: {}]
  %s6 = inlined_call_operand.vmem [shape: f32[1,128], index: 6, kind: input, shape index: {}]
  %s7 = inlined_call_operand.vmem [shape: f32[1,2,128], index: 7, kind: output, shape index: {0}]
  %s8 = inlined_call_operand.vmem [shape: f32[1,2,128], index: 8, kind: output, shape index: {1}]
  %9 = xla_tuple %s7, %s8
  %s10 = sld [smem:[#allocation0]]
  $region50: #{_fe_clipgcn_impl.3} parent=0
    _
  %s12 = ssub.s32 1, %s10
  %s13 = scalar_select 0, %s12, %s10
  %14 = sst [smem:[#allocation4]] %s0
  %15 = sst [smem:[#allocation5]] %s1
  // Predicated region
  $region2: #{_fe_clipgcn_impl.3} parent=0 // pred_check
    _
  $region3: #{_fe_clipgcn_impl.3} parent=0 // pred_check_branch
    %17 = sbr.rel (0) target = $region5
  $region4: #{_fe_clipgcn_impl.3} parent=0 // pred_region
    %s18 = sadd.s32 0, 0
    %s19 = sld [smem:[#allocation4 + %s18]]
    %s20 = smul.u32 4, %s19
    %p21 = scmp.lt.s32.totalorder %s20, 3
    %s22 = scalar_select %p21, %s20, 3
    %s23 = smul.addr %s22, 4
    %s24 = scalar_lea.vmem %s2, %s23
    %s25 = sadd.s32 0, 0
    %s26 = sld [smem:[#allocation4 + %s25]]
    %s27 = smul.u32 4, %s26
  $region5: #{_fe_clipgcn_impl.3} parent=0 // pred_fallthru
    _
  // Predicated region
  $region6: #{_fe_clipgcn_impl.3} parent=0 // pred_check
    _
  $region7: #{_fe_clipgcn_impl.3} parent=0 // pred_check_branch
    %29 = sbr.rel (0) target = $region9
  $region8: #{_fe_clipgcn_impl.3} parent=0 // pred_region
    _
  $region9: #{_fe_clipgcn_impl.3} parent=0 // pred_fallthru
    _
  // Predicated region
  $region10: #{_fe_clipgcn_impl.3} parent=0 // pred_check
    _
  $region11: #{_fe_clipgcn_impl.3} parent=0 // pred_check_branch
    %31 = sbr.rel (0) target = $region13
  $region12: #{_fe_clipgcn_impl.3} parent=0 // pred_region
    _
  $region13: #{_fe_clipgcn_impl.3} parent=0 // pred_fallthru
    _
  // Predicated region
  $region14: #{_fe_clipgcn_impl.3} parent=0 // pred_check
    _
  $region15: #{_fe_clipgcn_impl.3} parent=0 // pred_check_branch
    %33 = sbr.rel (0) target = $region17
  $region16: #{_fe_clipgcn_impl.3} parent=0 // pred_region
    _
  $region17: #{_fe_clipgcn_impl.3} parent=0 // pred_fallthru
    _
  // Predicated region
  $region18: #{_fe_clipgcn_impl.3} parent=0 // pred_check
    _
  $region19: #{_fe_clipgcn_impl.3} parent=0 // pred_check_branch
    %35 = sbr.rel (0) target = $region21
  $region20: #{_fe_clipgcn_impl.3} parent=0 // pred_region
    _
  $region21: #{_fe_clipgcn_impl.3} parent=0 // pred_fallthru
    _
  %s36 = sadd.s32 0, 0
  %s37 = sld [smem:[#allocation4 + %s36]]
  %s38 = smul.u32 4, %s37
  %p39 = scmp.lt.s32.totalorder %s38, 3
  %s40 = scalar_select %p39, %s38, 3
  %s41 = smul.addr %s40, 4
  %s42 = scalar_lea.vmem %s2, %s41
  %s43 = sadd.s32 0, 0
  %s44 = sld [smem:[#allocation4 + %s43]]
  %s45 = smul.u32 4, %s44
  %p46 = scmp.lt.s32.totalorder %s45, 3
  %s47 = scalar_select %p46, %s45, 3
  %s48 = smul.addr %s47, 4
  %s49 = scalar_lea.vmem %s2, %s48
  %s50 = sadd.s32 0, 0
  %s51 = sld [smem:[#allocation4 + %s50]]
  %s52 = smul.u32 4, %s51
  %p53 = scmp.eq.s32.totalorder 0, 0
  // Predicated region
  $region22: #{_fe_clipgcn_impl.3} parent=0 // pred_check
    %p54 = pneg %p53
  $region23: #{_fe_clipgcn_impl.3} parent=0 // pred_check_branch
    %56 = sbr.rel (%p54) target = $region25
  $region24: #{_fe_clipgcn_impl.3} parent=0 // pred_region
    %57 = vst [vmem:[#allocation2] sm:$0xff] 0.0
    %58 = vst [vmem:[#allocation2 + $0x8] sm:$0xff] 0.0
    %59 = vst [vmem:[#allocation2 + $0x10] sm:$0xff] 0.0
    %60 = vst [vmem:[#allocation2 + $0x18] sm:$0xff] 0.0
    %61 = vst [vmem:[#allocation2 + $0x20] sm:$0xff] 0.0
    %62 = vst [vmem:[#allocation2 + $0x28] sm:$0xff] 0.0
    %63 = vst [vmem:[#allocation2 + $0x30] sm:$0xff] 0.0
    %64 = vst [vmem:[#allocation2 + $0x38] sm:$0xff] 0.0
    %65 = vst [vmem:[#allocation2 + $0x40] sm:$0xff] 0.0
    %66 = vst [vmem:[#allocation2 + $0x48] sm:$0xff] 0.0
    %67 = vst [vmem:[#allocation2 + $0x50] sm:$0xff] 0.0
    %68 = vst [vmem:[#allocation2 + $0x58] sm:$0xff] 0.0
    %69 = vst [vmem:[#allocation2 + $0x60] sm:$0xff] 0.0
    %70 = vst [vmem:[#allocation2 + $0x68] sm:$0xff] 0.0
    %71 = vst [vmem:[#allocation2 + $0x70] sm:$0xff] 0.0
    %72 = vst [vmem:[#allocation2 + $0x78] sm:$0xff] 0.0
    %73 = vst [vmem:[#allocation2 + $0x80] sm:$0xff] 0.0
    %74 = vst [vmem:[#allocation2 + $0x88] sm:$0xff] 0.0
    %75 = vst [vmem:[#allocation2 + $0x90] sm:$0xff] 0.0
    %76 = vst [vmem:[#allocation2 + $0x98] sm:$0xff] 0.0
    %77 = vst [vmem:[#allocation2 + $0xa0] sm:$0xff] 0.0
    %78 = vst [vmem:[#allocation2 + $0xa8] sm:$0xff] 0.0
    %79 = vst [vmem:[#allocation2 + $0xb0] sm:$0xff] 0.0
    %80 = vst [vmem:[#allocation2 + $0xb8] sm:$0xff] 0.0
    %81 = vst [vmem:[#allocation2 + $0xc0] sm:$0xff] 0.0
    %82 = vst [vmem:[#allocation2 + $0xc8] sm:$0xff] 0.0
    %83 = vst [vmem:[#allocation2 + $0xd0] sm:$0xff] 0.0
    %84 = vst [vmem:[#allocation2 + $0xd8] sm:$0xff] 0.0
    %85 = vst [vmem:[#allocation2 + $0xe0] sm:$0xff] 0.0
    %86 = vst [vmem:[#allocation2 + $0xe8] sm:$0xff] 0.0
    %87 = vst [vmem:[#allocation2 + $0xf0] sm:$0xff] 0.0
    %88 = vst [vmem:[#allocation2 + $0xf8] sm:$0xff] 0.0
    %89 = vst [vmem:[#allocation2 + $0x100] sm:$0xff] 0.0
    %90 = vst [vmem:[#allocation2 + $0x108] sm:$0xff] 0.0
    %91 = vst [vmem:[#allocation2 + $0x110] sm:$0xff] 0.0
    %92 = vst [vmem:[#allocation2 + $0x118] sm:$0xff] 0.0
    %93 = vst [vmem:[#allocation2 + $0x120] sm:$0xff] 0.0
    %94 = vst [vmem:[#allocation2 + $0x128] sm:$0xff] 0.0
    %95 = vst [vmem:[#allocation2 + $0x130] sm:$0xff] 0.0
    %96 = vst [vmem:[#allocation2 + $0x138] sm:$0xff] 0.0
    %97 = vst [vmem:[#allocation2 + $0x140] sm:$0xff] 0.0
    %98 = vst [vmem:[#allocation2 + $0x148] sm:$0xff] 0.0
    %99 = vst [vmem:[#allocation2 + $0x150] sm:$0xff] 0.0
    %100 = vst [vmem:[#allocation2 + $0x158] sm:$0xff] 0.0
    %101 = vst [vmem:[#allocation2 + $0x160] sm:$0xff] 0.0
    %102 = vst [vmem:[#allocation2 + $0x168] sm:$0xff] 0.0
    %103 = vst [vmem:[#allocation2 + $0x170] sm:$0xff] 0.0
    %104 = vst [vmem:[#allocation2 + $0x178] sm:$0xff] 0.0
    %105 = vst [vmem:[#allocation2 + $0x180] sm:$0xff] 0.0
    %106 = vst [vmem:[#allocation2 + $0x188] sm:$0xff] 0.0
    %107 = vst [vmem:[#allocation2 + $0x190] sm:$0xff] 0.0
    %108 = vst [vmem:[#allocation2 + $0x198] sm:$0xff] 0.0
    %109 = vst [vmem:[#allocation2 + $0x1a0] sm:$0xff] 0.0
    %110 = vst [vmem:[#allocation2 + $0x1a8] sm:$0xff] 0.0
    %111 = vst [vmem:[#allocation2 + $0x1b0] sm:$0xff] 0.0
    %112 = vst [vmem:[#allocation2 + $0x1b8] sm:$0xff] 0.0
    %113 = vst [vmem:[#allocation2 + $0x1c0] sm:$0xff] 0.0
    %114 = vst [vmem:[#allocation2 + $0x1c8] sm:$0xff] 0.0
    %115 = vst [vmem:[#allocation2 + $0x1d0] sm:$0xff] 0.0
    %116 = vst [vmem:[#allocation2 + $0x1d8] sm:$0xff] 0.0
    %117 = vst [vmem:[#allocation2 + $0x1e0] sm:$0xff] 0.0
    %118 = vst [vmem:[#allocation2 + $0x1e8] sm:$0xff] 0.0
    %119 = vst [vmem:[#allocation2 + $0x1f0] sm:$0xff] 0.0
    %120 = vst [vmem:[#allocation2 + $0x1f8] sm:$0xff] 0.0
  $region25: #{_fe_clipgcn_impl.3} parent=0 // pred_fallthru
    _
  %s121 = sld [smem:[#allocation5]]
  %p122 = scmp.lt.s32.totalorder 0, %s121
  // Predicated region
  $region26: #{_fe_clipgcn_impl.3} parent=0 // pred_check
    %p123 = pneg %p122
  $region27: #{_fe_clipgcn_impl.3} parent=0 // pred_check_branch
    %125 = sbr.rel (%p123) target = $region29
  $region28: #{_fe_clipgcn_impl.3} parent=0 // pred_region
    %s126 = sadd.s32 0, 0
    %s127 = sld [smem:[#allocation4 + %s126]]
    %s128 = smul.u32 %s127, 512
    %s129 = sshra.s32 %s128, 3
    %s130 = sand.u32 %s128, 7
    %s131 = smul.addr %s129, 4
    %s132 = scalar_lea.vmem %s3, %s131
    %v133 = vld [vmem:[%s132] sm:$0xf]
    %v134 = vld [vmem:[%s132 + $0x4] sm:$0xf]
    %v135 = vld [vmem:[%s132 + $0x8] sm:$0xf]
    %v136 = vld [vmem:[%s132 + $0xc] sm:$0xf]
    %v137 = vld [vmem:[%s132 + $0x10] sm:$0xf]
    %v138 = vld [vmem:[%s132 + $0x14] sm:$0xf]
    %v139 = vld [vmem:[%s132 + $0x18] sm:$0xf]
    %v140 = vld [vmem:[%s132 + $0x1c] sm:$0xf]
    %v141 = vld [vmem:[%s132 + $0x20] sm:$0xf]
    %v142 = vld [vmem:[%s132 + $0x24] sm:$0xf]
    %v143 = vld [vmem:[%s132 + $0x28] sm:$0xf]
    %v144 = vld [vmem:[%s132 + $0x2c] sm:$0xf]
    %v145 = vld [vmem:[%s132 + $0x30] sm:$0xf]
    %v146 = vld [vmem:[%s132 + $0x34] sm:$0xf]
    %v147 = vld [vmem:[%s132 + $0x38] sm:$0xf]
    %v148 = vld [vmem:[%s132 + $0x3c] sm:$0xf]
    %v149 = vld [vmem:[%s132 + $0x40] sm:$0xf]
    %v150 = vld [vmem:[%s132 + $0x44] sm:$0xf]
    %v151 = vld [vmem:[%s132 + $0x48] sm:$0xf]
    %v152 = vld [vmem:[%s132 + $0x4c] sm:$0xf]
    %v153 = vld [vmem:[%s132 + $0x50] sm:$0xf]
    %v154 = vld [vmem:[%s132 + $0x54] sm:$0xf]
    %v155 = vld [vmem:[%s132 + $0x58] sm:$0xf]
    %v156 = vld [vmem:[%s132 + $0x5c] sm:$0xf]
    %v157 = vld [vmem:[%s132 + $0x60] sm:$0xf]
    %v158 = vld [vmem:[%s132 + $0x64] sm:$0xf]
    %v159 = vld [vmem:[%s132 + $0x68] sm:$0xf]
    %v160 = vld [vmem:[%s132 + $0x6c] sm:$0xf]
    %v161 = vld [vmem:[%s132 + $0x70] sm:$0xf]
    %v162 = vld [vmem:[%s132 + $0x74] sm:$0xf]
    %v163 = vld [vmem:[%s132 + $0x78] sm:$0xf]
    %v164 = vld [vmem:[%s132 + $0x7c] sm:$0xf]
    %v165 = vld [vmem:[%s132 + $0x80] sm:$0xf]
    %v166 = vld [vmem:[%s132 + $0x84] sm:$0xf]
    %v167 = vld [vmem:[%s132 + $0x88] sm:$0xf]
    %v168 = vld [vmem:[%s132 + $0x8c] sm:$0xf]
    %v169 = vld [vmem:[%s132 + $0x90] sm:$0xf]
    %v170 = vld [vmem:[%s132 + $0x94] sm:$0xf]
    %v171 = vld [vmem:[%s132 + $0x98] sm:$0xf]
    %v172 = vld [vmem:[%s132 + $0x9c] sm:$0xf]
    %v173 = vld [vmem:[%s132 + $0xa0] sm:$0xf]
    %v174 = vld [vmem:[%s132 + $0xa4] sm:$0xf]
    %v175 = vld [vmem:[%s132 + $0xa8] sm:$0xf]
    %v176 = vld [vmem:[%s132 + $0xac] sm:$0xf]
    %v177 = vld [vmem:[%s132 + $0xb0] sm:$0xf]
    %v178 = vld [vmem:[%s132 + $0xb4] sm:$0xf]
    %v179 = vld [vmem:[%s132 + $0xb8] sm:$0xf]
    %v180 = vld [vmem:[%s132 + $0xbc] sm:$0xf]
    %v181 = vld [vmem:[%s132 + $0xc0] sm:$0xf]
    %v182 = vld [vmem:[%s132 + $0xc4] sm:$0xf]
    %v183 = vld [vmem:[%s132 + $0xc8] sm:$0xf]
    %v184 = vld [vmem:[%s132 + $0xcc] sm:$0xf]
    %v185 = vld [vmem:[%s132 + $0xd0] sm:$0xf]
    %v186 = vld [vmem:[%s132 + $0xd4] sm:$0xf]
    %v187 = vld [vmem:[%s132 + $0xd8] sm:$0xf]
    %v188 = vld [vmem:[%s132 + $0xdc] sm:$0xf]
    %v189 = vld [vmem:[%s132 + $0xe0] sm:$0xf]
    %v190 = vld [vmem:[%s132 + $0xe4] sm:$0xf]
    %v191 = vld [vmem:[%s132 + $0xe8] sm:$0xf]
    %v192 = vld [vmem:[%s132 + $0xec] sm:$0xf]
    %v193 = vld [vmem:[%s132 + $0xf0] sm:$0xf]
    %v194 = vld [vmem:[%s132 + $0xf4] sm:$0xf]
    %v195 = vld [vmem:[%s132 + $0xf8] sm:$0xf]
    %v196 = vld [vmem:[%s132 + $0xfc] sm:$0xf]
    %v197 = vld [vmem:[#allocation2] sm:$0xff]
    %v198 = vld [vmem:[#allocation2 + $0x8] sm:$0xff]
    %v199 = vld [vmem:[#allocation2 + $0x10] sm:$0xff]
    %v200 = vld [vmem:[#allocation2 + $0x18] sm:$0xff]
    %v201 = vld [vmem:[#allocation2 + $0x20] sm:$0xff]
    %v202 = vld [vmem:[#allocation2 + $0x28] sm:$0xff]
    %v203 = vld [vmem:[#allocation2 + $0x30] sm:$0xff]
    %v204 = vld [vmem:[#allocation2 + $0x38] sm:$0xff]
    %v205 = vld [vmem:[#allocation2 + $0x40] sm:$0xff]
    %v206 = vld [vmem:[#allocation2 + $0x48] sm:$0xff]
    %v207 = vld [vmem:[#allocation2 + $0x50] sm:$0xff]
    %v208 = vld [vmem:[#allocation2 + $0x58] sm:$0xff]
    %v209 = vld [vmem:[#allocation2 + $0x60] sm:$0xff]
    %v210 = vld [vmem:[#allocation2 + $0x68] sm:$0xff]
    %v211 = vld [vmem:[#allocation2 + $0x70] sm:$0xff]
    %v212 = vld [vmem:[#allocation2 + $0x78] sm:$0xff]
    %v213 = vld [vmem:[#allocation2 + $0x80] sm:$0xff]
    %v214 = vld [vmem:[#allocation2 + $0x88] sm:$0xff]
    %v215 = vld [vmem:[#allocation2 + $0x90] sm:$0xff]
    %v216 = vld [vmem:[#allocation2 + $0x98] sm:$0xff]
    %v217 = vld [vmem:[#allocation2 + $0xa0] sm:$0xff]
    %v218 = vld [vmem:[#allocation2 + $0xa8] sm:$0xff]
    %v219 = vld [vmem:[#allocation2 + $0xb0] sm:$0xff]
    %v220 = vld [vmem:[#allocation2 + $0xb8] sm:$0xff]
    %v221 = vld [vmem:[#allocation2 + $0xc0] sm:$0xff]
    %v222 = vld [vmem:[#allocation2 + $0xc8] sm:$0xff]
    %v223 = vld [vmem:[#allocation2 + $0xd0] sm:$0xff]
    %v224 = vld [vmem:[#allocation2 + $0xd8] sm:$0xff]
    %v225 = vld [vmem:[#allocation2 + $0xe0] sm:$0xff]
    %v226 = vld [vmem:[#allocation2 + $0xe8] sm:$0xff]
    %v227 = vld [vmem:[#allocation2 + $0xf0] sm:$0xff]
    %v228 = vld [vmem:[#allocation2 + $0xf8] sm:$0xff]
    %v229 = vld [vmem:[#allocation2 + $0x100] sm:$0xff]
    %v230 = vld [vmem:[#allocation2 + $0x108] sm:$0xff]
    %v231 = vld [vmem:[#allocation2 + $0x110] sm:$0xff]
    %v232 = vld [vmem:[#allocation2 + $0x118] sm:$0xff]
    %v233 = vld [vmem:[#allocation2 + $0x120] sm:$0xff]
    %v234 = vld [vmem:[#allocation2 + $0x128] sm:$0xff]
    %v235 = vld [vmem:[#allocation2 + $0x130] sm:$0xff]
    %v236 = vld [vmem:[#allocation2 + $0x138] sm:$0xff]
    %v237 = vld [vmem:[#allocation2 + $0x140] sm:$0xff]
    %v238 = vld [vmem:[#allocation2 + $0x148] sm:$0xff]
    %v239 = vld [vmem:[#allocation2 + $0x150] sm:$0xff]
    %v240 = vld [vmem:[#allocation2 + $0x158] sm:$0xff]
    %v241 = vld [vmem:[#allocation2 + $0x160] sm:$0xff]
    %v242 = vld [vmem:[#allocation2 + $0x168] sm:$0xff]
    %v243 = vld [vmem:[#allocation2 + $0x170] sm:$0xff]
    %v244 = vld [vmem:[#allocation2 + $0x178] sm:$0xff]
    %v245 = vld [vmem:[#allocation2 + $0x180] sm:$0xff]
    %v246 = vld [vmem:[#allocation2 + $0x188] sm:$0xff]
    %v247 = vld [vmem:[#allocation2 + $0x190] sm:$0xff]
    %v248 = vld [vmem:[#allocation2 + $0x198] sm:$0xff]
    %v249 = vld [vmem:[#allocation2 + $0x1a0] sm:$0xff]
    %v250 = vld [vmem:[#allocation2 + $0x1a8] sm:$0xff]
    %v251 = vld [vmem:[#allocation2 + $0x1b0] sm:$0xff]
    %v252 = vld [vmem:[#allocation2 + $0x1b8] sm:$0xff]
    %v253 = vld [vmem:[#allocation2 + $0x1c0] sm:$0xff]
    %v254 = vld [vmem:[#allocation2 + $0x1c8] sm:$0xff]
    %v255 = vld [vmem:[#allocation2 + $0x1d0] sm:$0xff]
    %v256 = vld [vmem:[#allocation2 + $0x1d8] sm:$0xff]
    %v257 = vld [vmem:[#allocation2 + $0x1e0] sm:$0xff]
    %v258 = vld [vmem:[#allocation2 + $0x1e8] sm:$0xff]
    %v259 = vld [vmem:[#allocation2 + $0x1f0] sm:$0xff]
    %v260 = vld [vmem:[#allocation2 + $0x1f8] sm:$0xff]
    %v261 = vld [vmem:[%s49] sm:$0xff]
    %v262 = vld [vmem:[%s49 + $0x8] sm:$0xff]
    %v263 = vld [vmem:[%s49 + $0x10] sm:$0xff]
    %v264 = vld [vmem:[%s49 + $0x18] sm:$0xff]
    %v265 = vld [vmem:[%s49 + $0x20] sm:$0xff]
    %v266 = vld [vmem:[%s49 + $0x28] sm:$0xff]
    %v267 = vld [vmem:[%s49 + $0x30] sm:$0xff]
    %v268 = vld [vmem:[%s49 + $0x38] sm:$0xff]
    %v269 = vld [vmem:[%s49 + $0x40] sm:$0xff]
    %v270 = vld [vmem:[%s49 + $0x48] sm:$0xff]
    %v271 = vld [vmem:[%s49 + $0x50] sm:$0xff]
    %v272 = vld [vmem:[%s49 + $0x58] sm:$0xff]
    %v273 = vld [vmem:[%s49 + $0x60] sm:$0xff]
    %v274 = vld [vmem:[%s49 + $0x68] sm:$0xff]
    %v275 = vld [vmem:[%s49 + $0x70] sm:$0xff]
    %v276 = vld [vmem:[%s49 + $0x78] sm:$0xff]
    %v277 = vld [vmem:[%s49 + $0x80] sm:$0xff]
    %v278 = vld [vmem:[%s49 + $0x88] sm:$0xff]
    %v279 = vld [vmem:[%s49 + $0x90] sm:$0xff]
    %v280 = vld [vmem:[%s49 + $0x98] sm:$0xff]
    %v281 = vld [vmem:[%s49 + $0xa0] sm:$0xff]
    %v282 = vld [vmem:[%s49 + $0xa8] sm:$0xff]
    %v283 = vld [vmem:[%s49 + $0xb0] sm:$0xff]
    %v284 = vld [vmem:[%s49 + $0xb8] sm:$0xff]
    %v285 = vld [vmem:[%s49 + $0xc0] sm:$0xff]
    %v286 = vld [vmem:[%s49 + $0xc8] sm:$0xff]
    %v287 = vld [vmem:[%s49 + $0xd0] sm:$0xff]
    %v288 = vld [vmem:[%s49 + $0xd8] sm:$0xff]
    %v289 = vld [vmem:[%s49 + $0xe0] sm:$0xff]
    %v290 = vld [vmem:[%s49 + $0xe8] sm:$0xff]
    %v291 = vld [vmem:[%s49 + $0xf0] sm:$0xff]
    %v292 = vld [vmem:[%s49 + $0xf8] sm:$0xff]
    %v293 = vld [vmem:[%s49 + $0x100] sm:$0xff]
    %v294 = vld [vmem:[%s49 + $0x108] sm:$0xff]
    %v295 = vld [vmem:[%s49 + $0x110] sm:$0xff]
    %v296 = vld [vmem:[%s49 + $0x118] sm:$0xff]
    %v297 = vld [vmem:[%s49 + $0x120] sm:$0xff]
    %v298 = vld [vmem:[%s49 + $0x128] sm:$0xff]
    %v299 = vld [vmem:[%s49 + $0x130] sm:$0xff]
    %v300 = vld [vmem:[%s49 + $0x138] sm:$0xff]
    %v301 = vld [vmem:[%s49 + $0x140] sm:$0xff]
    %v302 = vld [vmem:[%s49 + $0x148] sm:$0xff]
    %v303 = vld [vmem:[%s49 + $0x150] sm:$0xff]
    %v304 = vld [vmem:[%s49 + $0x158] sm:$0xff]
    %v305 = vld [vmem:[%s49 + $0x160] sm:$0xff]
    %v306 = vld [vmem:[%s49 + $0x168] sm:$0xff]
    %v307 = vld [vmem:[%s49 + $0x170] sm:$0xff]
    %v308 = vld [vmem:[%s49 + $0x178] sm:$0xff]
    %v309 = vld [vmem:[%s49 + $0x180] sm:$0xff]
    %v310 = vld [vmem:[%s49 + $0x188] sm:$0xff]
    %v311 = vld [vmem:[%s49 + $0x190] sm:$0xff]
    %v312 = vld [vmem:[%s49 + $0x198] sm:$0xff]
    %v313 = vld [vmem:[%s49 + $0x1a0] sm:$0xff]
    %v314 = vld [vmem:[%s49 + $0x1a8] sm:$0xff]
    %v315 = vld [vmem:[%s49 + $0x1b0] sm:$0xff]
    %v316 = vld [vmem:[%s49 + $0x1b8] sm:$0xff]
    %v317 = vld [vmem:[%s49 + $0x1c0] sm:$0xff]
    %v318 = vld [vmem:[%s49 + $0x1c8] sm:$0xff]
    %v319 = vld [vmem:[%s49 + $0x1d0] sm:$0xff]
    %v320 = vld [vmem:[%s49 + $0x1d8] sm:$0xff]
    %v321 = vld [vmem:[%s49 + $0x1e0] sm:$0xff]
    %v322 = vld [vmem:[%s49 + $0x1e8] sm:$0xff]
    %v323 = vld [vmem:[%s49 + $0x1f0] sm:$0xff]
    %v324 = vld [vmem:[%s49 + $0x1f8] sm:$0xff]
    %v325 = vld [vmem:[%s49 + $0x200] sm:$0xff]
    %v326 = vld [vmem:[%s49 + $0x208] sm:$0xff]
    %v327 = vld [vmem:[%s49 + $0x210] sm:$0xff]
    %v328 = vld [vmem:[%s49 + $0x218] sm:$0xff]
    %v329 = vld [vmem:[%s49 + $0x220] sm:$0xff]
    %v330 = vld [vmem:[%s49 + $0x228] sm:$0xff]
    %v331 = vld [vmem:[%s49 + $0x230] sm:$0xff]
    %v332 = vld [vmem:[%s49 + $0x238] sm:$0xff]
    %v333 = vld [vmem:[%s49 + $0x240] sm:$0xff]
    %v334 = vld [vmem:[%s49 + $0x248] sm:$0xff]
    %v335 = vld [vmem:[%s49 + $0x250] sm:$0xff]
    %v336 = vld [vmem:[%s49 + $0x258] sm:$0xff]
    %v337 = vld [vmem:[%s49 + $0x260] sm:$0xff]
    %v338 = vld [vmem:[%s49 + $0x268] sm:$0xff]
    %v339 = vld [vmem:[%s49 + $0x270] sm:$0xff]
    %v340 = vld [vmem:[%s49 + $0x278] sm:$0xff]
    %v341 = vld [vmem:[%s49 + $0x280] sm:$0xff]
    %v342 = vld [vmem:[%s49 + $0x288] sm:$0xff]
    %v343 = vld [vmem:[%s49 + $0x290] sm:$0xff]
    %v344 = vld [vmem:[%s49 + $0x298] sm:$0xff]
    %v345 = vld [vmem:[%s49 + $0x2a0] sm:$0xff]
    %v346 = vld [vmem:[%s49 + $0x2a8] sm:$0xff]
    %v347 = vld [vmem:[%s49 + $0x2b0] sm:$0xff]
    %v348 = vld [vmem:[%s49 + $0x2b8] sm:$0xff]
    %v349 = vld [vmem:[%s49 + $0x2c0] sm:$0xff]
    %v350 = vld [vmem:[%s49 + $0x2c8] sm:$0xff]
    %v351 = vld [vmem:[%s49 + $0x2d0] sm:$0xff]
    %v352 = vld [vmem:[%s49 + $0x2d8] sm:$0xff]
    %v353 = vld [vmem:[%s49 + $0x2e0] sm:$0xff]
    %v354 = vld [vmem:[%s49 + $0x2e8] sm:$0xff]
    %v355 = vld [vmem:[%s49 + $0x2f0] sm:$0xff]
    %v356 = vld [vmem:[%s49 + $0x2f8] sm:$0xff]
    %v357 = vld [vmem:[%s49 + $0x300] sm:$0xff]
    %v358 = vld [vmem:[%s49 + $0x308] sm:$0xff]
    %v359 = vld [vmem:[%s49 + $0x310] sm:$0xff]
    %v360 = vld [vmem:[%s49 + $0x318] sm:$0xff]
    %v361 = vld [vmem:[%s49 + $0x320] sm:$0xff]
    %v362 = vld [vmem:[%s49 + $0x328] sm:$0xff]
    %v363 = vld [vmem:[%s49 + $0x330] sm:$0xff]
    %v364 = vld [vmem:[%s49 + $0x338] sm:$0xff]
    %v365 = vld [vmem:[%s49 + $0x340] sm:$0xff]
    %v366 = vld [vmem:[%s49 + $0x348] sm:$0xff]
    %v367 = vld [vmem:[%s49 + $0x350] sm:$0xff]
    %v368 = vld [vmem:[%s49 + $0x358] sm:$0xff]
    %v369 = vld [vmem:[%s49 + $0x360] sm:$0xff]
    %v370 = vld [vmem:[%s49 + $0x368] sm:$0xff]
    %v371 = vld [vmem:[%s49 + $0x370] sm:$0xff]
    %v372 = vld [vmem:[%s49 + $0x378] sm:$0xff]
    %v373 = vld [vmem:[%s49 + $0x380] sm:$0xff]
    %v374 = vld [vmem:[%s49 + $0x388] sm:$0xff]
    %v375 = vld [vmem:[%s49 + $0x390] sm:$0xff]
    %v376 = vld [vmem:[%s49 + $0x398] sm:$0xff]
    %v377 = vld [vmem:[%s49 + $0x3a0] sm:$0xff]
    %v378 = vld [vmem:[%s49 + $0x3a8] sm:$0xff]
    %v379 = vld [vmem:[%s49 + $0x3b0] sm:$0xff]
    %v380 = vld [vmem:[%s49 + $0x3b8] sm:$0xff]
    %v381 = vld [vmem:[%s49 + $0x3c0] sm:$0xff]
    %v382 = vld [vmem:[%s49 + $0x3c8] sm:$0xff]
    %v383 = vld [vmem:[%s49 + $0x3d0] sm:$0xff]
    %v384 = vld [vmem:[%s49 + $0x3d8] sm:$0xff]
    %v385 = vld [vmem:[%s49 + $0x3e0] sm:$0xff]
    %v386 = vld [vmem:[%s49 + $0x3e8] sm:$0xff]
    %v387 = vld [vmem:[%s49 + $0x3f0] sm:$0xff]
    %v388 = vld [vmem:[%s49 + $0x3f8] sm:$0xff]
    %v517 = vunpack.c.l.b16 %v261
    %v518 = vunpack.c.h.b16 %v261
    %v519 = vunpack.c.l.b16 %v262
    %v520 = vunpack.c.h.b16 %v262
    %v521 = vunpack.c.l.b16 %v263
    %v522 = vunpack.c.h.b16 %v263
    %v523 = vunpack.c.l.b16 %v264
    %v524 = vunpack.c.h.b16 %v264
    %v525 = vunpack.c.l.b16 %v265
    %v526 = vunpack.c.h.b16 %v265
    %v527 = vunpack.c.l.b16 %v266
    %v528 = vunpack.c.h.b16 %v266
    %v529 = vunpack.c.l.b16 %v267
    %v530 = vunpack.c.h.b16 %v267
    %v531 = vunpack.c.l.b16 %v268
    %v532 = vunpack.c.h.b16 %v268
    %v533 = vunpack.c.l.b16 %v269
    %v534 = vunpack.c.h.b16 %v269
    %v535 = vunpack.c.l.b16 %v270
    %v536 = vunpack.c.h.b16 %v270
    %v537 = vunpack.c.l.b16 %v271
    %v538 = vunpack.c.h.b16 %v271
    %v539 = vunpack.c.l.b16 %v272
    %v540 = vunpack.c.h.b16 %v272
    %v541 = vunpack.c.l.b16 %v273
    %v542 = vunpack.c.h.b16 %v273
    %v543 = vunpack.c.l.b16 %v274
    %v544 = vunpack.c.h.b16 %v274
    %v545 = vunpack.c.l.b16 %v275
    %v546 = vunpack.c.h.b16 %v275
    %v547 = vunpack.c.l.b16 %v276
    %v548 = vunpack.c.h.b16 %v276
    %v549 = vunpack.c.l.b16 %v277
    %v550 = vunpack.c.h.b16 %v277
    %v551 = vunpack.c.l.b16 %v278
    %v552 = vunpack.c.h.b16 %v278
    %v553 = vunpack.c.l.b16 %v279
    %v554 = vunpack.c.h.b16 %v279
    %v555 = vunpack.c.l.b16 %v280
    %v556 = vunpack.c.h.b16 %v280
    %v557 = vunpack.c.l.b16 %v281
    %v558 = vunpack.c.h.b16 %v281
    %v559 = vunpack.c.l.b16 %v282
    %v560 = vunpack.c.h.b16 %v282
    %v561 = vunpack.c.l.b16 %v283
    %v562 = vunpack.c.h.b16 %v283
    %v563 = vunpack.c.l.b16 %v284
    %v564 = vunpack.c.h.b16 %v284
    %v565 = vunpack.c.l.b16 %v285
    %v566 = vunpack.c.h.b16 %v285
    %v567 = vunpack.c.l.b16 %v286
    %v568 = vunpack.c.h.b16 %v286
    %v569 = vunpack.c.l.b16 %v287
    %v570 = vunpack.c.h.b16 %v287
    %v571 = vunpack.c.l.b16 %v288
    %v572 = vunpack.c.h.b16 %v288
    %v573 = vunpack.c.l.b16 %v289
    %v574 = vunpack.c.h.b16 %v289
    %v575 = vunpack.c.l.b16 %v290
    %v576 = vunpack.c.h.b16 %v290
    %v577 = vunpack.c.l.b16 %v291
    %v578 = vunpack.c.h.b16 %v291
    %v579 = vunpack.c.l.b16 %v292
    %v580 = vunpack.c.h.b16 %v292
    %v581 = vunpack.c.l.b16 %v293
    %v582 = vunpack.c.h.b16 %v293
    %v583 = vunpack.c.l.b16 %v294
    %v584 = vunpack.c.h.b16 %v294
    %v585 = vunpack.c.l.b16 %v295
    %v586 = vunpack.c.h.b16 %v295
    %v587 = vunpack.c.l.b16 %v296
    %v588 = vunpack.c.h.b16 %v296
    %v589 = vunpack.c.l.b16 %v297
    %v590 = vunpack.c.h.b16 %v297
    %v591 = vunpack.c.l.b16 %v298
    %v592 = vunpack.c.h.b16 %v298
    %v593 = vunpack.c.l.b16 %v299
    %v594 = vunpack.c.h.b16 %v299
    %v595 = vunpack.c.l.b16 %v300
    %v596 = vunpack.c.h.b16 %v300
    %v597 = vunpack.c.l.b16 %v301
    %v598 = vunpack.c.h.b16 %v301
    %v599 = vunpack.c.l.b16 %v302
    %v600 = vunpack.c.h.b16 %v302
    %v601 = vunpack.c.l.b16 %v303
    %v602 = vunpack.c.h.b16 %v303
    %v603 = vunpack.c.l.b16 %v304
    %v604 = vunpack.c.h.b16 %v304
    %v605 = vunpack.c.l.b16 %v305
    %v606 = vunpack.c.h.b16 %v305
    %v607 = vunpack.c.l.b16 %v306
    %v608 = vunpack.c.h.b16 %v306
    %v609 = vunpack.c.l.b16 %v307
    %v610 = vunpack.c.h.b16 %v307
    %v611 = vunpack.c.l.b16 %v308
    %v612 = vunpack.c.h.b16 %v308
    %v613 = vunpack.c.l.b16 %v309
    %v614 = vunpack.c.h.b16 %v309
    %v615 = vunpack.c.l.b16 %v310
    %v616 = vunpack.c.h.b16 %v310
    %v617 = vunpack.c.l.b16 %v311
    %v618 = vunpack.c.h.b16 %v311
    %v619 = vunpack.c.l.b16 %v312
    %v620 = vunpack.c.h.b16 %v312
    %v621 = vunpack.c.l.b16 %v313
    %v622 = vunpack.c.h.b16 %v313
    %v623 = vunpack.c.l.b16 %v314
    %v624 = vunpack.c.h.b16 %v314
    %v625 = vunpack.c.l.b16 %v315
    %v626 = vunpack.c.h.b16 %v315
    %v627 = vunpack.c.l.b16 %v316
    %v628 = vunpack.c.h.b16 %v316
    %v629 = vunpack.c.l.b16 %v317
    %v630 = vunpack.c.h.b16 %v317
    %v631 = vunpack.c.l.b16 %v318
    %v632 = vunpack.c.h.b16 %v318
    %v633 = vunpack.c.l.b16 %v319
    %v634 = vunpack.c.h.b16 %v319
    %v635 = vunpack.c.l.b16 %v320
    %v636 = vunpack.c.h.b16 %v320
    %v637 = vunpack.c.l.b16 %v321
    %v638 = vunpack.c.h.b16 %v321
    %v639 = vunpack.c.l.b16 %v322
    %v640 = vunpack.c.h.b16 %v322
    %v641 = vunpack.c.l.b16 %v323
    %v642 = vunpack.c.h.b16 %v323
    %v643 = vunpack.c.l.b16 %v324
    %v644 = vunpack.c.h.b16 %v324
    %v645 = vunpack.c.l.b16 %v325
    %v646 = vunpack.c.h.b16 %v325
    %v647 = vunpack.c.l.b16 %v326
    %v648 = vunpack.c.h.b16 %v326
    %v649 = vunpack.c.l.b16 %v327
    %v650 = vunpack.c.h.b16 %v327
    %v651 = vunpack.c.l.b16 %v328
    %v652 = vunpack.c.h.b16 %v328
    %v653 = vunpack.c.l.b16 %v329
    %v654 = vunpack.c.h.b16 %v329
    %v655 = vunpack.c.l.b16 %v330
    %v656 = vunpack.c.h.b16 %v330
    %v657 = vunpack.c.l.b16 %v331
    %v658 = vunpack.c.h.b16 %v331
    %v659 = vunpack.c.l.b16 %v332
    %v660 = vunpack.c.h.b16 %v332
    %v661 = vunpack.c.l.b16 %v333
    %v662 = vunpack.c.h.b16 %v333
    %v663 = vunpack.c.l.b16 %v334
    %v664 = vunpack.c.h.b16 %v334
    %v665 = vunpack.c.l.b16 %v335
    %v666 = vunpack.c.h.b16 %v335
    %v667 = vunpack.c.l.b16 %v336
    %v668 = vunpack.c.h.b16 %v336
    %v669 = vunpack.c.l.b16 %v337
    %v670 = vunpack.c.h.b16 %v337
    %v671 = vunpack.c.l.b16 %v338
    %v672 = vunpack.c.h.b16 %v338
    %v673 = vunpack.c.l.b16 %v339
    %v674 = vunpack.c.h.b16 %v339
    %v675 = vunpack.c.l.b16 %v340
    %v676 = vunpack.c.h.b16 %v340
    %v677 = vunpack.c.l.b16 %v341
    %v678 = vunpack.c.h.b16 %v341
    %v679 = vunpack.c.l.b16 %v342
    %v680 = vunpack.c.h.b16 %v342
    %v681 = vunpack.c.l.b16 %v343
    %v682 = vunpack.c.h.b16 %v343
    %v683 = vunpack.c.l.b16 %v344
    %v684 = vunpack.c.h.b16 %v344
    %v685 = vunpack.c.l.b16 %v345
    %v686 = vunpack.c.h.b16 %v345
    %v687 = vunpack.c.l.b16 %v346
    %v688 = vunpack.c.h.b16 %v346
    %v689 = vunpack.c.l.b16 %v347
    %v690 = vunpack.c.h.b16 %v347
    %v691 = vunpack.c.l.b16 %v348
    %v692 = vunpack.c.h.b16 %v348
    %v693 = vunpack.c.l.b16 %v349
    %v694 = vunpack.c.h.b16 %v349
    %v695 = vunpack.c.l.b16 %v350
    %v696 = vunpack.c.h.b16 %v350
    %v697 = vunpack.c.l.b16 %v351
    %v698 = vunpack.c.h.b16 %v351
    %v699 = vunpack.c.l.b16 %v352
    %v700 = vunpack.c.h.b16 %v352
    %v701 = vunpack.c.l.b16 %v353
    %v702 = vunpack.c.h.b16 %v353
    %v703 = vunpack.c.l.b16 %v354
    %v704 = vunpack.c.h.b16 %v354
    %v705 = vunpack.c.l.b16 %v355
    %v706 = vunpack.c.h.b16 %v355
    %v707 = vunpack.c.l.b16 %v356
    %v708 = vunpack.c.h.b16 %v356
    %v709 = vunpack.c.l.b16 %v357
    %v710 = vunpack.c.h.b16 %v357
    %v711 = vunpack.c.l.b16 %v358
    %v712 = vunpack.c.h.b16 %v358
    %v713 = vunpack.c.l.b16 %v359
    %v714 = vunpack.c.h.b16 %v359
    %v715 = vunpack.c.l.b16 %v360
    %v716 = vunpack.c.h.b16 %v360
    %v717 = vunpack.c.l.b16 %v361
    %v718 = vunpack.c.h.b16 %v361
    %v719 = vunpack.c.l.b16 %v362
    %v720 = vunpack.c.h.b16 %v362
    %v721 = vunpack.c.l.b16 %v363
    %v722 = vunpack.c.h.b16 %v363
    %v723 = vunpack.c.l.b16 %v364
    %v724 = vunpack.c.h.b16 %v364
    %v725 = vunpack.c.l.b16 %v365
    %v726 = vunpack.c.h.b16 %v365
    %v727 = vunpack.c.l.b16 %v366
    %v728 = vunpack.c.h.b16 %v366
    %v729 = vunpack.c.l.b16 %v367
    %v730 = vunpack.c.h.b16 %v367
    %v731 = vunpack.c.l.b16 %v368
    %v732 = vunpack.c.h.b16 %v368
    %v733 = vunpack.c.l.b16 %v369
    %v734 = vunpack.c.h.b16 %v369
    %v735 = vunpack.c.l.b16 %v370
    %v736 = vunpack.c.h.b16 %v370
    %v737 = vunpack.c.l.b16 %v371
    %v738 = vunpack.c.h.b16 %v371
    %v739 = vunpack.c.l.b16 %v372
    %v740 = vunpack.c.h.b16 %v372
    %v741 = vunpack.c.l.b16 %v373
    %v742 = vunpack.c.h.b16 %v373
    %v743 = vunpack.c.l.b16 %v374
    %v744 = vunpack.c.h.b16 %v374
    %v745 = vunpack.c.l.b16 %v375
    %v746 = vunpack.c.h.b16 %v375
    %v747 = vunpack.c.l.b16 %v376
    %v748 = vunpack.c.h.b16 %v376
    %v749 = vunpack.c.l.b16 %v377
    %v750 = vunpack.c.h.b16 %v377
    %v751 = vunpack.c.l.b16 %v378
    %v752 = vunpack.c.h.b16 %v378
    %v753 = vunpack.c.l.b16 %v379
    %v754 = vunpack.c.h.b16 %v379
    %v755 = vunpack.c.l.b16 %v380
    %v756 = vunpack.c.h.b16 %v380
    %v757 = vunpack.c.l.b16 %v381
    %v758 = vunpack.c.h.b16 %v381
    %v759 = vunpack.c.l.b16 %v382
    %v760 = vunpack.c.h.b16 %v382
    %v761 = vunpack.c.l.b16 %v383
    %v762 = vunpack.c.h.b16 %v383
    %v763 = vunpack.c.l.b16 %v384
    %v764 = vunpack.c.h.b16 %v384
    %v765 = vunpack.c.l.b16 %v385
    %v766 = vunpack.c.h.b16 %v385
    %v767 = vunpack.c.l.b16 %v386
    %v768 = vunpack.c.h.b16 %v386
    %v769 = vunpack.c.l.b16 %v387
    %v770 = vunpack.c.h.b16 %v387
    %v771 = vunpack.c.l.b16 %v388
    %v772 = vunpack.c.h.b16 %v388
    %v773 = vpack.c.b16 %v521, %v517
    %v774 = vpack.c.b16 %v522, %v518
    %v775 = vpack.c.b16 %v523, %v519
    %v776 = vpack.c.b16 %v524, %v520
    %v777 = vpack.c.b16 %v529, %v525
    %v778 = vpack.c.b16 %v530, %v526
    %v779 = vpack.c.b16 %v531, %v527
    %v780 = vpack.c.b16 %v532, %v528
    %v781 = vpack.c.b16 %v537, %v533
    %v782 = vpack.c.b16 %v538, %v534
    %v783 = vpack.c.b16 %v539, %v535
    %v784 = vpack.c.b16 %v540, %v536
    %v785 = vpack.c.b16 %v545, %v541
    %v786 = vpack.c.b16 %v546, %v542
    %v787 = vpack.c.b16 %v547, %v543
    %v788 = vpack.c.b16 %v548, %v544
    %v789 = vpack.c.b16 %v553, %v549
    %v790 = vpack.c.b16 %v554, %v550
    %v791 = vpack.c.b16 %v555, %v551
    %v792 = vpack.c.b16 %v556, %v552
    %v793 = vpack.c.b16 %v561, %v557
    %v794 = vpack.c.b16 %v562, %v558
    %v795 = vpack.c.b16 %v563, %v559
    %v796 = vpack.c.b16 %v564, %v560
    %v797 = vpack.c.b16 %v569, %v565
    %v798 = vpack.c.b16 %v570, %v566
    %v799 = vpack.c.b16 %v571, %v567
    %v800 = vpack.c.b16 %v572, %v568
    %v801 = vpack.c.b16 %v577, %v573
    %v802 = vpack.c.b16 %v578, %v574
    %v803 = vpack.c.b16 %v579, %v575
    %v804 = vpack.c.b16 %v580, %v576
    %v805 = vpack.c.b16 %v585, %v581
    %v806 = vpack.c.b16 %v586, %v582
    %v807 = vpack.c.b16 %v587, %v583
    %v808 = vpack.c.b16 %v588, %v584
    %v809 = vpack.c.b16 %v593, %v589
    %v810 = vpack.c.b16 %v594, %v590
    %v811 = vpack.c.b16 %v595, %v591
    %v812 = vpack.c.b16 %v596, %v592
    %v813 = vpack.c.b16 %v601, %v597
    %v814 = vpack.c.b16 %v602, %v598
    %v815 = vpack.c.b16 %v603, %v599
    %v816 = vpack.c.b16 %v604, %v600
    %v817 = vpack.c.b16 %v609, %v605
    %v818 = vpack.c.b16 %v610, %v606
    %v819 = vpack.c.b16 %v611, %v607
    %v820 = vpack.c.b16 %v612, %v608
    %v821 = vpack.c.b16 %v617, %v613
    %v822 = vpack.c.b16 %v618, %v614
    %v823 = vpack.c.b16 %v619, %v615
    %v824 = vpack.c.b16 %v620, %v616
    %v825 = vpack.c.b16 %v625, %v621
    %v826 = vpack.c.b16 %v626, %v622
    %v827 = vpack.c.b16 %v627, %v623
    %v828 = vpack.c.b16 %v628, %v624
    %v829 = vpack.c.b16 %v633, %v629
    %v830 = vpack.c.b16 %v634, %v630
    %v831 = vpack.c.b16 %v635, %v631
    %v832 = vpack.c.b16 %v636, %v632
    %v833 = vpack.c.b16 %v641, %v637
    %v834 = vpack.c.b16 %v642, %v638
    %v835 = vpack.c.b16 %v643, %v639
    %v836 = vpack.c.b16 %v644, %v640
    %v837 = vpack.c.b16 %v649, %v645
    %v838 = vpack.c.b16 %v650, %v646
    %v839 = vpack.c.b16 %v651, %v647
    %v840 = vpack.c.b16 %v652, %v648
    %v841 = vpack.c.b16 %v657, %v653
    %v842 = vpack.c.b16 %v658, %v654
    %v843 = vpack.c.b16 %v659, %v655
    %v844 = vpack.c.b16 %v660, %v656
    %v845 = vpack.c.b16 %v665, %v661
    %v846 = vpack.c.b16 %v666, %v662
    %v847 = vpack.c.b16 %v667, %v663
    %v848 = vpack.c.b16 %v668, %v664
    %v849 = vpack.c.b16 %v673, %v669
    %v850 = vpack.c.b16 %v674, %v670
    %v851 = vpack.c.b16 %v675, %v671
    %v852 = vpack.c.b16 %v676, %v672
    %v853 = vpack.c.b16 %v681, %v677
    %v854 = vpack.c.b16 %v682, %v678
    %v855 = vpack.c.b16 %v683, %v679
    %v856 = vpack.c.b16 %v684, %v680
    %v857 = vpack.c.b16 %v689, %v685
    %v858 = vpack.c.b16 %v690, %v686
    %v859 = vpack.c.b16 %v691, %v687
    %v860 = vpack.c.b16 %v692, %v688
    %v861 = vpack.c.b16 %v697, %v693
    %v862 = vpack.c.b16 %v698, %v694
    %v863 = vpack.c.b16 %v699, %v695
    %v864 = vpack.c.b16 %v700, %v696
    %v865 = vpack.c.b16 %v705, %v701
    %v866 = vpack.c.b16 %v706, %v702
    %v867 = vpack.c.b16 %v707, %v703
    %v868 = vpack.c.b16 %v708, %v704
    %v869 = vpack.c.b16 %v713, %v709
    %v870 = vpack.c.b16 %v714, %v710
    %v871 = vpack.c.b16 %v715, %v711
    %v872 = vpack.c.b16 %v716, %v712
    %v873 = vpack.c.b16 %v721, %v717
    %v874 = vpack.c.b16 %v722, %v718
    %v875 = vpack.c.b16 %v723, %v719
    %v876 = vpack.c.b16 %v724, %v720
    %v877 = vpack.c.b16 %v729, %v725
    %v878 = vpack.c.b16 %v730, %v726
    %v879 = vpack.c.b16 %v731, %v727
    %v880 = vpack.c.b16 %v732, %v728
    %v881 = vpack.c.b16 %v737, %v733
    %v882 = vpack.c.b16 %v738, %v734
    %v883 = vpack.c.b16 %v739, %v735
    %v884 = vpack.c.b16 %v740, %v736
    %v885 = vpack.c.b16 %v745, %v741
    %v886 = vpack.c.b16 %v746, %v742
    %v887 = vpack.c.b16 %v747, %v743
    %v888 = vpack.c.b16 %v748, %v744
    %v889 = vpack.c.b16 %v753, %v749
    %v890 = vpack.c.b16 %v754, %v750
    %v891 = vpack.c.b16 %v755, %v751
    %v892 = vpack.c.b16 %v756, %v752
    %v893 = vpack.c.b16 %v761, %v757
    %v894 = vpack.c.b16 %v762, %v758
    %v895 = vpack.c.b16 %v763, %v759
    %v896 = vpack.c.b16 %v764, %v760
    %v897 = vpack.c.b16 %v769, %v765
    %v898 = vpack.c.b16 %v770, %v766
    %v899 = vpack.c.b16 %v771, %v767
    %v900 = vpack.c.b16 %v772, %v768
    %v1093 = vunpack.c.l.b16 %v133
    %v1094 = vunpack.c.l.b16 %v134
    %v1095 = vunpack.c.l.b16 %v135
    %v1096 = vunpack.c.l.b16 %v136
    %v1097 = vunpack.c.l.b16 %v137
    %v1098 = vunpack.c.l.b16 %v138
    %v1099 = vunpack.c.l.b16 %v139
    %v1100 = vunpack.c.l.b16 %v140
    %v1101 = vunpack.c.l.b16 %v141
    %v1102 = vunpack.c.l.b16 %v142
    %v1103 = vunpack.c.l.b16 %v143
    %v1104 = vunpack.c.l.b16 %v144
    %v1105 = vunpack.c.l.b16 %v145
    %v1106 = vunpack.c.l.b16 %v146
    %v1107 = vunpack.c.l.b16 %v147
    %v1108 = vunpack.c.l.b16 %v148
    %v1109 = vunpack.c.l.b16 %v149
    %v1110 = vunpack.c.l.b16 %v150
    %v1111 = vunpack.c.l.b16 %v151
    %v1112 = vunpack.c.l.b16 %v152
    %v1113 = vunpack.c.l.b16 %v153
    %v1114 = vunpack.c.l.b16 %v154
    %v1115 = vunpack.c.l.b16 %v155
    %v1116 = vunpack.c.l.b16 %v156
    %v1117 = vunpack.c.l.b16 %v157
    %v1118 = vunpack.c.l.b16 %v158
    %v1119 = vunpack.c.l.b16 %v159
    %v1120 = vunpack.c.l.b16 %v160
    %v1121 = vunpack.c.l.b16 %v161
    %v1122 = vunpack.c.l.b16 %v162
    %v1123 = vunpack.c.l.b16 %v163
    %v1124 = vunpack.c.l.b16 %v164
    %v1125 = vunpack.c.l.b16 %v165
    %v1126 = vunpack.c.l.b16 %v166
    %v1127 = vunpack.c.l.b16 %v167
    %v1128 = vunpack.c.l.b16 %v168
    %v1129 = vunpack.c.l.b16 %v169
    %v1130 = vunpack.c.l.b16 %v170
    %v1131 = vunpack.c.l.b16 %v171
    %v1132 = vunpack.c.l.b16 %v172
    %v1133 = vunpack.c.l.b16 %v173
    %v1134 = vunpack.c.l.b16 %v174
    %v1135 = vunpack.c.l.b16 %v175
    %v1136 = vunpack.c.l.b16 %v176
    %v1137 = vunpack.c.l.b16 %v177
    %v1138 = vunpack.c.l.b16 %v178
    %v1139 = vunpack.c.l.b16 %v179
    %v1140 = vunpack.c.l.b16 %v180
    %v1141 = vunpack.c.l.b16 %v181
    %v1142 = vunpack.c.l.b16 %v182
    %v1143 = vunpack.c.l.b16 %v183
    %v1144 = vunpack.c.l.b16 %v184
    %v1145 = vunpack.c.l.b16 %v185
    %v1146 = vunpack.c.l.b16 %v186
    %v1147 = vunpack.c.l.b16 %v187
    %v1148 = vunpack.c.l.b16 %v188
    %v1149 = vunpack.c.l.b16 %v189
    %v1150 = vunpack.c.l.b16 %v190
    %v1151 = vunpack.c.l.b16 %v191
    %v1152 = vunpack.c.l.b16 %v192
    %v1153 = vunpack.c.l.b16 %v193
    %v1154 = vunpack.c.l.b16 %v194
    %v1155 = vunpack.c.l.b16 %v195
    %v1156 = vunpack.c.l.b16 %v196
    %v1157 = vpack.c.b16 %v1094, %v1093
    %v1158 = vpack.c.b16 %v1096, %v1095
    %v1159 = vpack.c.b16 %v1098, %v1097
    %v1160 = vpack.c.b16 %v1100, %v1099
    %v1161 = vpack.c.b16 %v1102, %v1101
    %v1162 = vpack.c.b16 %v1104, %v1103
    %v1163 = vpack.c.b16 %v1106, %v1105
    %v1164 = vpack.c.b16 %v1108, %v1107
    %v1165 = vpack.c.b16 %v1110, %v1109
    %v1166 = vpack.c.b16 %v1112, %v1111
    %v1167 = vpack.c.b16 %v1114, %v1113
    %v1168 = vpack.c.b16 %v1116, %v1115
    %v1169 = vpack.c.b16 %v1118, %v1117
    %v1170 = vpack.c.b16 %v1120, %v1119
    %v1171 = vpack.c.b16 %v1122, %v1121
    %v1172 = vpack.c.b16 %v1124, %v1123
    %v1173 = vpack.c.b16 %v1126, %v1125
    %v1174 = vpack.c.b16 %v1128, %v1127
    %v1175 = vpack.c.b16 %v1130, %v1129
    %v1176 = vpack.c.b16 %v1132, %v1131
    %v1177 = vpack.c.b16 %v1134, %v1133
    %v1178 = vpack.c.b16 %v1136, %v1135
    %v1179 = vpack.c.b16 %v1138, %v1137
    %v1180 = vpack.c.b16 %v1140, %v1139
    %v1181 = vpack.c.b16 %v1142, %v1141
    %v1182 = vpack.c.b16 %v1144, %v1143
    %v1183 = vpack.c.b16 %v1146, %v1145
    %v1184 = vpack.c.b16 %v1148, %v1147
    %v1185 = vpack.c.b16 %v1150, %v1149
    %v1186 = vpack.c.b16 %v1152, %v1151
    %v1187 = vpack.c.b16 %v1154, %v1153
    %v1188 = vpack.c.b16 %v1156, %v1155
    %1221 = vmatpush.bf16.msra.mxu0 %v1164
    %1222 = vmatpush.bf16.msra.mxu0 %v1163
    %1223 = vmatpush.bf16.msra.mxu0 %v1162
    %1224 = vmatpush.bf16.msra.mxu0 %v1161
    %1225 = vmatpush.bf16.msra.mxu0 %v1160
    %1226 = vmatpush.bf16.msra.mxu0 %v1159
    %1227 = vmatpush.bf16.msra.mxu0 %v1158
    %1228 = vmatpush.bf16.msra.mxu0 %v1157
    %1229 = vmatmul.bf16.gmra.mxu0 %v773
    %v1230 = vpop.f32.mrf.mxu0
    %v1231 = vadd.f32 0.0, %v1230
    %v1232 = vpop.f32.mrf.mxu0
    %v1233 = vadd.f32 0.0, %v1232
    %1234 = vmatmul.bf16.gmra.mxu0 %v777
    %v1235 = vpop.f32.mrf.mxu0
    %v1236 = vadd.f32 0.0, %v1235
    %v1237 = vpop.f32.mrf.mxu0
    %v1238 = vadd.f32 0.0, %v1237
    %1239 = vmatmul.bf16.gmra.mxu0 %v781
    %v1240 = vpop.f32.mrf.mxu0
    %v1241 = vadd.f32 0.0, %v1240
    %v1242 = vpop.f32.mrf.mxu0
    %v1243 = vadd.f32 0.0, %v1242
    %1244 = vmatmul.bf16.gmra.mxu0 %v785
    %v1245 = vpop.f32.mrf.mxu0
    %v1246 = vadd.f32 0.0, %v1245
    %v1247 = vpop.f32.mrf.mxu0
    %v1248 = vadd.f32 0.0, %v1247
    %1249 = vmatmul.bf16.gmra.mxu0 %v789
    %v1250 = vpop.f32.mrf.mxu0
    %v1251 = vadd.f32 0.0, %v1250
    %v1252 = vpop.f32.mrf.mxu0
    %v1253 = vadd.f32 0.0, %v1252
    %1254 = vmatmul.bf16.gmra.mxu0 %v793
    %v1255 = vpop.f32.mrf.mxu0
    %v1256 = vadd.f32 0.0, %v1255
    %v1257 = vpop.f32.mrf.mxu0
    %v1258 = vadd.f32 0.0, %v1257
    %1259 = vmatmul.bf16.gmra.mxu0 %v797
    %v1260 = vpop.f32.mrf.mxu0
    %v1261 = vadd.f32 0.0, %v1260
    %v1262 = vpop.f32.mrf.mxu0
    %v1263 = vadd.f32 0.0, %v1262
    %1264 = vmatmul.bf16.gmra.mxu0 %v801
    %v1265 = vpop.f32.mrf.mxu0
    %v1266 = vadd.f32 0.0, %v1265
    %v1267 = vpop.f32.mrf.mxu0
    %v1268 = vadd.f32 0.0, %v1267
    %1269 = vmatmul.bf16.gmra.mxu0 %v805
    %v1270 = vpop.f32.mrf.mxu0
    %v1271 = vadd.f32 0.0, %v1270
    %v1272 = vpop.f32.mrf.mxu0
    %v1273 = vadd.f32 0.0, %v1272
    %1274 = vmatmul.bf16.gmra.mxu0 %v809
    %v1275 = vpop.f32.mrf.mxu0
    %v1276 = vadd.f32 0.0, %v1275
    %v1277 = vpop.f32.mrf.mxu0
    %v1278 = vadd.f32 0.0, %v1277
    %1279 = vmatmul.bf16.gmra.mxu0 %v813
    %v1280 = vpop.f32.mrf.mxu0
    %v1281 = vadd.f32 0.0, %v1280
    %v1282 = vpop.f32.mrf.mxu0
    %v1283 = vadd.f32 0.0, %v1282
    %1284 = vmatmul.bf16.gmra.mxu0 %v817
    %v1285 = vpop.f32.mrf.mxu0
    %v1286 = vadd.f32 0.0, %v1285
    %v1287 = vpop.f32.mrf.mxu0
    %v1288 = vadd.f32 0.0, %v1287
    %1289 = vmatmul.bf16.gmra.mxu0 %v821
    %v1290 = vpop.f32.mrf.mxu0
    %v1291 = vadd.f32 0.0, %v1290
    %v1292 = vpop.f32.mrf.mxu0
    %v1293 = vadd.f32 0.0, %v1292
    %1294 = vmatmul.bf16.gmra.mxu0 %v825
    %v1295 = vpop.f32.mrf.mxu0
    %v1296 = vadd.f32 0.0, %v1295
    %v1297 = vpop.f32.mrf.mxu0
    %v1298 = vadd.f32 0.0, %v1297
    %1299 = vmatmul.bf16.gmra.mxu0 %v829
    %v1300 = vpop.f32.mrf.mxu0
    %v1301 = vadd.f32 0.0, %v1300
    %v1302 = vpop.f32.mrf.mxu0
    %v1303 = vadd.f32 0.0, %v1302
    %1304 = vmatmul.bf16.gmra.mxu0 %v833
    %v1305 = vpop.f32.mrf.mxu0
    %v1306 = vadd.f32 0.0, %v1305
    %v1307 = vpop.f32.mrf.mxu0
    %v1308 = vadd.f32 0.0, %v1307
    %1309 = vmatmul.bf16.gmra.mxu0 %v837
    %v1310 = vpop.f32.mrf.mxu0
    %v1311 = vadd.f32 0.0, %v1310
    %v1312 = vpop.f32.mrf.mxu0
    %v1313 = vadd.f32 0.0, %v1312
    %1314 = vmatmul.bf16.gmra.mxu0 %v841
    %v1315 = vpop.f32.mrf.mxu0
    %v1316 = vadd.f32 0.0, %v1315
    %v1317 = vpop.f32.mrf.mxu0
    %v1318 = vadd.f32 0.0, %v1317
    %1319 = vmatmul.bf16.gmra.mxu0 %v845
    %v1320 = vpop.f32.mrf.mxu0
    %v1321 = vadd.f32 0.0, %v1320
    %v1322 = vpop.f32.mrf.mxu0
    %v1323 = vadd.f32 0.0, %v1322
    %1324 = vmatmul.bf16.gmra.mxu0 %v849
    %v1325 = vpop.f32.mrf.mxu0
    %v1326 = vadd.f32 0.0, %v1325
    %v1327 = vpop.f32.mrf.mxu0
    %v1328 = vadd.f32 0.0, %v1327
    %1329 = vmatmul.bf16.gmra.mxu0 %v853
    %v1330 = vpop.f32.mrf.mxu0
    %v1331 = vadd.f32 0.0, %v1330
    %v1332 = vpop.f32.mrf.mxu0
    %v1333 = vadd.f32 0.0, %v1332
    %1334 = vmatmul.bf16.gmra.mxu0 %v857
    %v1335 = vpop.f32.mrf.mxu0
    %v1336 = vadd.f32 0.0, %v1335
    %v1337 = vpop.f32.mrf.mxu0
    %v1338 = vadd.f32 0.0, %v1337
    %1339 = vmatmul.bf16.gmra.mxu0 %v861
    %v1340 = vpop.f32.mrf.mxu0
    %v1341 = vadd.f32 0.0, %v1340
    %v1342 = vpop.f32.mrf.mxu0
    %v1343 = vadd.f32 0.0, %v1342
    %1344 = vmatmul.bf16.gmra.mxu0 %v865
    %v1345 = vpop.f32.mrf.mxu0
    %v1346 = vadd.f32 0.0, %v1345
    %v1347 = vpop.f32.mrf.mxu0
    %v1348 = vadd.f32 0.0, %v1347
    %1349 = vmatmul.bf16.gmra.mxu0 %v869
    %v1350 = vpop.f32.mrf.mxu0
    %v1351 = vadd.f32 0.0, %v1350
    %v1352 = vpop.f32.mrf.mxu0
    %v1353 = vadd.f32 0.0, %v1352
    %1354 = vmatmul.bf16.gmra.mxu0 %v873
    %v1355 = vpop.f32.mrf.mxu0
    %v1356 = vadd.f32 0.0, %v1355
    %v1357 = vpop.f32.mrf.mxu0
    %v1358 = vadd.f32 0.0, %v1357
    %1359 = vmatmul.bf16.gmra.mxu0 %v877
    %v1360 = vpop.f32.mrf.mxu0
    %v1361 = vadd.f32 0.0, %v1360
    %v1362 = vpop.f32.mrf.mxu0
    %v1363 = vadd.f32 0.0, %v1362
    %1364 = vmatmul.bf16.gmra.mxu0 %v881
    %v1365 = vpop.f32.mrf.mxu0
    %v1366 = vadd.f32 0.0, %v1365
    %v1367 = vpop.f32.mrf.mxu0
    %v1368 = vadd.f32 0.0, %v1367
    %1369 = vmatmul.bf16.gmra.mxu0 %v885
    %v1370 = vpop.f32.mrf.mxu0
    %v1371 = vadd.f32 0.0, %v1370
    %v1372 = vpop.f32.mrf.mxu0
    %v1373 = vadd.f32 0.0, %v1372
    %1374 = vmatmul.bf16.gmra.mxu0 %v889
    %v1375 = vpop.f32.mrf.mxu0
    %v1376 = vadd.f32 0.0, %v1375
    %v1377 = vpop.f32.mrf.mxu0
    %v1378 = vadd.f32 0.0, %v1377
    %1379 = vmatmul.bf16.gmra.mxu0 %v893
    %v1380 = vpop.f32.mrf.mxu0
    %v1381 = vadd.f32 0.0, %v1380
    %v1382 = vpop.f32.mrf.mxu0
    %v1383 = vadd.f32 0.0, %v1382
    %1384 = vmatmul.bf16.gmra.mxu0 %v897
    %v1385 = vpop.f32.mrf.mxu0
    %v1386 = vadd.f32 0.0, %v1385
    %v1387 = vpop.f32.mrf.mxu0
    %v1388 = vadd.f32 0.0, %v1387
    %1389 = vdwg.mxu0
    %1390 = vmatpush.bf16.msra.mxu0 %v1172
    %1391 = vmatpush.bf16.msra.mxu0 %v1171
    %1392 = vmatpush.bf16.msra.mxu0 %v1170
    %1393 = vmatpush.bf16.msra.mxu0 %v1169
    %1394 = vmatpush.bf16.msra.mxu0 %v1168
    %1395 = vmatpush.bf16.msra.mxu0 %v1167
    %1396 = vmatpush.bf16.msra.mxu0 %v1166
    %1397 = vmatpush.bf16.msra.mxu0 %v1165
    %1398 = vmatmul.bf16.gmra.mxu0 %v774
    %v1399 = vpop.f32.mrf.mxu0
    %v1400 = vadd.f32 %v1231, %v1399
    %v1401 = vpop.f32.mrf.mxu0
    %v1402 = vadd.f32 %v1233, %v1401
    %1403 = vmatmul.bf16.gmra.mxu0 %v778
    %v1404 = vpop.f32.mrf.mxu0
    %v1405 = vadd.f32 %v1236, %v1404
    %v1406 = vpop.f32.mrf.mxu0
    %v1407 = vadd.f32 %v1238, %v1406
    %1408 = vmatmul.bf16.gmra.mxu0 %v782
    %v1409 = vpop.f32.mrf.mxu0
    %v1410 = vadd.f32 %v1241, %v1409
    %v1411 = vpop.f32.mrf.mxu0
    %v1412 = vadd.f32 %v1243, %v1411
    %1413 = vmatmul.bf16.gmra.mxu0 %v786
    %v1414 = vpop.f32.mrf.mxu0
    %v1415 = vadd.f32 %v1246, %v1414
    %v1416 = vpop.f32.mrf.mxu0
    %v1417 = vadd.f32 %v1248, %v1416
    %1418 = vmatmul.bf16.gmra.mxu0 %v790
    %v1419 = vpop.f32.mrf.mxu0
    %v1420 = vadd.f32 %v1251, %v1419
    %v1421 = vpop.f32.mrf.mxu0
    %v1422 = vadd.f32 %v1253, %v1421
    %1423 = vmatmul.bf16.gmra.mxu0 %v794
    %v1424 = vpop.f32.mrf.mxu0
    %v1425 = vadd.f32 %v1256, %v1424
    %v1426 = vpop.f32.mrf.mxu0
    %v1427 = vadd.f32 %v1258, %v1426
    %1428 = vmatmul.bf16.gmra.mxu0 %v798
    %v1429 = vpop.f32.mrf.mxu0
    %v1430 = vadd.f32 %v1261, %v1429
    %v1431 = vpop.f32.mrf.mxu0
    %v1432 = vadd.f32 %v1263, %v1431
    %1433 = vmatmul.bf16.gmra.mxu0 %v802
    %v1434 = vpop.f32.mrf.mxu0
    %v1435 = vadd.f32 %v1266, %v1434
    %v1436 = vpop.f32.mrf.mxu0
    %v1437 = vadd.f32 %v1268, %v1436
    %1438 = vmatmul.bf16.gmra.mxu0 %v806
    %v1439 = vpop.f32.mrf.mxu0
    %v1440 = vadd.f32 %v1271, %v1439
    %v1441 = vpop.f32.mrf.mxu0
    %v1442 = vadd.f32 %v1273, %v1441
    %1443 = vmatmul.bf16.gmra.mxu0 %v810
    %v1444 = vpop.f32.mrf.mxu0
    %v1445 = vadd.f32 %v1276, %v1444
    %v1446 = vpop.f32.mrf.mxu0
    %v1447 = vadd.f32 %v1278, %v1446
    %1448 = vmatmul.bf16.gmra.mxu0 %v814
    %v1449 = vpop.f32.mrf.mxu0
    %v1450 = vadd.f32 %v1281, %v1449
    %v1451 = vpop.f32.mrf.mxu0
    %v1452 = vadd.f32 %v1283, %v1451
    %1453 = vmatmul.bf16.gmra.mxu0 %v818
    %v1454 = vpop.f32.mrf.mxu0
    %v1455 = vadd.f32 %v1286, %v1454
    %v1456 = vpop.f32.mrf.mxu0
    %v1457 = vadd.f32 %v1288, %v1456
    %1458 = vmatmul.bf16.gmra.mxu0 %v822
    %v1459 = vpop.f32.mrf.mxu0
    %v1460 = vadd.f32 %v1291, %v1459
    %v1461 = vpop.f32.mrf.mxu0
    %v1462 = vadd.f32 %v1293, %v1461
    %1463 = vmatmul.bf16.gmra.mxu0 %v826
    %v1464 = vpop.f32.mrf.mxu0
    %v1465 = vadd.f32 %v1296, %v1464
    %v1466 = vpop.f32.mrf.mxu0
    %v1467 = vadd.f32 %v1298, %v1466
    %1468 = vmatmul.bf16.gmra.mxu0 %v830
    %v1469 = vpop.f32.mrf.mxu0
    %v1470 = vadd.f32 %v1301, %v1469
    %v1471 = vpop.f32.mrf.mxu0
    %v1472 = vadd.f32 %v1303, %v1471
    %1473 = vmatmul.bf16.gmra.mxu0 %v834
    %v1474 = vpop.f32.mrf.mxu0
    %v1475 = vadd.f32 %v1306, %v1474
    %v1476 = vpop.f32.mrf.mxu0
    %v1477 = vadd.f32 %v1308, %v1476
    %1478 = vmatmul.bf16.gmra.mxu0 %v838
    %v1479 = vpop.f32.mrf.mxu0
    %v1480 = vadd.f32 %v1311, %v1479
    %v1481 = vpop.f32.mrf.mxu0
    %v1482 = vadd.f32 %v1313, %v1481
    %1483 = vmatmul.bf16.gmra.mxu0 %v842
    %v1484 = vpop.f32.mrf.mxu0
    %v1485 = vadd.f32 %v1316, %v1484
    %v1486 = vpop.f32.mrf.mxu0
    %v1487 = vadd.f32 %v1318, %v1486
    %1488 = vmatmul.bf16.gmra.mxu0 %v846
    %v1489 = vpop.f32.mrf.mxu0
    %v1490 = vadd.f32 %v1321, %v1489
    %v1491 = vpop.f32.mrf.mxu0
    %v1492 = vadd.f32 %v1323, %v1491
    %1493 = vmatmul.bf16.gmra.mxu0 %v850
    %v1494 = vpop.f32.mrf.mxu0
    %v1495 = vadd.f32 %v1326, %v1494
    %v1496 = vpop.f32.mrf.mxu0
    %v1497 = vadd.f32 %v1328, %v1496
    %1498 = vmatmul.bf16.gmra.mxu0 %v854
    %v1499 = vpop.f32.mrf.mxu0
    %v1500 = vadd.f32 %v1331, %v1499
    %v1501 = vpop.f32.mrf.mxu0
    %v1502 = vadd.f32 %v1333, %v1501
    %1503 = vmatmul.bf16.gmra.mxu0 %v858
    %v1504 = vpop.f32.mrf.mxu0
    %v1505 = vadd.f32 %v1336, %v1504
    %v1506 = vpop.f32.mrf.mxu0
    %v1507 = vadd.f32 %v1338, %v1506
    %1508 = vmatmul.bf16.gmra.mxu0 %v862
    %v1509 = vpop.f32.mrf.mxu0
    %v1510 = vadd.f32 %v1341, %v1509
    %v1511 = vpop.f32.mrf.mxu0
    %v1512 = vadd.f32 %v1343, %v1511
    %1513 = vmatmul.bf16.gmra.mxu0 %v866
    %v1514 = vpop.f32.mrf.mxu0
    %v1515 = vadd.f32 %v1346, %v1514
    %v1516 = vpop.f32.mrf.mxu0
    %v1517 = vadd.f32 %v1348, %v1516
    %1518 = vmatmul.bf16.gmra.mxu0 %v870
    %v1519 = vpop.f32.mrf.mxu0
    %v1520 = vadd.f32 %v1351, %v1519
    %v1521 = vpop.f32.mrf.mxu0
    %v1522 = vadd.f32 %v1353, %v1521
    %1523 = vmatmul.bf16.gmra.mxu0 %v874
    %v1524 = vpop.f32.mrf.mxu0
    %v1525 = vadd.f32 %v1356, %v1524
    %v1526 = vpop.f32.mrf.mxu0
    %v1527 = vadd.f32 %v1358, %v1526
    %1528 = vmatmul.bf16.gmra.mxu0 %v878
    %v1529 = vpop.f32.mrf.mxu0
    %v1530 = vadd.f32 %v1361, %v1529
    %v1531 = vpop.f32.mrf.mxu0
    %v1532 = vadd.f32 %v1363, %v1531
    %1533 = vmatmul.bf16.gmra.mxu0 %v882
    %v1534 = vpop.f32.mrf.mxu0
    %v1535 = vadd.f32 %v1366, %v1534
    %v1536 = vpop.f32.mrf.mxu0
    %v1537 = vadd.f32 %v1368, %v1536
    %1538 = vmatmul.bf16.gmra.mxu0 %v886
    %v1539 = vpop.f32.mrf.mxu0
    %v1540 = vadd.f32 %v1371, %v1539
    %v1541 = vpop.f32.mrf.mxu0
    %v1542 = vadd.f32 %v1373, %v1541
    %1543 = vmatmul.bf16.gmra.mxu0 %v890
    %v1544 = vpop.f32.mrf.mxu0
    %v1545 = vadd.f32 %v1376, %v1544
    %v1546 = vpop.f32.mrf.mxu0
    %v1547 = vadd.f32 %v1378, %v1546
    %1548 = vmatmul.bf16.gmra.mxu0 %v894
    %v1549 = vpop.f32.mrf.mxu0
    %v1550 = vadd.f32 %v1381, %v1549
    %v1551 = vpop.f32.mrf.mxu0
    %v1552 = vadd.f32 %v1383, %v1551
    %1553 = vmatmul.bf16.gmra.mxu0 %v898
    %v1554 = vpop.f32.mrf.mxu0
    %v1555 = vadd.f32 %v1386, %v1554
    %v1556 = vpop.f32.mrf.mxu0
    %v1557 = vadd.f32 %v1388, %v1556
    %1558 = vdwg.mxu0
    %1559 = vmatpush.bf16.msra.mxu0 %v1180
    %1560 = vmatpush.bf16.msra.mxu0 %v1179
    %1561 = vmatpush.bf16.msra.mxu0 %v1178
    %1562 = vmatpush.bf16.msra.mxu0 %v1177
    %1563 = vmatpush.bf16.msra.mxu0 %v1176
    %1564 = vmatpush.bf16.msra.mxu0 %v1175
    %1565 = vmatpush.bf16.msra.mxu0 %v1174
    %1566 = vmatpush.bf16.msra.mxu0 %v1173
    %1567 = vmatmul.bf16.gmra.mxu0 %v775
    %v1568 = vpop.f32.mrf.mxu0
    %v1569 = vadd.f32 %v1400, %v1568
    %v1570 = vpop.f32.mrf.mxu0
    %v1571 = vadd.f32 %v1402, %v1570
    %1572 = vmatmul.bf16.gmra.mxu0 %v779
    %v1573 = vpop.f32.mrf.mxu0
    %v1574 = vadd.f32 %v1405, %v1573
    %v1575 = vpop.f32.mrf.mxu0
    %v1576 = vadd.f32 %v1407, %v1575
    %1577 = vmatmul.bf16.gmra.mxu0 %v783
    %v1578 = vpop.f32.mrf.mxu0
    %v1579 = vadd.f32 %v1410, %v1578
    %v1580 = vpop.f32.mrf.mxu0
    %v1581 = vadd.f32 %v1412, %v1580
    %1582 = vmatmul.bf16.gmra.mxu0 %v787
    %v1583 = vpop.f32.mrf.mxu0
    %v1584 = vadd.f32 %v1415, %v1583
    %v1585 = vpop.f32.mrf.mxu0
    %v1586 = vadd.f32 %v1417, %v1585
    %1587 = vmatmul.bf16.gmra.mxu0 %v791
    %v1588 = vpop.f32.mrf.mxu0
    %v1589 = vadd.f32 %v1420, %v1588
    %v1590 = vpop.f32.mrf.mxu0
    %v1591 = vadd.f32 %v1422, %v1590
    %1592 = vmatmul.bf16.gmra.mxu0 %v795
    %v1593 = vpop.f32.mrf.mxu0
    %v1594 = vadd.f32 %v1425, %v1593
    %v1595 = vpop.f32.mrf.mxu0
    %v1596 = vadd.f32 %v1427, %v1595
    %1597 = vmatmul.bf16.gmra.mxu0 %v799
    %v1598 = vpop.f32.mrf.mxu0
    %v1599 = vadd.f32 %v1430, %v1598
    %v1600 = vpop.f32.mrf.mxu0
    %v1601 = vadd.f32 %v1432, %v1600
    %1602 = vmatmul.bf16.gmra.mxu0 %v803
    %v1603 = vpop.f32.mrf.mxu0
    %v1604 = vadd.f32 %v1435, %v1603
    %v1605 = vpop.f32.mrf.mxu0
    %v1606 = vadd.f32 %v1437, %v1605
    %1607 = vmatmul.bf16.gmra.mxu0 %v807
    %v1608 = vpop.f32.mrf.mxu0
    %v1609 = vadd.f32 %v1440, %v1608
    %v1610 = vpop.f32.mrf.mxu0
    %v1611 = vadd.f32 %v1442, %v1610
    %1612 = vmatmul.bf16.gmra.mxu0 %v811
    %v1613 = vpop.f32.mrf.mxu0
    %v1614 = vadd.f32 %v1445, %v1613
    %v1615 = vpop.f32.mrf.mxu0
    %v1616 = vadd.f32 %v1447, %v1615
    %1617 = vmatmul.bf16.gmra.mxu0 %v815
    %v1618 = vpop.f32.mrf.mxu0
    %v1619 = vadd.f32 %v1450, %v1618
    %v1620 = vpop.f32.mrf.mxu0
    %v1621 = vadd.f32 %v1452, %v1620
    %1622 = vmatmul.bf16.gmra.mxu0 %v819
    %v1623 = vpop.f32.mrf.mxu0
    %v1624 = vadd.f32 %v1455, %v1623
    %v1625 = vpop.f32.mrf.mxu0
    %v1626 = vadd.f32 %v1457, %v1625
    %1627 = vmatmul.bf16.gmra.mxu0 %v823
    %v1628 = vpop.f32.mrf.mxu0
    %v1629 = vadd.f32 %v1460, %v1628
    %v1630 = vpop.f32.mrf.mxu0
    %v1631 = vadd.f32 %v1462, %v1630
    %1632 = vmatmul.bf16.gmra.mxu0 %v827
    %v1633 = vpop.f32.mrf.mxu0
    %v1634 = vadd.f32 %v1465, %v1633
    %v1635 = vpop.f32.mrf.mxu0
    %v1636 = vadd.f32 %v1467, %v1635
    %1637 = vmatmul.bf16.gmra.mxu0 %v831
    %v1638 = vpop.f32.mrf.mxu0
    %v1639 = vadd.f32 %v1470, %v1638
    %v1640 = vpop.f32.mrf.mxu0
    %v1641 = vadd.f32 %v1472, %v1640
    %1642 = vmatmul.bf16.gmra.mxu0 %v835
    %v1643 = vpop.f32.mrf.mxu0
    %v1644 = vadd.f32 %v1475, %v1643
    %v1645 = vpop.f32.mrf.mxu0
    %v1646 = vadd.f32 %v1477, %v1645
    %1647 = vmatmul.bf16.gmra.mxu0 %v839
    %v1648 = vpop.f32.mrf.mxu0
    %v1649 = vadd.f32 %v1480, %v1648
    %v1650 = vpop.f32.mrf.mxu0
    %v1651 = vadd.f32 %v1482, %v1650
    %1652 = vmatmul.bf16.gmra.mxu0 %v843
    %v1653 = vpop.f32.mrf.mxu0
    %v1654 = vadd.f32 %v1485, %v1653
    %v1655 = vpop.f32.mrf.mxu0
    %v1656 = vadd.f32 %v1487, %v1655
    %1657 = vmatmul.bf16.gmra.mxu0 %v847
    %v1658 = vpop.f32.mrf.mxu0
    %v1659 = vadd.f32 %v1490, %v1658
    %v1660 = vpop.f32.mrf.mxu0
    %v1661 = vadd.f32 %v1492, %v1660
    %1662 = vmatmul.bf16.gmra.mxu0 %v851
    %v1663 = vpop.f32.mrf.mxu0
    %v1664 = vadd.f32 %v1495, %v1663
    %v1665 = vpop.f32.mrf.mxu0
    %v1666 = vadd.f32 %v1497, %v1665
    %1667 = vmatmul.bf16.gmra.mxu0 %v855
    %v1668 = vpop.f32.mrf.mxu0
    %v1669 = vadd.f32 %v1500, %v1668
    %v1670 = vpop.f32.mrf.mxu0
    %v1671 = vadd.f32 %v1502, %v1670
    %1672 = vmatmul.bf16.gmra.mxu0 %v859
    %v1673 = vpop.f32.mrf.mxu0
    %v1674 = vadd.f32 %v1505, %v1673
    %v1675 = vpop.f32.mrf.mxu0
    %v1676 = vadd.f32 %v1507, %v1675
    %1677 = vmatmul.bf16.gmra.mxu0 %v863
    %v1678 = vpop.f32.mrf.mxu0
    %v1679 = vadd.f32 %v1510, %v1678
    %v1680 = vpop.f32.mrf.mxu0
    %v1681 = vadd.f32 %v1512, %v1680
    %1682 = vmatmul.bf16.gmra.mxu0 %v867
    %v1683 = vpop.f32.mrf.mxu0
    %v1684 = vadd.f32 %v1515, %v1683
    %v1685 = vpop.f32.mrf.mxu0
    %v1686 = vadd.f32 %v1517, %v1685
    %1687 = vmatmul.bf16.gmra.mxu0 %v871
    %v1688 = vpop.f32.mrf.mxu0
    %v1689 = vadd.f32 %v1520, %v1688
    %v1690 = vpop.f32.mrf.mxu0
    %v1691 = vadd.f32 %v1522, %v1690
    %1692 = vmatmul.bf16.gmra.mxu0 %v875
    %v1693 = vpop.f32.mrf.mxu0
    %v1694 = vadd.f32 %v1525, %v1693
    %v1695 = vpop.f32.mrf.mxu0
    %v1696 = vadd.f32 %v1527, %v1695
    %1697 = vmatmul.bf16.gmra.mxu0 %v879
    %v1698 = vpop.f32.mrf.mxu0
    %v1699 = vadd.f32 %v1530, %v1698
    %v1700 = vpop.f32.mrf.mxu0
    %v1701 = vadd.f32 %v1532, %v1700
    %1702 = vmatmul.bf16.gmra.mxu0 %v883
    %v1703 = vpop.f32.mrf.mxu0
    %v1704 = vadd.f32 %v1535, %v1703
    %v1705 = vpop.f32.mrf.mxu0
    %v1706 = vadd.f32 %v1537, %v1705
    %1707 = vmatmul.bf16.gmra.mxu0 %v887
    %v1708 = vpop.f32.mrf.mxu0
    %v1709 = vadd.f32 %v1540, %v1708
    %v1710 = vpop.f32.mrf.mxu0
    %v1711 = vadd.f32 %v1542, %v1710
    %1712 = vmatmul.bf16.gmra.mxu0 %v891
    %v1713 = vpop.f32.mrf.mxu0
    %v1714 = vadd.f32 %v1545, %v1713
    %v1715 = vpop.f32.mrf.mxu0
    %v1716 = vadd.f32 %v1547, %v1715
    %1717 = vmatmul.bf16.gmra.mxu0 %v895
    %v1718 = vpop.f32.mrf.mxu0
    %v1719 = vadd.f32 %v1550, %v1718
    %v1720 = vpop.f32.mrf.mxu0
    %v1721 = vadd.f32 %v1552, %v1720
    %1722 = vmatmul.bf16.gmra.mxu0 %v899
    %v1723 = vpop.f32.mrf.mxu0
    %v1724 = vadd.f32 %v1555, %v1723
    %v1725 = vpop.f32.mrf.mxu0
    %v1726 = vadd.f32 %v1557, %v1725
    %1727 = vdwg.mxu0
    %1728 = vmatpush.bf16.msra.mxu0 %v1188
    %1729 = vmatpush.bf16.msra.mxu0 %v1187
    %1730 = vmatpush.bf16.msra.mxu0 %v1186
    %1731 = vmatpush.bf16.msra.mxu0 %v1185
    %1732 = vmatpush.bf16.msra.mxu0 %v1184
    %1733 = vmatpush.bf16.msra.mxu0 %v1183
    %1734 = vmatpush.bf16.msra.mxu0 %v1182
    %1735 = vmatpush.bf16.msra.mxu0 %v1181
    %1736 = vmatmul.bf16.gmra.mxu0 %v776
    %v1737 = vpop.f32.mrf.mxu0
    %v1738 = vadd.f32 %v1569, %v1737
    %v1739 = vpop.f32.mrf.mxu0
    %v1740 = vadd.f32 %v1571, %v1739
    %1741 = vmatmul.bf16.gmra.mxu0 %v780
    %v1742 = vpop.f32.mrf.mxu0
    %v1743 = vadd.f32 %v1574, %v1742
    %v1744 = vpop.f32.mrf.mxu0
    %v1745 = vadd.f32 %v1576, %v1744
    %1746 = vmatmul.bf16.gmra.mxu0 %v784
    %v1747 = vpop.f32.mrf.mxu0
    %v1748 = vadd.f32 %v1579, %v1747
    %v1749 = vpop.f32.mrf.mxu0
    %v1750 = vadd.f32 %v1581, %v1749
    %1751 = vmatmul.bf16.gmra.mxu0 %v788
    %v1752 = vpop.f32.mrf.mxu0
    %v1753 = vadd.f32 %v1584, %v1752
    %v1754 = vpop.f32.mrf.mxu0
    %v1755 = vadd.f32 %v1586, %v1754
    %1756 = vmatmul.bf16.gmra.mxu0 %v792
    %v1757 = vpop.f32.mrf.mxu0
    %v1758 = vadd.f32 %v1589, %v1757
    %v1759 = vpop.f32.mrf.mxu0
    %v1760 = vadd.f32 %v1591, %v1759
    %1761 = vmatmul.bf16.gmra.mxu0 %v796
    %v1762 = vpop.f32.mrf.mxu0
    %v1763 = vadd.f32 %v1594, %v1762
    %v1764 = vpop.f32.mrf.mxu0
    %v1765 = vadd.f32 %v1596, %v1764
    %1766 = vmatmul.bf16.gmra.mxu0 %v800
    %v1767 = vpop.f32.mrf.mxu0
    %v1768 = vadd.f32 %v1599, %v1767
    %v1769 = vpop.f32.mrf.mxu0
    %v1770 = vadd.f32 %v1601, %v1769
    %1771 = vmatmul.bf16.gmra.mxu0 %v804
    %v1772 = vpop.f32.mrf.mxu0
    %v1773 = vadd.f32 %v1604, %v1772
    %v1774 = vpop.f32.mrf.mxu0
    %v1775 = vadd.f32 %v1606, %v1774
    %1776 = vmatmul.bf16.gmra.mxu0 %v808
    %v1777 = vpop.f32.mrf.mxu0
    %v1778 = vadd.f32 %v1609, %v1777
    %v1779 = vpop.f32.mrf.mxu0
    %v1780 = vadd.f32 %v1611, %v1779
    %1781 = vmatmul.bf16.gmra.mxu0 %v812
    %v1782 = vpop.f32.mrf.mxu0
    %v1783 = vadd.f32 %v1614, %v1782
    %v1784 = vpop.f32.mrf.mxu0
    %v1785 = vadd.f32 %v1616, %v1784
    %1786 = vmatmul.bf16.gmra.mxu0 %v816
    %v1787 = vpop.f32.mrf.mxu0
    %v1788 = vadd.f32 %v1619, %v1787
    %v1789 = vpop.f32.mrf.mxu0
    %v1790 = vadd.f32 %v1621, %v1789
    %1791 = vmatmul.bf16.gmra.mxu0 %v820
    %v1792 = vpop.f32.mrf.mxu0
    %v1793 = vadd.f32 %v1624, %v1792
    %v1794 = vpop.f32.mrf.mxu0
    %v1795 = vadd.f32 %v1626, %v1794
    %1796 = vmatmul.bf16.gmra.mxu0 %v824
    %v1797 = vpop.f32.mrf.mxu0
    %v1798 = vadd.f32 %v1629, %v1797
    %v1799 = vpop.f32.mrf.mxu0
    %v1800 = vadd.f32 %v1631, %v1799
    %1801 = vmatmul.bf16.gmra.mxu0 %v828
    %v1802 = vpop.f32.mrf.mxu0
    %v1803 = vadd.f32 %v1634, %v1802
    %v1804 = vpop.f32.mrf.mxu0
    %v1805 = vadd.f32 %v1636, %v1804
    %1806 = vmatmul.bf16.gmra.mxu0 %v832
    %v1807 = vpop.f32.mrf.mxu0
    %v1808 = vadd.f32 %v1639, %v1807
    %v1809 = vpop.f32.mrf.mxu0
    %v1810 = vadd.f32 %v1641, %v1809
    %1811 = vmatmul.bf16.gmra.mxu0 %v836
    %v1812 = vpop.f32.mrf.mxu0
    %v1813 = vadd.f32 %v1644, %v1812
    %v1814 = vpop.f32.mrf.mxu0
    %v1815 = vadd.f32 %v1646, %v1814
    %1816 = vmatmul.bf16.gmra.mxu0 %v840
    %v1817 = vpop.f32.mrf.mxu0
    %v1818 = vadd.f32 %v1649, %v1817
    %v1819 = vpop.f32.mrf.mxu0
    %v1820 = vadd.f32 %v1651, %v1819
    %1821 = vmatmul.bf16.gmra.mxu0 %v844
    %v1822 = vpop.f32.mrf.mxu0
    %v1823 = vadd.f32 %v1654, %v1822
    %v1824 = vpop.f32.mrf.mxu0
    %v1825 = vadd.f32 %v1656, %v1824
    %1826 = vmatmul.bf16.gmra.mxu0 %v848
    %v1827 = vpop.f32.mrf.mxu0
    %v1828 = vadd.f32 %v1659, %v1827
    %v1829 = vpop.f32.mrf.mxu0
    %v1830 = vadd.f32 %v1661, %v1829
    %1831 = vmatmul.bf16.gmra.mxu0 %v852
    %v1832 = vpop.f32.mrf.mxu0
    %v1833 = vadd.f32 %v1664, %v1832
    %v1834 = vpop.f32.mrf.mxu0
    %v1835 = vadd.f32 %v1666, %v1834
    %1836 = vmatmul.bf16.gmra.mxu0 %v856
    %v1837 = vpop.f32.mrf.mxu0
    %v1838 = vadd.f32 %v1669, %v1837
    %v1839 = vpop.f32.mrf.mxu0
    %v1840 = vadd.f32 %v1671, %v1839
    %1841 = vmatmul.bf16.gmra.mxu0 %v860
    %v1842 = vpop.f32.mrf.mxu0
    %v1843 = vadd.f32 %v1674, %v1842
    %v1844 = vpop.f32.mrf.mxu0
    %v1845 = vadd.f32 %v1676, %v1844
    %1846 = vmatmul.bf16.gmra.mxu0 %v864
    %v1847 = vpop.f32.mrf.mxu0
    %v1848 = vadd.f32 %v1679, %v1847
    %v1849 = vpop.f32.mrf.mxu0
    %v1850 = vadd.f32 %v1681, %v1849
    %1851 = vmatmul.bf16.gmra.mxu0 %v868
    %v1852 = vpop.f32.mrf.mxu0
    %v1853 = vadd.f32 %v1684, %v1852
    %v1854 = vpop.f32.mrf.mxu0
    %v1855 = vadd.f32 %v1686, %v1854
    %1856 = vmatmul.bf16.gmra.mxu0 %v872
    %v1857 = vpop.f32.mrf.mxu0
    %v1858 = vadd.f32 %v1689, %v1857
    %v1859 = vpop.f32.mrf.mxu0
    %v1860 = vadd.f32 %v1691, %v1859
    %1861 = vmatmul.bf16.gmra.mxu0 %v876
    %v1862 = vpop.f32.mrf.mxu0
    %v1863 = vadd.f32 %v1694, %v1862
    %v1864 = vpop.f32.mrf.mxu0
    %v1865 = vadd.f32 %v1696, %v1864
    %1866 = vmatmul.bf16.gmra.mxu0 %v880
    %v1867 = vpop.f32.mrf.mxu0
    %v1868 = vadd.f32 %v1699, %v1867
    %v1869 = vpop.f32.mrf.mxu0
    %v1870 = vadd.f32 %v1701, %v1869
    %1871 = vmatmul.bf16.gmra.mxu0 %v884
    %v1872 = vpop.f32.mrf.mxu0
    %v1873 = vadd.f32 %v1704, %v1872
    %v1874 = vpop.f32.mrf.mxu0
    %v1875 = vadd.f32 %v1706, %v1874
    %1876 = vmatmul.bf16.gmra.mxu0 %v888
    %v1877 = vpop.f32.mrf.mxu0
    %v1878 = vadd.f32 %v1709, %v1877
    %v1879 = vpop.f32.mrf.mxu0
    %v1880 = vadd.f32 %v1711, %v1879
    %1881 = vmatmul.bf16.gmra.mxu0 %v892
    %v1882 = vpop.f32.mrf.mxu0
    %v1883 = vadd.f32 %v1714, %v1882
    %v1884 = vpop.f32.mrf.mxu0
    %v1885 = vadd.f32 %v1716, %v1884
    %1886 = vmatmul.bf16.gmra.mxu0 %v896
    %v1887 = vpop.f32.mrf.mxu0
    %v1888 = vadd.f32 %v1719, %v1887
    %v1889 = vpop.f32.mrf.mxu0
    %v1890 = vadd.f32 %v1721, %v1889
    %1891 = vmatmul.bf16.gmra.mxu0 %v900
    %v1892 = vpop.f32.mrf.mxu0
    %v1893 = vadd.f32 %v1724, %v1892
    %v1894 = vpop.f32.mrf.mxu0
    %v1895 = vadd.f32 %v1726, %v1894
    %1896 = vdwg.mxu0
    %v1897 = vadd.f32 %v197, %v1738
    %v1898 = vadd.f32 %v198, %v1740
    %v1899 = vadd.f32 %v199, %v1743
    %v1900 = vadd.f32 %v200, %v1745
    %v1901 = vadd.f32 %v201, %v1748
    %v1902 = vadd.f32 %v202, %v1750
    %v1903 = vadd.f32 %v203, %v1753
    %v1904 = vadd.f32 %v204, %v1755
    %v1905 = vadd.f32 %v205, %v1758
    %v1906 = vadd.f32 %v206, %v1760
    %v1907 = vadd.f32 %v207, %v1763
    %v1908 = vadd.f32 %v208, %v1765
    %v1909 = vadd.f32 %v209, %v1768
    %v1910 = vadd.f32 %v210, %v1770
    %v1911 = vadd.f32 %v211, %v1773
    %v1912 = vadd.f32 %v212, %v1775
    %v1913 = vadd.f32 %v213, %v1778
    %v1914 = vadd.f32 %v214, %v1780
    %v1915 = vadd.f32 %v215, %v1783
    %v1916 = vadd.f32 %v216, %v1785
    %v1917 = vadd.f32 %v217, %v1788
    %v1918 = vadd.f32 %v218, %v1790
    %v1919 = vadd.f32 %v219, %v1793
    %v1920 = vadd.f32 %v220, %v1795
    %v1921 = vadd.f32 %v221, %v1798
    %v1922 = vadd.f32 %v222, %v1800
    %v1923 = vadd.f32 %v223, %v1803
    %v1924 = vadd.f32 %v224, %v1805
    %v1925 = vadd.f32 %v225, %v1808
    %v1926 = vadd.f32 %v226, %v1810
    %v1927 = vadd.f32 %v227, %v1813
    %v1928 = vadd.f32 %v228, %v1815
    %v1929 = vadd.f32 %v229, %v1818
    %v1930 = vadd.f32 %v230, %v1820
    %v1931 = vadd.f32 %v231, %v1823
    %v1932 = vadd.f32 %v232, %v1825
    %v1933 = vadd.f32 %v233, %v1828
    %v1934 = vadd.f32 %v234, %v1830
    %v1935 = vadd.f32 %v235, %v1833
    %v1936 = vadd.f32 %v236, %v1835
    %v1937 = vadd.f32 %v237, %v1838
    %v1938 = vadd.f32 %v238, %v1840
    %v1939 = vadd.f32 %v239, %v1843
    %v1940 = vadd.f32 %v240, %v1845
    %v1941 = vadd.f32 %v241, %v1848
    %v1942 = vadd.f32 %v242, %v1850
    %v1943 = vadd.f32 %v243, %v1853
    %v1944 = vadd.f32 %v244, %v1855
    %v1945 = vadd.f32 %v245, %v1858
    %v1946 = vadd.f32 %v246, %v1860
    %v1947 = vadd.f32 %v247, %v1863
    %v1948 = vadd.f32 %v248, %v1865
    %v1949 = vadd.f32 %v249, %v1868
    %v1950 = vadd.f32 %v250, %v1870
    %v1951 = vadd.f32 %v251, %v1873
    %v1952 = vadd.f32 %v252, %v1875
    %v1953 = vadd.f32 %v253, %v1878
    %v1954 = vadd.f32 %v254, %v1880
    %v1955 = vadd.f32 %v255, %v1883
    %v1956 = vadd.f32 %v256, %v1885
    %v1957 = vadd.f32 %v257, %v1888
    %v1958 = vadd.f32 %v258, %v1890
    %v1959 = vadd.f32 %v259, %v1893
    %v1960 = vadd.f32 %v260, %v1895
    %1961 = vst [vmem:[#allocation2] sm:$0xff] %v1897
    %1962 = vst [vmem:[#allocation2 + $0x8] sm:$0xff] %v1898
    %1963 = vst [vmem:[#allocation2 + $0x10] sm:$0xff] %v1899
    %1964 = vst [vmem:[#allocation2 + $0x18] sm:$0xff] %v1900
    %1965 = vst [vmem:[#allocation2 + $0x20] sm:$0xff] %v1901
    %1966 = vst [vmem:[#allocation2 + $0x28] sm:$0xff] %v1902
    %1967 = vst [vmem:[#allocation2 + $0x30] sm:$0xff] %v1903
    %1968 = vst [vmem:[#allocation2 + $0x38] sm:$0xff] %v1904
    %1969 = vst [vmem:[#allocation2 + $0x40] sm:$0xff] %v1905
    %1970 = vst [vmem:[#allocation2 + $0x48] sm:$0xff] %v1906
    %1971 = vst [vmem:[#allocation2 + $0x50] sm:$0xff] %v1907
    %1972 = vst [vmem:[#allocation2 + $0x58] sm:$0xff] %v1908
    %1973 = vst [vmem:[#allocation2 + $0x60] sm:$0xff] %v1909
    %1974 = vst [vmem:[#allocation2 + $0x68] sm:$0xff] %v1910
    %1975 = vst [vmem:[#allocation2 + $0x70] sm:$0xff] %v1911
    %1976 = vst [vmem:[#allocation2 + $0x78] sm:$0xff] %v1912
    %1977 = vst [vmem:[#allocation2 + $0x80] sm:$0xff] %v1913
    %1978 = vst [vmem:[#allocation2 + $0x88] sm:$0xff] %v1914
    %1979 = vst [vmem:[#allocation2 + $0x90] sm:$0xff] %v1915
    %1980 = vst [vmem:[#allocation2 + $0x98] sm:$0xff] %v1916
    %1981 = vst [vmem:[#allocation2 + $0xa0] sm:$0xff] %v1917
    %1982 = vst [vmem:[#allocation2 + $0xa8] sm:$0xff] %v1918
    %1983 = vst [vmem:[#allocation2 + $0xb0] sm:$0xff] %v1919
    %1984 = vst [vmem:[#allocation2 + $0xb8] sm:$0xff] %v1920
    %1985 = vst [vmem:[#allocation2 + $0xc0] sm:$0xff] %v1921
    %1986 = vst [vmem:[#allocation2 + $0xc8] sm:$0xff] %v1922
    %1987 = vst [vmem:[#allocation2 + $0xd0] sm:$0xff] %v1923
    %1988 = vst [vmem:[#allocation2 + $0xd8] sm:$0xff] %v1924
    %1989 = vst [vmem:[#allocation2 + $0xe0] sm:$0xff] %v1925
    %1990 = vst [vmem:[#allocation2 + $0xe8] sm:$0xff] %v1926
    %1991 = vst [vmem:[#allocation2 + $0xf0] sm:$0xff] %v1927
    %1992 = vst [vmem:[#allocation2 + $0xf8] sm:$0xff] %v1928
    %1993 = vst [vmem:[#allocation2 + $0x100] sm:$0xff] %v1929
    %1994 = vst [vmem:[#allocation2 + $0x108] sm:$0xff] %v1930
    %1995 = vst [vmem:[#allocation2 + $0x110] sm:$0xff] %v1931
    %1996 = vst [vmem:[#allocation2 + $0x118] sm:$0xff] %v1932
    %1997 = vst [vmem:[#allocation2 + $0x120] sm:$0xff] %v1933
    %1998 = vst [vmem:[#allocation2 + $0x128] sm:$0xff] %v1934
    %1999 = vst [vmem:[#allocation2 + $0x130] sm:$0xff] %v1935
    %2000 = vst [vmem:[#allocation2 + $0x138] sm:$0xff] %v1936
    %2001 = vst [vmem:[#allocation2 + $0x140] sm:$0xff] %v1937
    %2002 = vst [vmem:[#allocation2 + $0x148] sm:$0xff] %v1938
    %2003 = vst [vmem:[#allocation2 + $0x150] sm:$0xff] %v1939
    %2004 = vst [vmem:[#allocation2 + $0x158] sm:$0xff] %v1940
    %2005 = vst [vmem:[#allocation2 + $0x160] sm:$0xff] %v1941
    %2006 = vst [vmem:[#allocation2 + $0x168] sm:$0xff] %v1942
    %2007 = vst [vmem:[#allocation2 + $0x170] sm:$0xff] %v1943
    %2008 = vst [vmem:[#allocation2 + $0x178] sm:$0xff] %v1944
    %2009 = vst [vmem:[#allocation2 + $0x180] sm:$0xff] %v1945
    %2010 = vst [vmem:[#allocation2 + $0x188] sm:$0xff] %v1946
    %2011 = vst [vmem:[#allocation2 + $0x190] sm:$0xff] %v1947
    %2012 = vst [vmem:[#allocation2 + $0x198] sm:$0xff] %v1948
    %2013 = vst [vmem:[#allocation2 + $0x1a0] sm:$0xff] %v1949
    %2014 = vst [vmem:[#allocation2 + $0x1a8] sm:$0xff] %v1950
    %2015 = vst [vmem:[#allocation2 + $0x1b0] sm:$0xff] %v1951
    %2016 = vst [vmem:[#allocation2 + $0x1b8] sm:$0xff] %v1952
    %2017 = vst [vmem:[#allocation2 + $0x1c0] sm:$0xff] %v1953
    %2018 = vst [vmem:[#allocation2 + $0x1c8] sm:$0xff] %v1954
    %2019 = vst [vmem:[#allocation2 + $0x1d0] sm:$0xff] %v1955
    %2020 = vst [vmem:[#allocation2 + $0x1d8] sm:$0xff] %v1956
    %2021 = vst [vmem:[#allocation2 + $0x1e0] sm:$0xff] %v1957
    %2022 = vst [vmem:[#allocation2 + $0x1e8] sm:$0xff] %v1958
    %2023 = vst [vmem:[#allocation2 + $0x1f0] sm:$0xff] %v1959
    %2024 = vst [vmem:[#allocation2 + $0x1f8] sm:$0xff] %v1960
  $region29: #{_fe_clipgcn_impl.3} parent=0 // pred_fallthru
    _
  // Predicated region
  $region30: #{_fe_clipgcn_impl.3} parent=0 // pred_check
    %p2025 = pneg %p53
  $region31: #{_fe_clipgcn_impl.3} parent=0 // pred_check_branch
    %2027 = sbr.rel (%p2025) target = $region33
  $region32: #{_fe_clipgcn_impl.3} parent=0 // pred_region
    %v2028 = vld [vmem:[#allocation2] sm:$0xff]
    %v2029 = vld [vmem:[#allocation2 + $0x8] sm:$0xff]
    %v2030 = vld [vmem:[#allocation2 + $0x10] sm:$0xff]
    %v2031 = vld [vmem:[#allocation2 + $0x18] sm:$0xff]
    %v2032 = vld [vmem:[#allocation2 + $0x20] sm:$0xff]
    %v2033 = vld [vmem:[#allocation2 + $0x28] sm:$0xff]
    %v2034 = vld [vmem:[#allocation2 + $0x30] sm:$0xff]
    %v2035 = vld [vmem:[#allocation2 + $0x38] sm:$0xff]
    %v2036 = vld [vmem:[#allocation2 + $0x40] sm:$0xff]
    %v2037 = vld [vmem:[#allocation2 + $0x48] sm:$0xff]
    %v2038 = vld [vmem:[#allocation2 + $0x50] sm:$0xff]
    %v2039 = vld [vmem:[#allocation2 + $0x58] sm:$0xff]
    %v2040 = vld [vmem:[#allocation2 + $0x60] sm:$0xff]
    %v2041 = vld [vmem:[#allocation2 + $0x68] sm:$0xff]
    %v2042 = vld [vmem:[#allocation2 + $0x70] sm:$0xff]
    %v2043 = vld [vmem:[#allocation2 + $0x78] sm:$0xff]
    %v2044 = vld [vmem:[#allocation2 + $0x80] sm:$0xff]
    %v2045 = vld [vmem:[#allocation2 + $0x88] sm:$0xff]
    %v2046 = vld [vmem:[#allocation2 + $0x90] sm:$0xff]
    %v2047 = vld [vmem:[#allocation2 + $0x98] sm:$0xff]
    %v2048 = vld [vmem:[#allocation2 + $0xa0] sm:$0xff]
    %v2049 = vld [vmem:[#allocation2 + $0xa8] sm:$0xff]
    %v2050 = vld [vmem:[#allocation2 + $0xb0] sm:$0xff]
    %v2051 = vld [vmem:[#allocation2 + $0xb8] sm:$0xff]
    %v2052 = vld [vmem:[#allocation2 + $0xc0] sm:$0xff]
    %v2053 = vld [vmem:[#allocation2 + $0xc8] sm:$0xff]
    %v2054 = vld [vmem:[#allocation2 + $0xd0] sm:$0xff]
    %v2055 = vld [vmem:[#allocation2 + $0xd8] sm:$0xff]
    %v2056 = vld [vmem:[#allocation2 + $0xe0] sm:$0xff]
    %v2057 = vld [vmem:[#allocation2 + $0xe8] sm:$0xff]
    %v2058 = vld [vmem:[#allocation2 + $0xf0] sm:$0xff]
    %v2059 = vld [vmem:[#allocation2 + $0xf8] sm:$0xff]
    %v2060 = vld [vmem:[#allocation2 + $0x100] sm:$0xff]
    %v2061 = vld [vmem:[#allocation2 + $0x108] sm:$0xff]
    %v2062 = vld [vmem:[#allocation2 + $0x110] sm:$0xff]
    %v2063 = vld [vmem:[#allocation2 + $0x118] sm:$0xff]
    %v2064 = vld [vmem:[#allocation2 + $0x120] sm:$0xff]
    %v2065 = vld [vmem:[#allocation2 + $0x128] sm:$0xff]
    %v2066 = vld [vmem:[#allocation2 + $0x130] sm:$0xff]
    %v2067 = vld [vmem:[#allocation2 + $0x138] sm:$0xff]
    %v2068 = vld [vmem:[#allocation2 + $0x140] sm:$0xff]
    %v2069 = vld [vmem:[#allocation2 + $0x148] sm:$0xff]
    %v2070 = vld [vmem:[#allocation2 + $0x150] sm:$0xff]
    %v2071 = vld [vmem:[#allocation2 + $0x158] sm:$0xff]
    %v2072 = vld [vmem:[#allocation2 + $0x160] sm:$0xff]
    %v2073 = vld [vmem:[#allocation2 + $0x168] sm:$0xff]
    %v2074 = vld [vmem:[#allocation2 + $0x170] sm:$0xff]
    %v2075 = vld [vmem:[#allocation2 + $0x178] sm:$0xff]
    %v2076 = vld [vmem:[#allocation2 + $0x180] sm:$0xff]
    %v2077 = vld [vmem:[#allocation2 + $0x188] sm:$0xff]
    %v2078 = vld [vmem:[#allocation2 + $0x190] sm:$0xff]
    %v2079 = vld [vmem:[#allocation2 + $0x198] sm:$0xff]
    %v2080 = vld [vmem:[#allocation2 + $0x1a0] sm:$0xff]
    %v2081 = vld [vmem:[#allocation2 + $0x1a8] sm:$0xff]
    %v2082 = vld [vmem:[#allocation2 + $0x1b0] sm:$0xff]
    %v2083 = vld [vmem:[#allocation2 + $0x1b8] sm:$0xff]
    %v2084 = vld [vmem:[#allocation2 + $0x1c0] sm:$0xff]
    %v2085 = vld [vmem:[#allocation2 + $0x1c8] sm:$0xff]
    %v2086 = vld [vmem:[#allocation2 + $0x1d0] sm:$0xff]
    %v2087 = vld [vmem:[#allocation2 + $0x1d8] sm:$0xff]
    %v2088 = vld [vmem:[#allocation2 + $0x1e0] sm:$0xff]
    %v2089 = vld [vmem:[#allocation2 + $0x1e8] sm:$0xff]
    %v2090 = vld [vmem:[#allocation2 + $0x1f0] sm:$0xff]
    %v2091 = vld [vmem:[#allocation2 + $0x1f8] sm:$0xff]
    %v2092 = vld [vmem:[%s6] sm:$0x1]
    %v2094 = vperm.slane %v2092, 0
    %v2096 = vadd.f32 %v2028, %v2094
    %v2097 = vadd.f32 %v2029, %v2094
    %v2098 = vadd.f32 %v2030, %v2094
    %v2099 = vadd.f32 %v2031, %v2094
    %v2100 = vadd.f32 %v2032, %v2094
    %v2101 = vadd.f32 %v2033, %v2094
    %v2102 = vadd.f32 %v2034, %v2094
    %v2103 = vadd.f32 %v2035, %v2094
    %v2104 = vadd.f32 %v2036, %v2094
    %v2105 = vadd.f32 %v2037, %v2094
    %v2106 = vadd.f32 %v2038, %v2094
    %v2107 = vadd.f32 %v2039, %v2094
    %v2108 = vadd.f32 %v2040, %v2094
    %v2109 = vadd.f32 %v2041, %v2094
    %v2110 = vadd.f32 %v2042, %v2094
    %v2111 = vadd.f32 %v2043, %v2094
    %v2112 = vadd.f32 %v2044, %v2094
    %v2113 = vadd.f32 %v2045, %v2094
    %v2114 = vadd.f32 %v2046, %v2094
    %v2115 = vadd.f32 %v2047, %v2094
    %v2116 = vadd.f32 %v2048, %v2094
    %v2117 = vadd.f32 %v2049, %v2094
    %v2118 = vadd.f32 %v2050, %v2094
    %v2119 = vadd.f32 %v2051, %v2094
    %v2120 = vadd.f32 %v2052, %v2094
    %v2121 = vadd.f32 %v2053, %v2094
    %v2122 = vadd.f32 %v2054, %v2094
    %v2123 = vadd.f32 %v2055, %v2094
    %v2124 = vadd.f32 %v2056, %v2094
    %v2125 = vadd.f32 %v2057, %v2094
    %v2126 = vadd.f32 %v2058, %v2094
    %v2127 = vadd.f32 %v2059, %v2094
    %v2128 = vadd.f32 %v2060, %v2094
    %v2129 = vadd.f32 %v2061, %v2094
    %v2130 = vadd.f32 %v2062, %v2094
    %v2131 = vadd.f32 %v2063, %v2094
    %v2132 = vadd.f32 %v2064, %v2094
    %v2133 = vadd.f32 %v2065, %v2094
    %v2134 = vadd.f32 %v2066, %v2094
    %v2135 = vadd.f32 %v2067, %v2094
    %v2136 = vadd.f32 %v2068, %v2094
    %v2137 = vadd.f32 %v2069, %v2094
    %v2138 = vadd.f32 %v2070, %v2094
    %v2139 = vadd.f32 %v2071, %v2094
    %v2140 = vadd.f32 %v2072, %v2094
    %v2141 = vadd.f32 %v2073, %v2094
    %v2142 = vadd.f32 %v2074, %v2094
    %v2143 = vadd.f32 %v2075, %v2094
    %v2144 = vadd.f32 %v2076, %v2094
    %v2145 = vadd.f32 %v2077, %v2094
    %v2146 = vadd.f32 %v2078, %v2094
    %v2147 = vadd.f32 %v2079, %v2094
    %v2148 = vadd.f32 %v2080, %v2094
    %v2149 = vadd.f32 %v2081, %v2094
    %v2150 = vadd.f32 %v2082, %v2094
    %v2151 = vadd.f32 %v2083, %v2094
    %v2152 = vadd.f32 %v2084, %v2094
    %v2153 = vadd.f32 %v2085, %v2094
    %v2154 = vadd.f32 %v2086, %v2094
    %v2155 = vadd.f32 %v2087, %v2094
    %v2156 = vadd.f32 %v2088, %v2094
    %v2157 = vadd.f32 %v2089, %v2094
    %v2158 = vadd.f32 %v2090, %v2094
    %v2159 = vadd.f32 %v2091, %v2094
    %v2160 = vmax.f32 %v2096, 0.0
    %v2161 = vmax.f32 %v2097, 0.0
    %v2162 = vmax.f32 %v2098, 0.0
    %v2163 = vmax.f32 %v2099, 0.0
    %v2164 = vmax.f32 %v2100, 0.0
    %v2165 = vmax.f32 %v2101, 0.0
    %v2166 = vmax.f32 %v2102, 0.0
    %v2167 = vmax.f32 %v2103, 0.0
    %v2168 = vmax.f32 %v2104, 0.0
    %v2169 = vmax.f32 %v2105, 0.0
    %v2170 = vmax.f32 %v2106, 0.0
    %v2171 = vmax.f32 %v2107, 0.0
    %v2172 = vmax.f32 %v2108, 0.0
    %v2173 = vmax.f32 %v2109, 0.0
    %v2174 = vmax.f32 %v2110, 0.0
    %v2175 = vmax.f32 %v2111, 0.0
    %v2176 = vmax.f32 %v2112, 0.0
    %v2177 = vmax.f32 %v2113, 0.0
    %v2178 = vmax.f32 %v2114, 0.0
    %v2179 = vmax.f32 %v2115, 0.0
    %v2180 = vmax.f32 %v2116, 0.0
    %v2181 = vmax.f32 %v2117, 0.0
    %v2182 = vmax.f32 %v2118, 0.0
    %v2183 = vmax.f32 %v2119, 0.0
    %v2184 = vmax.f32 %v2120, 0.0
    %v2185 = vmax.f32 %v2121, 0.0
    %v2186 = vmax.f32 %v2122, 0.0
    %v2187 = vmax.f32 %v2123, 0.0
    %v2188 = vmax.f32 %v2124, 0.0
    %v2189 = vmax.f32 %v2125, 0.0
    %v2190 = vmax.f32 %v2126, 0.0
    %v2191 = vmax.f32 %v2127, 0.0
    %v2192 = vmax.f32 %v2128, 0.0
    %v2193 = vmax.f32 %v2129, 0.0
    %v2194 = vmax.f32 %v2130, 0.0
    %v2195 = vmax.f32 %v2131, 0.0
    %v2196 = vmax.f32 %v2132, 0.0
    %v2197 = vmax.f32 %v2133, 0.0
    %v2198 = vmax.f32 %v2134, 0.0
    %v2199 = vmax.f32 %v2135, 0.0
    %v2200 = vmax.f32 %v2136, 0.0
    %v2201 = vmax.f32 %v2137, 0.0
    %v2202 = vmax.f32 %v2138, 0.0
    %v2203 = vmax.f32 %v2139, 0.0
    %v2204 = vmax.f32 %v2140, 0.0
    %v2205 = vmax.f32 %v2141, 0.0
    %v2206 = vmax.f32 %v2142, 0.0
    %v2207 = vmax.f32 %v2143, 0.0
    %v2208 = vmax.f32 %v2144, 0.0
    %v2209 = vmax.f32 %v2145, 0.0
    %v2210 = vmax.f32 %v2146, 0.0
    %v2211 = vmax.f32 %v2147, 0.0
    %v2212 = vmax.f32 %v2148, 0.0
    %v2213 = vmax.f32 %v2149, 0.0
    %v2214 = vmax.f32 %v2150, 0.0
    %v2215 = vmax.f32 %v2151, 0.0
    %v2216 = vmax.f32 %v2152, 0.0
    %v2217 = vmax.f32 %v2153, 0.0
    %v2218 = vmax.f32 %v2154, 0.0
    %v2219 = vmax.f32 %v2155, 0.0
    %v2220 = vmax.f32 %v2156, 0.0
    %v2221 = vmax.f32 %v2157, 0.0
    %v2222 = vmax.f32 %v2158, 0.0
    %v2223 = vmax.f32 %v2159, 0.0
    %v2224 = vld [vmem:[%s4] sm:$0xff]
    %2226 = vst [vmem:[#allocation1] ss:$4 sm:$0xff] %v2224
    %v2227 = vld.sshfl [vmem:[#allocation1] sm:$0xff pattern:$0x73625140]
    %v2228 = vld.sshfl [vmem:[#allocation1 + $0x8] sm:$0xff pattern:$0x73625140]
    %v2229 = vld.sshfl [vmem:[#allocation1 + $0x10] sm:$0xff pattern:$0x73625140]
    %v2230 = vld.sshfl [vmem:[#allocation1 + $0x18] sm:$0xff pattern:$0x73625140]
    %v2235 = vpack.c.bf16 %v2227, %v2227
    %v2236 = vpack.c.bf16 %v2228, %v2228
    %v2237 = vpack.c.bf16 %v2229, %v2229
    %v2238 = vpack.c.bf16 %v2230, %v2230
    %v2239 = vpack.c.bf16 %v2161, %v2160
    %v2240 = vpack.c.bf16 %v2163, %v2162
    %v2241 = vpack.c.bf16 %v2165, %v2164
    %v2242 = vpack.c.bf16 %v2167, %v2166
    %v2243 = vpack.c.bf16 %v2169, %v2168
    %v2244 = vpack.c.bf16 %v2171, %v2170
    %v2245 = vpack.c.bf16 %v2173, %v2172
    %v2246 = vpack.c.bf16 %v2175, %v2174
    %v2247 = vpack.c.bf16 %v2177, %v2176
    %v2248 = vpack.c.bf16 %v2179, %v2178
    %v2249 = vpack.c.bf16 %v2181, %v2180
    %v2250 = vpack.c.bf16 %v2183, %v2182
    %v2251 = vpack.c.bf16 %v2185, %v2184
    %v2252 = vpack.c.bf16 %v2187, %v2186
    %v2253 = vpack.c.bf16 %v2189, %v2188
    %v2254 = vpack.c.bf16 %v2191, %v2190
    %v2255 = vpack.c.bf16 %v2193, %v2192
    %v2256 = vpack.c.bf16 %v2195, %v2194
    %v2257 = vpack.c.bf16 %v2197, %v2196
    %v2258 = vpack.c.bf16 %v2199, %v2198
    %v2259 = vpack.c.bf16 %v2201, %v2200
    %v2260 = vpack.c.bf16 %v2203, %v2202
    %v2261 = vpack.c.bf16 %v2205, %v2204
    %v2262 = vpack.c.bf16 %v2207, %v2206
    %v2263 = vpack.c.bf16 %v2209, %v2208
    %v2264 = vpack.c.bf16 %v2211, %v2210
    %v2265 = vpack.c.bf16 %v2213, %v2212
    %v2266 = vpack.c.bf16 %v2215, %v2214
    %v2267 = vpack.c.bf16 %v2217, %v2216
    %v2268 = vpack.c.bf16 %v2219, %v2218
    %v2269 = vpack.c.bf16 %v2221, %v2220
    %v2270 = vpack.c.bf16 %v2223, %v2222
    %2271 = vmatpush.bf16.msra.mxu0 %v2246
    %2272 = vmatpush.bf16.msra.mxu0 %v2245
    %2273 = vmatpush.bf16.msra.mxu0 %v2244
    %2274 = vmatpush.bf16.msra.mxu0 %v2243
    %2275 = vmatpush.bf16.msra.mxu0 %v2242
    %2276 = vmatpush.bf16.msra.mxu0 %v2241
    %2277 = vmatpush.bf16.msra.mxu0 %v2240
    %2278 = vmatpush.bf16.msra.mxu0 %v2239
    %2279 = vmatmul.bf16.gmra.mxu0 %v2235
    %v2280 = vpop.f32.mrf.mxu0
    %v2281 = vadd.f32 0.0, %v2280
    %v2282 = vpop.f32.mrf.mxu0
    %2283 = vdwg.mxu0
    %2284 = vmatpush.bf16.msra.mxu0 %v2254
    %2285 = vmatpush.bf16.msra.mxu0 %v2253
    %2286 = vmatpush.bf16.msra.mxu0 %v2252
    %2287 = vmatpush.bf16.msra.mxu0 %v2251
    %2288 = vmatpush.bf16.msra.mxu0 %v2250
    %2289 = vmatpush.bf16.msra.mxu0 %v2249
    %2290 = vmatpush.bf16.msra.mxu0 %v2248
    %2291 = vmatpush.bf16.msra.mxu0 %v2247
    %2292 = vmatmul.bf16.gmra.mxu0 %v2236
    %v2293 = vpop.f32.mrf.mxu0
    %v2294 = vadd.f32 %v2281, %v2293
    %v2295 = vpop.f32.mrf.mxu0
    %2296 = vdwg.mxu0
    %2297 = vmatpush.bf16.msra.mxu0 %v2262
    %2298 = vmatpush.bf16.msra.mxu0 %v2261
    %2299 = vmatpush.bf16.msra.mxu0 %v2260
    %2300 = vmatpush.bf16.msra.mxu0 %v2259
    %2301 = vmatpush.bf16.msra.mxu0 %v2258
    %2302 = vmatpush.bf16.msra.mxu0 %v2257
    %2303 = vmatpush.bf16.msra.mxu0 %v2256
    %2304 = vmatpush.bf16.msra.mxu0 %v2255
    %2305 = vmatmul.bf16.gmra.mxu0 %v2237
    %v2306 = vpop.f32.mrf.mxu0
    %v2307 = vadd.f32 %v2294, %v2306
    %v2308 = vpop.f32.mrf.mxu0
    %2309 = vdwg.mxu0
    %2310 = vmatpush.bf16.msra.mxu0 %v2270
    %2311 = vmatpush.bf16.msra.mxu0 %v2269
    %2312 = vmatpush.bf16.msra.mxu0 %v2268
    %2313 = vmatpush.bf16.msra.mxu0 %v2267
    %2314 = vmatpush.bf16.msra.mxu0 %v2266
    %2315 = vmatpush.bf16.msra.mxu0 %v2265
    %2316 = vmatpush.bf16.msra.mxu0 %v2264
    %2317 = vmatpush.bf16.msra.mxu0 %v2263
    %2318 = vmatmul.bf16.gmra.mxu0 %v2238
    %v2319 = vpop.f32.mrf.mxu0
    %v2320 = vadd.f32 %v2307, %v2319
    %v2321 = vpop.f32.mrf.mxu0
    %2322 = vdwg.mxu0
    %2323 = vst [vmem:[%s7] sm:$0x3] %v2320
    %v2324 = vld [vmem:[%s5] sm:$0xff]
    %2326 = vst [vmem:[#allocation1] ss:$4 sm:$0xff] %v2324
    %v2327 = vld.sshfl [vmem:[#allocation1] sm:$0xff pattern:$0x73625140]
    %v2328 = vld.sshfl [vmem:[#allocation1 + $0x8] sm:$0xff pattern:$0x73625140]
    %v2329 = vld.sshfl [vmem:[#allocation1 + $0x10] sm:$0xff pattern:$0x73625140]
    %v2330 = vld.sshfl [vmem:[#allocation1 + $0x18] sm:$0xff pattern:$0x73625140]
    %v2335 = vpack.c.bf16 %v2327, %v2327
    %v2336 = vpack.c.bf16 %v2328, %v2328
    %v2337 = vpack.c.bf16 %v2329, %v2329
    %v2338 = vpack.c.bf16 %v2330, %v2330
    %v2339 = vpack.c.bf16 %v2097, %v2096
    %v2340 = vpack.c.bf16 %v2099, %v2098
    %v2341 = vpack.c.bf16 %v2101, %v2100
    %v2342 = vpack.c.bf16 %v2103, %v2102
    %v2343 = vpack.c.bf16 %v2105, %v2104
    %v2344 = vpack.c.bf16 %v2107, %v2106
    %v2345 = vpack.c.bf16 %v2109, %v2108
    %v2346 = vpack.c.bf16 %v2111, %v2110
    %v2347 = vpack.c.bf16 %v2113, %v2112
    %v2348 = vpack.c.bf16 %v2115, %v2114
    %v2349 = vpack.c.bf16 %v2117, %v2116
    %v2350 = vpack.c.bf16 %v2119, %v2118
    %v2351 = vpack.c.bf16 %v2121, %v2120
    %v2352 = vpack.c.bf16 %v2123, %v2122
    %v2353 = vpack.c.bf16 %v2125, %v2124
    %v2354 = vpack.c.bf16 %v2127, %v2126
    %v2355 = vpack.c.bf16 %v2129, %v2128
    %v2356 = vpack.c.bf16 %v2131, %v2130
    %v2357 = vpack.c.bf16 %v2133, %v2132
    %v2358 = vpack.c.bf16 %v2135, %v2134
    %v2359 = vpack.c.bf16 %v2137, %v2136
    %v2360 = vpack.c.bf16 %v2139, %v2138
    %v2361 = vpack.c.bf16 %v2141, %v2140
    %v2362 = vpack.c.bf16 %v2143, %v2142
    %v2363 = vpack.c.bf16 %v2145, %v2144
    %v2364 = vpack.c.bf16 %v2147, %v2146
    %v2365 = vpack.c.bf16 %v2149, %v2148
    %v2366 = vpack.c.bf16 %v2151, %v2150
    %v2367 = vpack.c.bf16 %v2153, %v2152
    %v2368 = vpack.c.bf16 %v2155, %v2154
    %v2369 = vpack.c.bf16 %v2157, %v2156
    %v2370 = vpack.c.bf16 %v2159, %v2158
    %2371 = vmatpush.bf16.msra.mxu0 %v2346
    %2372 = vmatpush.bf16.msra.mxu0 %v2345
    %2373 = vmatpush.bf16.msra.mxu0 %v2344
    %2374 = vmatpush.bf16.msra.mxu0 %v2343
    %2375 = vmatpush.bf16.msra.mxu0 %v2342
    %2376 = vmatpush.bf16.msra.mxu0 %v2341
    %2377 = vmatpush.bf16.msra.mxu0 %v2340
    %2378 = vmatpush.bf16.msra.mxu0 %v2339
    %2379 = vmatmul.bf16.gmra.mxu0 %v2335
    %v2380 = vpop.f32.mrf.mxu0
    %v2381 = vadd.f32 0.0, %v2380
    %v2382 = vpop.f32.mrf.mxu0
    %2383 = vdwg.mxu0
    %2384 = vmatpush.bf16.msra.mxu0 %v2354
    %2385 = vmatpush.bf16.msra.mxu0 %v2353
    %2386 = vmatpush.bf16.msra.mxu0 %v2352
    %2387 = vmatpush.bf16.msra.mxu0 %v2351
    %2388 = vmatpush.bf16.msra.mxu0 %v2350
    %2389 = vmatpush.bf16.msra.mxu0 %v2349
    %2390 = vmatpush.bf16.msra.mxu0 %v2348
    %2391 = vmatpush.bf16.msra.mxu0 %v2347
    %2392 = vmatmul.bf16.gmra.mxu0 %v2336
    %v2393 = vpop.f32.mrf.mxu0
    %v2394 = vadd.f32 %v2381, %v2393
    %v2395 = vpop.f32.mrf.mxu0
    %2396 = vdwg.mxu0
    %2397 = vmatpush.bf16.msra.mxu0 %v2362
    %2398 = vmatpush.bf16.msra.mxu0 %v2361
    %2399 = vmatpush.bf16.msra.mxu0 %v2360
    %2400 = vmatpush.bf16.msra.mxu0 %v2359
    %2401 = vmatpush.bf16.msra.mxu0 %v2358
    %2402 = vmatpush.bf16.msra.mxu0 %v2357
    %2403 = vmatpush.bf16.msra.mxu0 %v2356
    %2404 = vmatpush.bf16.msra.mxu0 %v2355
    %2405 = vmatmul.bf16.gmra.mxu0 %v2337
    %v2406 = vpop.f32.mrf.mxu0
    %v2407 = vadd.f32 %v2394, %v2406
    %v2408 = vpop.f32.mrf.mxu0
    %2409 = vdwg.mxu0
    %2410 = vmatpush.bf16.msra.mxu0 %v2370
    %2411 = vmatpush.bf16.msra.mxu0 %v2369
    %2412 = vmatpush.bf16.msra.mxu0 %v2368
    %2413 = vmatpush.bf16.msra.mxu0 %v2367
    %2414 = vmatpush.bf16.msra.mxu0 %v2366
    %2415 = vmatpush.bf16.msra.mxu0 %v2365
    %2416 = vmatpush.bf16.msra.mxu0 %v2364
    %2417 = vmatpush.bf16.msra.mxu0 %v2363
    %2418 = vmatmul.bf16.gmra.mxu0 %v2338
    %v2419 = vpop.f32.mrf.mxu0
    %v2420 = vadd.f32 %v2407, %v2419
    %v2421 = vpop.f32.mrf.mxu0
    %2422 = vdwg.mxu0
    %2423 = vst [vmem:[%s8] sm:$0x3] %v2420
  $region33: #{_fe_clipgcn_impl.3} parent=0 // pred_fallthru
    _
  // Predicated region
  $region34: #{_fe_clipgcn_impl.3} parent=0 // pred_check
    _
  $region35: #{_fe_clipgcn_impl.3} parent=0 // pred_check_branch
    %2425 = sbr.rel (0) target = $region37
  $region36: #{_fe_clipgcn_impl.3} parent=0 // pred_region
    _
  $region37: #{_fe_clipgcn_impl.3} parent=0 // pred_fallthru
    _
  // Predicated region
  $region38: #{_fe_clipgcn_impl.3} parent=0 // pred_check
    _
  $region39: #{_fe_clipgcn_impl.3} parent=0 // pred_check_branch
    %2427 = sbr.rel (0) target = $region41
  $region40: #{_fe_clipgcn_impl.3} parent=0 // pred_region
    _
  $region41: #{_fe_clipgcn_impl.3} parent=0 // pred_fallthru
    _
  // Predicated region
  $region42: #{_fe_clipgcn_impl.3} parent=0 // pred_check
    _
  $region43: #{_fe_clipgcn_impl.3} parent=0 // pred_check_branch
    %2429 = sbr.rel (0) target = $region45
  $region44: #{_fe_clipgcn_impl.3} parent=0 // pred_region
    _
  $region45: #{_fe_clipgcn_impl.3} parent=0 // pred_fallthru
    _
  // Predicated region
  $region46: #{_fe_clipgcn_impl.3} parent=0 // pred_check
    _
  $region47: #{_fe_clipgcn_impl.3} parent=0 // pred_check_branch
    %2431 = sbr.rel (0) target = $region49
  $region48: #{_fe_clipgcn_impl.3} parent=0 // pred_region
    _
  $region49: #{_fe_clipgcn_impl.3} parent=0 // pred_fallthru
    _

</llo_original>
